<compile_context>
chip_gen: v7x
topology: tpu7x:2x2x1
jax: 0.10.0
libtpu: 0.0.40
codegen_flags: <defaults>
</compile_context>

<pallas_src>
import functools

import jax
import jax.numpy as jnp
from jax.experimental import pallas as pl
from jax.experimental.pallas import tpu as pltpu


_SLOPE = 0.2      # DeepSMOTE's LeakyReLU slope (not PyTorch's 0.01 default).
_BN_EPS = 1e-5    # nn.BatchNorm2d default.

# CompilerParams was named TPUCompilerParams in some older jax releases.
_CompilerParams = getattr(pltpu, "CompilerParams", None)
if _CompilerParams is None:  # pragma: no cover
    _CompilerParams = pltpu.TPUCompilerParams

_COMPILER_PARAMS = _CompilerParams(
    dimension_semantics=("parallel",),
    vmem_limit_bytes=48 * 1024 * 1024,
)


# ------------------------------ Pallas kernels ------------------------------

def _gemm_lrelu_kernel(p_ref, w_ref, o_ref, *, slope):
    # conv-as-GEMM (bf16 operands, f32 MXU accumulation) + LeakyReLU,
    # tiled along M = N*Ho*Wo.
    y = jnp.dot(p_ref[...], w_ref[...], preferred_element_type=jnp.float32)
    o_ref[...] = jnp.maximum(y, slope * y).astype(o_ref.dtype)


def _gemm_stats_kernel(p_ref, w_ref, y_ref, stats_ref):
    # conv-as-GEMM emitting the raw (pre-BN) output (bf16) plus per-tile
    # channel sum / sum-of-squares partials (f32), so the BatchNorm batch
    # statistics never require a second full pass over HBM.
    y = jnp.dot(p_ref[...], w_ref[...], preferred_element_type=jnp.float32)
    y_ref[...] = y.astype(y_ref.dtype)
    stats_ref[0, 0:1, :] = jnp.sum(y, axis=0, keepdims=True)
    stats_ref[0, 1:2, :] = jnp.sum(y * y, axis=0, keepdims=True)


def _bn_lrelu_linear_kernel(x_ref, scale_ref, shift_ref, w_ref, b_ref, o_ref,
                            *, slope):
    # Fused: BatchNorm affine (f32) + LeakyReLU on the raw conv4 output,
    # followed by the fc GEMM (bf16 operands, f32 accumulation) + bias.
    x = x_ref[...].astype(jnp.float32) * scale_ref[...] + shift_ref[...]
    x = jnp.maximum(x, slope * x)
    y = jnp.dot(x.astype(w_ref.dtype), w_ref[...],
                preferred_element_type=jnp.float32)
    o_ref[...] = y + b_ref[...]


# ------------------------------- helpers -------------------------------------

def _round_up(x, m):
    return ((x + m - 1) // m) * m


def _pad_rows(x, target):
    pad = target - x.shape[0]
    if pad <= 0:
        return x
    return jnp.pad(x, ((0, pad),) + ((0, 0),) * (x.ndim - 1))


def _tile_cap_for_k(K):
    # Cap tm so the double-buffered bf16 (tm, K) patch tile stays <= ~8 MiB:
    # fits v7x's 64 MiB VMEM and v5e's 16 MiB scoped default with headroom.
    cap = (4 << 20) // (4 * K)          # 2 buffers * tm * K * 2 bytes <= 8 MiB
    return max(64, min(1024, (cap // 16) * 16))


def _choose_tile_m(M, cap, min_tiles=2):
    # tm: multiple of 16 (bf16 sublane packing), multiple of 128 when large,
    # bounded by `cap`, and exposing >= min_tiles grid steps when M allows it
    # so v7x's second TensorCore gets work on the 'parallel' grid axis.
    Mr = _round_up(max(M, 8), 16)
    ntiles = max(pl.cdiv(Mr, cap), min_tiles if Mr >= 32 else 1)
    tm = _round_up(pl.cdiv(Mr, ntiles), 16)
    if tm >= 128:
        tm = _round_up(tm, 128)
    Mp = _round_up(Mr, tm)
    return tm, Mp


def _im2col_nhwc(x_nhwc, k, stride, pad):
    """im2col on NHWC -> ([M=N*Ho*Wo, K=k*k*Cin], N, Ho, Wo); K ordered
    (kh, kw, Cin) so channels stay innermost (lane-friendly, no transpose).
    stride=2 / pad=1 / k=4 for every conv of this model.
    TODO(synk): move in-kernel (halo DMA of NHWC row bands)."""
    N, H, W, C = x_nhwc.shape
    xp = jnp.pad(x_nhwc, ((0, 0), (pad, pad), (pad, pad), (0, 0)))
    Ho = (H + 2 * pad - k) // stride + 1
    Wo = (W + 2 * pad - k) // stride + 1
    cols = []
    for i in range(k):
        for j in range(k):
            cols.append(
                xp[:, i:i + stride * Ho:stride, j:j + stride * Wo:stride, :])
    pt = jnp.stack(cols, axis=3)                       # [N, Ho, Wo, k*k, C]
    return pt.reshape(N * Ho * Wo, k * k * C), N, Ho, Wo


def _conv_prep(x_nhwc, w_oikk, stride=2, pad=1):
    # Build bf16 GEMM operands for one conv layer (no lane padding anywhere).
    Cout, Cin, kh, kw = w_oikk.shape
    patches, N, Ho, Wo = _im2col_nhwc(x_nhwc.astype(jnp.bfloat16), kh, stride, pad)
    M, K = patches.shape
    # PyTorch weight [Cout, Cin, kh, kw] -> [(kh, kw, Cin), Cout], bf16.
    w2d = jnp.transpose(w_oikk, (2, 3, 1, 0)).reshape(K, Cout).astype(jnp.bfloat16)
    tm, Mp = _choose_tile_m(M, _tile_cap_for_k(K))
    patches = _pad_rows(patches, Mp)       # zero rows: inert in GEMM and stats
    return patches, w2d, (N, Ho, Wo, Cout, M, Mp, K, tm)


# ------------------------------ layer wrappers -------------------------------

def conv_lrelu_nhwc(x_nhwc, w_oikk, *, slope=_SLOPE):
    """Conv(4, 2, 1, bias=False) + LeakyReLU  (layer 1: no BatchNorm)."""
    patches, w2d, (N, Ho, Wo, Cout, M, Mp, K, tm) = _conv_prep(x_nhwc, w_oikk)
    y = pl.pallas_call(
        functools.partial(_gemm_lrelu_kernel, slope=slope),
        out_shape=jax.ShapeDtypeStruct((Mp, Cout), jnp.bfloat16),
        grid=(Mp // tm,),
        in_specs=[
            pl.BlockSpec((tm, K), lambda i: (i, 0)),
            # constant index_map -> weight block is only fetched once
            pl.BlockSpec((K, Cout), lambda i: (0, 0)),
        ],
        out_specs=pl.BlockSpec((tm, Cout), lambda i: (i, 0)),
        compiler_params=_COMPILER_PARAMS,
    )(patches, w2d)
    return y[:M].reshape(N, Ho, Wo, Cout)


def conv_bn_stats_nhwc(x_nhwc, w_oikk, gamma, beta, *, eps=_BN_EPS):
    """Conv(4, 2, 1, bias=False) producing the *raw* (pre-BN) NHWC output plus
    training-mode BatchNorm (scale, shift) in f32.  The affine + LeakyReLU is
    applied by the consumer (next layer's patch fusion, or the fc kernel)."""
    patches, w2d, (N, Ho, Wo, Cout, M, Mp, K, tm) = _conv_prep(x_nhwc, w_oikk)
    T = Mp // tm
    y, stats = pl.pallas_call(
        _gemm_stats_kernel,
        out_shape=(
            jax.ShapeDtypeStruct((Mp, Cout), jnp.bfloat16),
            jax.ShapeDtypeStruct((T, 2, Cout), jnp.float32),
        ),
        grid=(T,),
        in_specs=[
            pl.BlockSpec((tm, K), lambda i: (i, 0)),
            pl.BlockSpec((K, Cout), lambda i: (0, 0)),
        ],
        out_specs=(
            pl.BlockSpec((tm, Cout), lambda i: (i, 0)),
            pl.BlockSpec((1, 2, Cout), lambda i: (i, 0, 0)),
        ),
        compiler_params=_COMPILER_PARAMS,
    )(patches, w2d)

    # Tiny cross-tile reduction (f32).  Training-mode batch statistics with
    # biased variance, normalized by the true M so zero-padded rows are inert.
    # NOTE: single-pass E[y^2] - mean^2; fine here (near zero-mean conv
    # outputs), use a shifted two-pass if |mean| >> std matters.
    tot = jnp.sum(stats, axis=0)                # [2, Cout]
    mean = tot[0] / M
    var = jnp.maximum(tot[1] / M - mean * mean, 0.0)
    inv = jax.lax.rsqrt(var + eps)
    scale = gamma.astype(jnp.float32) * inv
    shift = beta.astype(jnp.float32) - mean * scale
    return y[:M].reshape(N, Ho, Wo, Cout), scale, shift


def bn_lrelu(y_raw, scale, shift, *, slope=_SLOPE):
    """BatchNorm affine + LeakyReLU between conv layers.  Intentionally plain
    XLA: it fuses into the next layer's im2col pad/stack (one pass over the
    activation, no standalone Pallas elementwise pass), and applying it before
    the spatial zero-pad keeps the conv borders exactly 0.  Affine math in f32,
    storage in bf16."""
    a = y_raw.astype(jnp.float32) * scale + shift
    return jnp.maximum(a, slope * a).astype(jnp.bfloat16)


def linear_bn_lrelu(y_nhwc, scale_c, shift_c, w, b, *, slope=_SLOPE):
    """Fused [BatchNorm affine + LeakyReLU + Linear] on the raw conv4 output.
    `w` is already permuted to NHWC-flatten column order, shape [n_z, H*W*C]."""
    N, H, W, C = y_nhwc.shape
    K = H * W * C
    n_z = w.shape[0]
    x = y_nhwc.reshape(N, K)                                  # bf16, (h,w,c) order
    scale_k = jnp.tile(scale_c, H * W).reshape(1, K)          # f32, matches order
    shift_k = jnp.tile(shift_c, H * W).reshape(1, K)
    w2d = jnp.transpose(w).astype(jnp.bfloat16)               # [K, n_z]
    b2d = b.astype(jnp.float32).reshape(1, n_z)
    tm, Np = _choose_tile_m(N, 256)
    xp = _pad_rows(x, Np)
    out = pl.pallas_call(
        functools.partial(_bn_lrelu_linear_kernel, slope=slope),
        out_shape=jax.ShapeDtypeStruct((Np, n_z), jnp.float32),
        grid=(Np // tm,),
        in_specs=[
            pl.BlockSpec((tm, K), lambda i: (i, 0)),
            pl.BlockSpec((1, K), lambda i: (0, 0)),
            pl.BlockSpec((1, K), lambda i: (0, 0)),
            pl.BlockSpec((K, n_z), lambda i: (0, 0)),
            pl.BlockSpec((1, n_z), lambda i: (0, 0)),
        ],
        out_specs=pl.BlockSpec((tm, n_z), lambda i: (i, 0)),
        compiler_params=_COMPILER_PARAMS,
    )(xp, scale_k, shift_k, w2d, b2d)
    return out[:N]


# ------------------------------ Encoder model --------------------------------

def init_params(key, args):
    nc, dh, nz = args["n_channel"], args["dim_h"], args["n_z"]
    ks = jax.random.split(key, 6)
    return {
        "w1": 0.05 * jax.random.normal(ks[0], (dh, nc, 4, 4), jnp.float32),
        "w2": 0.05 * jax.random.normal(ks[1], (dh * 2, dh, 4, 4), jnp.float32),
        "w3": 0.05 * jax.random.normal(ks[2], (dh * 4, dh * 2, 4, 4), jnp.float32),
        "w4": 0.05 * jax.random.normal(ks[3], (dh * 8, dh * 4, 4, 4), jnp.float32),
        # Fresh nn.BatchNorm2d: weight=1, bias=0 (training-mode batch stats).
        "g2": jnp.ones((dh * 2,), jnp.float32),
        "b2": jnp.zeros((dh * 2,), jnp.float32),
        "g3": jnp.ones((dh * 4,), jnp.float32),
        "b3": jnp.zeros((dh * 4,), jnp.float32),
        "g4": jnp.ones((dh * 8,), jnp.float32),
        "b4": jnp.zeros((dh * 8,), jnp.float32),
        "fc_w": 0.02 * jax.random.normal(ks[4], (nz, dh * 8 * 4 * 4), jnp.float32),
        "fc_b": 0.02 * jax.random.normal(ks[5], (nz,), jnp.float32),
    }


def encoder_forward(params, x_nchw):
    # Public interface is NCHW (PyTorch).  Convert once to NHWC + bf16 and stay
    # there; the PyTorch NCHW `view(N, -1)` flatten is folded into the fc
    # weight permutation so no activation transpose is ever needed.
    x = jnp.transpose(x_nchw, (0, 2, 3, 1)).astype(jnp.bfloat16)

    a1 = conv_lrelu_nhwc(x, params["w1"])
    y2, s2, t2 = conv_bn_stats_nhwc(a1, params["w2"], params["g2"], params["b2"])
    a2 = bn_lrelu(y2, s2, t2)
    y3, s3, t3 = conv_bn_stats_nhwc(a2, params["w3"], params["g3"], params["b3"])
    a3 = bn_lrelu(y3, s3, t3)
    y4, s4, t4 = conv_bn_stats_nhwc(a3, params["w4"], params["g4"], params["b4"])

    # Layer-4 BN affine + LeakyReLU is fused into the fc Pallas kernel.
    N, H, W, C = y4.shape
    fc_w = params["fc_w"].reshape(-1, C, H, W).transpose(0, 2, 3, 1)
    fc_w = fc_w.reshape(-1, H * W * C)
    return linear_bn_lrelu(y4, s4, t4, fc_w, params["fc_b"])


if __name__ == "__main__":
    args = {"n_channel": 3, "dim_h": 8, "n_z": 16}
    key = jax.random.PRNGKey(0)
    params = init_params(key, args)
    # fc in-features = dim_h*8*4*4 with four stride-2 convs => 64x64 input.
    x = jax.random.normal(
        jax.random.fold_in(key, 999), (2, args["n_channel"], 64, 64), jnp.float32
    )
    fwd = jax.jit(encoder_forward)
    z = fwd(params, x)
    jax.block_until_ready(z)
    assert z.shape == (2, args["n_z"]) and z.dtype == jnp.float32
    assert bool(jnp.all(jnp.isfinite(z)))
    print("KERNEL_OK")
</pallas_src>

<mosaic_0001>
module attributes {stable_mosaic.version = 11 : i64} {
  func.func @_gemm_lrelu_kernel(%arg0: i32, %arg1: memref<1024x48xbf16, #tpu.memory_space<vmem>>, %arg2: memref<48x8xbf16, #tpu.memory_space<vmem>>, %arg3: memref<1024x8xbf16, #tpu.memory_space<vmem>>) attributes {dimension_semantics = [#tpu.dimension_semantics<parallel>], iteration_bounds = array<i64: 2>, scalar_prefetch = 0 : i64, scratch_operands = 0 : i64, tpu.core_type = #tpu.core_type<tc>, window_params = [{transform_indices = @transform_0, window_bounds = array<i64: 1024, 48>}, {pipeline_mode = #tpu.pipeline_mode<synchronous>, transform_indices = @transform_1, window_bounds = array<i64: 48, 8>}, {transform_indices = @transform_2, window_bounds = array<i64: 1024, 8>}]} {
    %c0 = arith.constant 0 : index
    %c0_0 = arith.constant 0 : index
    %0 = vector.load %arg1[%c0, %c0_0] : memref<1024x48xbf16, #tpu.memory_space<vmem>>, vector<1024x48xbf16>
    %c0_1 = arith.constant 0 : index
    %c0_2 = arith.constant 0 : index
    %1 = vector.load %arg2[%c0_1, %c0_2] : memref<48x8xbf16, #tpu.memory_space<vmem>>, vector<48x8xbf16>
    %cst = arith.constant dense<0.000000e+00> : vector<1024x8xf32>
    %2 = tpu.matmul %0, %1, %cst {dimension_numbers = #tpu.dot_dimension_numbers<[1], [0], [0], [1], [0, 0, 1, 1], [], []>} : vector<1024x48xbf16>, vector<48x8xbf16>, vector<1024x8xf32> -> vector<1024x8xf32>
    %cst_3 = arith.constant 2.000000e-01 : f32
    %3 = vector.broadcast %cst_3 : f32 to vector<1024x8xf32>
    %4 = arith.mulf %3, %2 : vector<1024x8xf32>
    %5 = arith.maximumf %2, %4 : vector<1024x8xf32>
    %6 = arith.truncf %5 : vector<1024x8xf32> to vector<1024x8xbf16>
    %c0_4 = arith.constant 0 : index
    %c0_5 = arith.constant 0 : index
    %7 = vector.load %arg3[%c0_4, %c0_5] : memref<1024x8xbf16, #tpu.memory_space<vmem>>, vector<1024x8xbf16>
    tpu.vector_store %arg3[%c0_4, %c0_5], %6 {strides = array<i32>} : memref<1024x8xbf16, #tpu.memory_space<vmem>>, vector<1024x8xbf16>,
    return
  }
  func.func @transform_0(%arg0: i32) -> (i32, i32) {
    %c0_i32 = arith.constant 0 : i32
    %c0_i32_0 = arith.constant 0 : i32
    return %arg0, %c0_i32 : i32, i32
  }
  func.func @transform_1(%arg0: i32) -> (i32, i32) {
    %c0_i32 = arith.constant 0 : i32
    %c0_i32_0 = arith.constant 0 : i32
    %c0_i32_1 = arith.constant 0 : i32
    return %c0_i32, %c0_i32_0 : i32, i32
  }
  func.func @transform_2(%arg0: i32) -> (i32, i32) {
    %c0_i32 = arith.constant 0 : i32
    %c0_i32_0 = arith.constant 0 : i32
    return %arg0, %c0_i32 : i32, i32
  }
}

module attributes {stable_mosaic.version = 11 : i64} {
  func.func @_gemm_stats_kernel(%arg0: i32, %arg1: memref<256x128xbf16, #tpu.memory_space<vmem>>, %arg2: memref<128x16xbf16, #tpu.memory_space<vmem>>, %arg3: memref<256x16xbf16, #tpu.memory_space<vmem>>, %arg4: memref<1x2x16xf32, #tpu.memory_space<vmem>>) attributes {dimension_semantics = [#tpu.dimension_semantics<parallel>], iteration_bounds = array<i64: 2>, scalar_prefetch = 0 : i64, scratch_operands = 0 : i64, tpu.core_type = #tpu.core_type<tc>, window_params = [{transform_indices = @transform_0, window_bounds = array<i64: 256, 128>}, {pipeline_mode = #tpu.pipeline_mode<synchronous>, transform_indices = @transform_1, window_bounds = array<i64: 128, 16>}, {transform_indices = @transform_2, window_bounds = array<i64: 256, 16>}, {transform_indices = @transform_3, window_bounds = array<i64: 1, 2, 16>}]} {
    %c0 = arith.constant 0 : index
    %c0_0 = arith.constant 0 : index
    %0 = vector.load %arg1[%c0, %c0_0] : memref<256x128xbf16, #tpu.memory_space<vmem>>, vector<256x128xbf16>
    %c0_1 = arith.constant 0 : index
    %c0_2 = arith.constant 0 : index
    %1 = vector.load %arg2[%c0_1, %c0_2] : memref<128x16xbf16, #tpu.memory_space<vmem>>, vector<128x16xbf16>
    %cst = arith.constant dense<0.000000e+00> : vector<256x16xf32>
    %2 = tpu.matmul %0, %1, %cst {dimension_numbers = #tpu.dot_dimension_numbers<[1], [0], [0], [1], [0, 0, 1, 1], [], []>} : vector<256x128xbf16>, vector<128x16xbf16>, vector<256x16xf32> -> vector<256x16xf32>
    %3 = arith.truncf %2 : vector<256x16xf32> to vector<256x16xbf16>
    %c0_3 = arith.constant 0 : index
    %c0_4 = arith.constant 0 : index
    %4 = vector.load %arg3[%c0_3, %c0_4] : memref<256x16xbf16, #tpu.memory_space<vmem>>, vector<256x16xbf16>
    tpu.vector_store %arg3[%c0_3, %c0_4], %3 {strides = array<i32>} : memref<256x16xbf16, #tpu.memory_space<vmem>>, vector<256x16xbf16>,
    %cst_5 = arith.constant dense<0.000000e+00> : vector<16xf32>
    %5 = vector.multi_reduction <add>, %2, %cst_5 [0] : vector<256x16xf32> to vector<16xf32>
    %6 = vector.shape_cast %5 : vector<16xf32> to vector<1x16xf32>
    %c0_6 = arith.constant 0 : index
    %c0_7 = arith.constant 0 : index
    %c0_8 = arith.constant 0 : index
    %7 = vector.load %arg4[%c0_6, %c0_7, %c0_8] : memref<1x2x16xf32, #tpu.memory_space<vmem>>, vector<1x1x16xf32>
    %8 = vector.shape_cast %7 : vector<1x1x16xf32> to vector<1x16xf32>
    %9 = vector.shape_cast %6 : vector<1x16xf32> to vector<1x1x16xf32>
    tpu.vector_store %arg4[%c0_6, %c0_7, %c0_8], %9 {strides = array<i32>} : memref<1x2x16xf32, #tpu.memory_space<vmem>>, vector<1x1x16xf32>,
    %10 = arith.mulf %2, %2 : vector<256x16xf32>
    %cst_9 = arith.constant dense<0.000000e+00> : vector<16xf32>
    %11 = vector.multi_reduction <add>, %10, %cst_9 [0] : vector<256x16xf32> to vector<16xf32>
    %12 = vector.shape_cast %11 : vector<16xf32> to vector<1x16xf32>
    %c0_10 = arith.constant 0 : index
    %c1 = arith.constant 1 : index
    %c0_11 = arith.constant 0 : index
    %13 = vector.load %arg4[%c0_10, %c1, %c0_11] : memref<1x2x16xf32, #tpu.memory_space<vmem>>, vector<1x1x16xf32>
    %14 = vector.shape_cast %13 : vector<1x1x16xf32> to vector<1x16xf32>
    %15 = vector.shape_cast %12 : vector<1x16xf32> to vector<1x1x16xf32>
    tpu.vector_store %arg4[%c0_10, %c1, %c0_11], %15 {strides = array<i32>} : memref<1x2x16xf32, #tpu.memory_space<vmem>>, vector<1x1x16xf32>,
    return
  }
  func.func @transform_0(%arg0: i32) -> (i32, i32) {
    %c0_i32 = arith.constant 0 : i32
    %c0_i32_0 = arith.constant 0 : i32
    return %arg0, %c0_i32 : i32, i32
  }
  func.func @transform_1(%arg0: i32) -> (i32, i32) {
    %c0_i32 = arith.constant 0 : i32
    %c0_i32_0 = arith.constant 0 : i32
    %c0_i32_1 = arith.constant 0 : i32
    return %c0_i32, %c0_i32_0 : i32, i32
  }
  func.func @transform_2(%arg0: i32) -> (i32, i32) {
    %c0_i32 = arith.constant 0 : i32
    %c0_i32_0 = arith.constant 0 : i32
    return %arg0, %c0_i32 : i32, i32
  }
  func.func @transform_3(%arg0: i32) -> (i32, i32, i32) {
    %c0_i32 = arith.constant 0 : i32
    %c0_i32_0 = arith.constant 0 : i32
    %c0_i32_1 = arith.constant 0 : i32
    return %arg0, %c0_i32, %c0_i32_0 : i32, i32, i32
  }
}

module attributes {stable_mosaic.version = 11 : i64} {
  func.func @_gemm_stats_kernel(%arg0: i32, %arg1: memref<64x256xbf16, #tpu.memory_space<vmem>>, %arg2: memref<256x32xbf16, #tpu.memory_space<vmem>>, %arg3: memref<64x32xbf16, #tpu.memory_space<vmem>>, %arg4: memref<1x2x32xf32, #tpu.memory_space<vmem>>) attributes {dimension_semantics = [#tpu.dimension_semantics<parallel>], iteration_bounds = array<i64: 2>, scalar_prefetch = 0 : i64, scratch_operands = 0 : i64, tpu.core_type = #tpu.core_type<tc>, window_params = [{transform_indices = @transform_0, window_bounds = array<i64: 64, 256>}, {pipeline_mode = #tpu.pipeline_mode<synchronous>, transform_indices = @transform_1, window_bounds = array<i64: 256, 32>}, {transform_indices = @transform_2, window_bounds = array<i64: 64, 32>}, {transform_indices = @transform_3, window_bounds = array<i64: 1, 2, 32>}]} {
    %c0 = arith.constant 0 : index
    %c0_0 = arith.constant 0 : index
    %0 = vector.load %arg1[%c0, %c0_0] : memref<64x256xbf16, #tpu.memory_space<vmem>>, vector<64x256xbf16>
    %c0_1 = arith.constant 0 : index
    %c0_2 = arith.constant 0 : index
    %1 = vector.load %arg2[%c0_1, %c0_2] : memref<256x32xbf16, #tpu.memory_space<vmem>>, vector<256x32xbf16>
    %cst = arith.constant dense<0.000000e+00> : vector<64x32xf32>
    %2 = tpu.matmul %0, %1, %cst {dimension_numbers = #tpu.dot_dimension_numbers<[1], [0], [0], [1], [0, 0, 1, 1], [], []>} : vector<64x256xbf16>, vector<256x32xbf16>, vector<64x32xf32> -> vector<64x32xf32>
    %3 = arith.truncf %2 : vector<64x32xf32> to vector<64x32xbf16>
    %c0_3 = arith.constant 0 : index
    %c0_4 = arith.constant 0 : index
    %4 = vector.load %arg3[%c0_3, %c0_4] : memref<64x32xbf16, #tpu.memory_space<vmem>>, vector<64x32xbf16>
    tpu.vector_store %arg3[%c0_3, %c0_4], %3 {strides = array<i32>} : memref<64x32xbf16, #tpu.memory_space<vmem>>, vector<64x32xbf16>,
    %cst_5 = arith.constant dense<0.000000e+00> : vector<32xf32>
    %5 = vector.multi_reduction <add>, %2, %cst_5 [0] : vector<64x32xf32> to vector<32xf32>
    %6 = vector.shape_cast %5 : vector<32xf32> to vector<1x32xf32>
    %c0_6 = arith.constant 0 : index
    %c0_7 = arith.constant 0 : index
    %c0_8 = arith.constant 0 : index
    %7 = vector.load %arg4[%c0_6, %c0_7, %c0_8] : memref<1x2x32xf32, #tpu.memory_space<vmem>>, vector<1x1x32xf32>
    %8 = vector.shape_cast %7 : vector<1x1x32xf32> to vector<1x32xf32>
    %9 = vector.shape_cast %6 : vector<1x32xf32> to vector<1x1x32xf32>
    tpu.vector_store %arg4[%c0_6, %c0_7, %c0_8], %9 {strides = array<i32>} : memref<1x2x32xf32, #tpu.memory_space<vmem>>, vector<1x1x32xf32>,
    %10 = arith.mulf %2, %2 : vector<64x32xf32>
    %cst_9 = arith.constant dense<0.000000e+00> : vector<32xf32>
    %11 = vector.multi_reduction <add>, %10, %cst_9 [0] : vector<64x32xf32> to vector<32xf32>
    %12 = vector.shape_cast %11 : vector<32xf32> to vector<1x32xf32>
    %c0_10 = arith.constant 0 : index
    %c1 = arith.constant 1 : index
    %c0_11 = arith.constant 0 : index
    %13 = vector.load %arg4[%c0_10, %c1, %c0_11] : memref<1x2x32xf32, #tpu.memory_space<vmem>>, vector<1x1x32xf32>
    %14 = vector.shape_cast %13 : vector<1x1x32xf32> to vector<1x32xf32>
    %15 = vector.shape_cast %12 : vector<1x32xf32> to vector<1x1x32xf32>
    tpu.vector_store %arg4[%c0_10, %c1, %c0_11], %15 {strides = array<i32>} : memref<1x2x32xf32, #tpu.memory_space<vmem>>, vector<1x1x32xf32>,
    return
  }
  func.func @transform_0(%arg0: i32) -> (i32, i32) {
    %c0_i32 = arith.constant 0 : i32
    %c0_i32_0 = arith.constant 0 : i32
    return %arg0, %c0_i32 : i32, i32
  }
  func.func @transform_1(%arg0: i32) -> (i32, i32) {
    %c0_i32 = arith.constant 0 : i32
    %c0_i32_0 = arith.constant 0 : i32
    %c0_i32_1 = arith.constant 0 : i32
    return %c0_i32, %c0_i32_0 : i32, i32
  }
  func.func @transform_2(%arg0: i32) -> (i32, i32) {
    %c0_i32 = arith.constant 0 : i32
    %c0_i32_0 = arith.constant 0 : i32
    return %arg0, %c0_i32 : i32, i32
  }
  func.func @transform_3(%arg0: i32) -> (i32, i32, i32) {
    %c0_i32 = arith.constant 0 : i32
    %c0_i32_0 = arith.constant 0 : i32
    %c0_i32_1 = arith.constant 0 : i32
    return %arg0, %c0_i32, %c0_i32_0 : i32, i32, i32
  }
}

module attributes {stable_mosaic.version = 11 : i64} {
  func.func @_gemm_stats_kernel(%arg0: i32, %arg1: memref<16x512xbf16, #tpu.memory_space<vmem>>, %arg2: memref<512x64xbf16, #tpu.memory_space<vmem>>, %arg3: memref<16x64xbf16, #tpu.memory_space<vmem>>, %arg4: memref<1x2x64xf32, #tpu.memory_space<vmem>>) attributes {dimension_semantics = [#tpu.dimension_semantics<parallel>], iteration_bounds = array<i64: 2>, scalar_prefetch = 0 : i64, scratch_operands = 0 : i64, tpu.core_type = #tpu.core_type<tc>, window_params = [{transform_indices = @transform_0, window_bounds = array<i64: 16, 512>}, {pipeline_mode = #tpu.pipeline_mode<synchronous>, transform_indices = @transform_1, window_bounds = array<i64: 512, 64>}, {transform_indices = @transform_2, window_bounds = array<i64: 16, 64>}, {transform_indices = @transform_3, window_bounds = array<i64: 1, 2, 64>}]} {
    %c0 = arith.constant 0 : index
    %c0_0 = arith.constant 0 : index
    %0 = vector.load %arg1[%c0, %c0_0] : memref<16x512xbf16, #tpu.memory_space<vmem>>, vector<16x512xbf16>
    %c0_1 = arith.constant 0 : index
    %c0_2 = arith.constant 0 : index
    %1 = vector.load %arg2[%c0_1, %c0_2] : memref<512x64xbf16, #tpu.memory_space<vmem>>, vector<512x64xbf16>
    %cst = arith.constant dense<0.000000e+00> : vector<16x64xf32>
    %2 = tpu.matmul %0, %1, %cst {dimension_numbers = #tpu.dot_dimension_numbers<[1], [0], [0], [1], [0, 0, 1, 1], [], []>} : vector<16x512xbf16>, vector<512x64xbf16>, vector<16x64xf32> -> vector<16x64xf32>
    %3 = arith.truncf %2 : vector<16x64xf32> to vector<16x64xbf16>
    %c0_3 = arith.constant 0 : index
    %c0_4 = arith.constant 0 : index
    %4 = vector.load %arg3[%c0_3, %c0_4] : memref<16x64xbf16, #tpu.memory_space<vmem>>, vector<16x64xbf16>
    tpu.vector_store %arg3[%c0_3, %c0_4], %3 {strides = array<i32>} : memref<16x64xbf16, #tpu.memory_space<vmem>>, vector<16x64xbf16>,
    %cst_5 = arith.constant dense<0.000000e+00> : vector<64xf32>
    %5 = vector.multi_reduction <add>, %2, %cst_5 [0] : vector<16x64xf32> to vector<64xf32>
    %6 = vector.shape_cast %5 : vector<64xf32> to vector<1x64xf32>
    %c0_6 = arith.constant 0 : index
    %c0_7 = arith.constant 0 : index
    %c0_8 = arith.constant 0 : index
    %7 = vector.load %arg4[%c0_6, %c0_7, %c0_8] : memref<1x2x64xf32, #tpu.memory_space<vmem>>, vector<1x1x64xf32>
    %8 = vector.shape_cast %7 : vector<1x1x64xf32> to vector<1x64xf32>
    %9 = vector.shape_cast %6 : vector<1x64xf32> to vector<1x1x64xf32>
    tpu.vector_store %arg4[%c0_6, %c0_7, %c0_8], %9 {strides = array<i32>} : memref<1x2x64xf32, #tpu.memory_space<vmem>>, vector<1x1x64xf32>,
    %10 = arith.mulf %2, %2 : vector<16x64xf32>
    %cst_9 = arith.constant dense<0.000000e+00> : vector<64xf32>
    %11 = vector.multi_reduction <add>, %10, %cst_9 [0] : vector<16x64xf32> to vector<64xf32>
    %12 = vector.shape_cast %11 : vector<64xf32> to vector<1x64xf32>
    %c0_10 = arith.constant 0 : index
    %c1 = arith.constant 1 : index
    %c0_11 = arith.constant 0 : index
    %13 = vector.load %arg4[%c0_10, %c1, %c0_11] : memref<1x2x64xf32, #tpu.memory_space<vmem>>, vector<1x1x64xf32>
    %14 = vector.shape_cast %13 : vector<1x1x64xf32> to vector<1x64xf32>
    %15 = vector.shape_cast %12 : vector<1x64xf32> to vector<1x1x64xf32>
    tpu.vector_store %arg4[%c0_10, %c1, %c0_11], %15 {strides = array<i32>} : memref<1x2x64xf32, #tpu.memory_space<vmem>>, vector<1x1x64xf32>,
    return
  }
  func.func @transform_0(%arg0: i32) -> (i32, i32) {
    %c0_i32 = arith.constant 0 : i32
    %c0_i32_0 = arith.constant 0 : i32
    return %arg0, %c0_i32 : i32, i32
  }
  func.func @transform_1(%arg0: i32) -> (i32, i32) {
    %c0_i32 = arith.constant 0 : i32
    %c0_i32_0 = arith.constant 0 : i32
    %c0_i32_1 = arith.constant 0 : i32
    return %c0_i32, %c0_i32_0 : i32, i32
  }
  func.func @transform_2(%arg0: i32) -> (i32, i32) {
    %c0_i32 = arith.constant 0 : i32
    %c0_i32_0 = arith.constant 0 : i32
    return %arg0, %c0_i32 : i32, i32
  }
  func.func @transform_3(%arg0: i32) -> (i32, i32, i32) {
    %c0_i32 = arith.constant 0 : i32
    %c0_i32_0 = arith.constant 0 : i32
    %c0_i32_1 = arith.constant 0 : i32
    return %arg0, %c0_i32, %c0_i32_0 : i32, i32, i32
  }
}

module attributes {stable_mosaic.version = 11 : i64} {
  func.func @_bn_lrelu_linear_kernel(%arg0: i32, %arg1: memref<16x1024xbf16, #tpu.memory_space<vmem>>, %arg2: memref<1x1024xf32, #tpu.memory_space<vmem>>, %arg3: memref<1x1024xf32, #tpu.memory_space<vmem>>, %arg4: memref<1024x16xbf16, #tpu.memory_space<vmem>>, %arg5: memref<1x16xf32, #tpu.memory_space<vmem>>, %arg6: memref<16x16xf32, #tpu.memory_space<vmem>>) attributes {dimension_semantics = [#tpu.dimension_semantics<parallel>], iteration_bounds = array<i64: 1>, scalar_prefetch = 0 : i64, scratch_operands = 0 : i64, tpu.core_type = #tpu.core_type<tc>, window_params = [{transform_indices = @transform_0, window_bounds = array<i64: 16, 1024>}, {pipeline_mode = #tpu.pipeline_mode<synchronous>, transform_indices = @transform_1, window_bounds = array<i64: 1, 1024>}, {pipeline_mode = #tpu.pipeline_mode<synchronous>, transform_indices = @transform_2, window_bounds = array<i64: 1, 1024>}, {pipeline_mode = #tpu.pipeline_mode<synchronous>, transform_indices = @transform_3, window_bounds = array<i64: 1024, 16>}, {pipeline_mode = #tpu.pipeline_mode<synchronous>, transform_indices = @transform_4, window_bounds = array<i64: 1, 16>}, {transform_indices = @transform_5, window_bounds = array<i64: 16, 16>}]} {
    %c0 = arith.constant 0 : index
    %c0_0 = arith.constant 0 : index
    %0 = vector.load %arg1[%c0, %c0_0] : memref<16x1024xbf16, #tpu.memory_space<vmem>>, vector<16x1024xbf16>
    %1 = arith.extf %0 : vector<16x1024xbf16> to vector<16x1024xf32>
    %c0_1 = arith.constant 0 : index
    %c0_2 = arith.constant 0 : index
    %2 = vector.load %arg2[%c0_1, %c0_2] : memref<1x1024xf32, #tpu.memory_space<vmem>>, vector<1x1024xf32>
    %3 = vector.broadcast %2 : vector<1x1024xf32> to vector<16x1024xf32>
    %4 = arith.mulf %1, %3 : vector<16x1024xf32>
    %c0_3 = arith.constant 0 : index
    %c0_4 = arith.constant 0 : index
    %5 = vector.load %arg3[%c0_3, %c0_4] : memref<1x1024xf32, #tpu.memory_space<vmem>>, vector<1x1024xf32>
    %6 = vector.broadcast %5 : vector<1x1024xf32> to vector<16x1024xf32>
    %7 = arith.addf %4, %6 : vector<16x1024xf32>
    %cst = arith.constant 2.000000e-01 : f32
    %8 = vector.broadcast %cst : f32 to vector<16x1024xf32>
    %9 = arith.mulf %8, %7 : vector<16x1024xf32>
    %10 = arith.maximumf %7, %9 : vector<16x1024xf32>
    %11 = arith.truncf %10 : vector<16x1024xf32> to vector<16x1024xbf16>
    %c0_5 = arith.constant 0 : index
    %c0_6 = arith.constant 0 : index
    %12 = vector.load %arg4[%c0_5, %c0_6] : memref<1024x16xbf16, #tpu.memory_space<vmem>>, vector<1024x16xbf16>
    %cst_7 = arith.constant dense<0.000000e+00> : vector<16x16xf32>
    %13 = tpu.matmul %11, %12, %cst_7 {dimension_numbers = #tpu.dot_dimension_numbers<[1], [0], [0], [1], [0, 0, 1, 1], [], []>} : vector<16x1024xbf16>, vector<1024x16xbf16>, vector<16x16xf32> -> vector<16x16xf32>
    %c0_8 = arith.constant 0 : index
    %c0_9 = arith.constant 0 : index
    %14 = vector.load %arg5[%c0_8, %c0_9] : memref<1x16xf32, #tpu.memory_space<vmem>>, vector<1x16xf32>
    %15 = vector.broadcast %14 : vector<1x16xf32> to vector<16x16xf32>
    %16 = arith.addf %13, %15 : vector<16x16xf32>
    %c0_10 = arith.constant 0 : index
    %c0_11 = arith.constant 0 : index
    %17 = vector.load %arg6[%c0_10, %c0_11] : memref<16x16xf32, #tpu.memory_space<vmem>>, vector<16x16xf32>
    tpu.vector_store %arg6[%c0_10, %c0_11], %16 {strides = array<i32>} : memref<16x16xf32, #tpu.memory_space<vmem>>, vector<16x16xf32>,
    return
  }
  func.func @transform_0(%arg0: i32) -> (i32, i32) {
    %c0_i32 = arith.constant 0 : i32
    %c0_i32_0 = arith.constant 0 : i32
    return %arg0, %c0_i32 : i32, i32
  }
  func.func @transform_1(%arg0: i32) -> (i32, i32) {
    %c0_i32 = arith.constant 0 : i32
    %c0_i32_0 = arith.constant 0 : i32
    %c0_i32_1 = arith.constant 0 : i32
    return %c0_i32, %c0_i32_0 : i32, i32
  }
  func.func @transform_2(%arg0: i32) -> (i32, i32) {
    %c0_i32 = arith.constant 0 : i32
    %c0_i32_0 = arith.constant 0 : i32
    %c0_i32_1 = arith.constant 0 : i32
    return %c0_i32, %c0_i32_0 : i32, i32
  }
  func.func @transform_3(%arg0: i32) -> (i32, i32) {
    %c0_i32 = arith.constant 0 : i32
    %c0_i32_0 = arith.constant 0 : i32
    %c0_i32_1 = arith.constant 0 : i32
    return %c0_i32, %c0_i32_0 : i32, i32
  }
  func.func @transform_4(%arg0: i32) -> (i32, i32) {
    %c0_i32 = arith.constant 0 : i32
    %c0_i32_0 = arith.constant 0 : i32
    %c0_i32_1 = arith.constant 0 : i32
    return %c0_i32, %c0_i32_0 : i32, i32
  }
  func.func @transform_5(%arg0: i32) -> (i32, i32) {
    %c0_i32 = arith.constant 0 : i32
    %c0_i32_0 = arith.constant 0 : i32
    return %arg0, %c0_i32 : i32, i32
  }
}

</mosaic_0001>

<llo_original>
// kernel: encoder_forward.5
$region0: #{encoder_forward.5}
  #allocation0 [shape = 'u32[]', space=smem, size = 0x4, offset = 0x4, fixed_abs, tag = 'smem constant byte address 0x4 - core index']
  #allocation1 [shape = 'u32[144,128]{1,0:T(1,128)}', space=vmem, size = 0x12000, scoped, tag = 'internal scratch']
  %s0 = inlined_call_operand.vmem [shape: bf16[2048,48], index: 0, kind: input, shape index: {}]
  %s1 = inlined_call_operand.vmem [shape: bf16[48,8], index: 1, kind: input, shape index: {}]
  %s2 = inlined_call_operand.vmem [shape: bf16[2048,8], index: 2, kind: output, shape index: {}]
  %s3 = sld [smem:[#allocation0]]
  $region41: #{encoder_forward.5} parent=0
    _
  %s5 = ssub.s32 1, %s3
  %s6 = scalar_select 0, %s5, %s3
  loop: start=0, step=1, limit=4
  $region2: #{encoder_forward.5} parent=0 // loop_pre_header
    _
  $region3: #{encoder_forward.5} parent=0 // loop_header
    %s8 = sphi 0, %s12
    %p9 = scmp.ge.s32.totalorder %s8, 4
    %s18 = sphi 0, %s20
    %s21 = sphi 0, %s18
    %s22 = sphi 0, %s21
    %s38 = sphi 0, %s22
    %s42 = sphi 0, %s42
    %s44 = sphi 0, %s42
    %s45 = sphi 0, %s44
    %s59 = sphi 0, %s45
    %s65 = sphi 0, %s67
    %s68 = sphi 0, %s65
    %s69 = sphi 0, %s68
    %s85 = sphi 0, %s69
  $region4: #{encoder_forward.5} parent=0 // loop_header_branch
    %11 = sbr.rel (%p9) target = $region8
  $region5: #{encoder_forward.5} parent=0 // loop_body
    %s13 = ssub.s32 %s8, 1
    %s14 = ssub.s32 %s8, 2
    %s15 = sadd.s32 %s8, 1
    %s16 = ssub.s32 %s8, %s15
    %p17 = scmp.eq.s32.totalorder %s16, 0
    %s19 = sadd.s32 %s18, 1
    %s20 = scalar_select %p17, %s18, %s19
    %p23 = pneg %p17
    %p24 = scmp.eq.s32.totalorder %s8, 1
    %p25 = por %p23, %p24
    %p26 = scmp.ne.s32.totalorder %s18, %s21
    %p27 = scmp.eq.s32.totalorder %s8, 0
    %p28 = por %p26, %p27
    %p29 = scmp.ne.s32.totalorder %s18, %s21
    %p30 = scmp.eq.s32.totalorder %s13, 1
    %p31 = por %p29, %p30
    %p32 = scmp.ne.s32.totalorder %s21, %s22
    %p33 = scmp.eq.s32.totalorder %s13, 0
    %p34 = por %p32, %p33
    %p35 = scmp.ne.s32.totalorder %s21, %s22
    %p36 = scmp.eq.s32.totalorder %s14, 1
    %p37 = por %p35, %p36
    %p39 = scmp.ne.s32.totalorder %s22, %s38
    %p40 = scmp.eq.s32.totalorder %s14, 0
    %p41 = por %p39, %p40
    %s43 = sadd.s32 %s42, 1
    %p46 = scmp.eq.s32.totalorder %s8, 1
    %p47 = scmp.ne.s32.totalorder %s42, %s44
    %p48 = scmp.eq.s32.totalorder %s8, 0
    %p49 = por %p47, %p48
    %p50 = scmp.ne.s32.totalorder %s42, %s44
    %p51 = scmp.eq.s32.totalorder %s13, 1
    %p52 = por %p50, %p51
    %p53 = scmp.ne.s32.totalorder %s44, %s45
    %p54 = scmp.eq.s32.totalorder %s13, 0
    %p55 = por %p53, %p54
    %p56 = scmp.ne.s32.totalorder %s44, %s45
    %p57 = scmp.eq.s32.totalorder %s14, 1
    %p58 = por %p56, %p57
    %p60 = scmp.ne.s32.totalorder %s45, %s59
    %p61 = scmp.eq.s32.totalorder %s14, 0
    %p62 = por %p60, %p61
    %s63 = ssub.s32 %s8, %s15
    %p64 = scmp.eq.s32.totalorder %s63, 0
    %s66 = sadd.s32 %s65, 1
    %s67 = scalar_select %p64, %s65, %s66
    %p70 = pneg %p64
    %p71 = scmp.eq.s32.totalorder %s8, 1
    %p72 = por %p70, %p71
    %p73 = scmp.ne.s32.totalorder %s65, %s68
    %p74 = scmp.eq.s32.totalorder %s8, 0
    %p75 = por %p73, %p74
    %p76 = scmp.ne.s32.totalorder %s65, %s68
    %p77 = scmp.eq.s32.totalorder %s13, 1
    %p78 = por %p76, %p77
    %p79 = scmp.ne.s32.totalorder %s68, %s69
    %p80 = scmp.eq.s32.totalorder %s13, 0
    %p81 = por %p79, %p80
    %p82 = scmp.ne.s32.totalorder %s68, %s69
    %p83 = scmp.eq.s32.totalorder %s14, 1
    %p84 = por %p82, %p83
    %p86 = scmp.ne.s32.totalorder %s69, %s85
    %p87 = scmp.eq.s32.totalorder %s14, 0
    %p88 = por %p86, %p87
    %p89 = scmp.le.s32.totalorder 1, %s8
    %p90 = scmp.lt.s32.totalorder %s8, 3
    %p91 = pnand %p89, %p90
    %p92 = pneg %p91
    // Predicated region
    $region9: #{encoder_forward.5} parent=5 // pred_check
      _
    $region10: #{encoder_forward.5} parent=5 // pred_check_branch
      %94 = sbr.rel (%p91) target = $region12
    $region11: #{encoder_forward.5} parent=5 // pred_region
      %s95 = ssub.s32 %s8, 1
      // Predicated region
      $region13: #{encoder_forward.5} parent=11 // pred_check
        %p96 = pneg %p55
      $region14: #{encoder_forward.5} parent=11 // pred_check_branch
        %98 = sbr.rel (%p96) target = $region16
      $region15: #{encoder_forward.5} parent=11 // pred_region
        _
      $region16: #{encoder_forward.5} parent=11 // pred_fallthru
        _
    $region12: #{encoder_forward.5} parent=5 // pred_fallthru
      _
    %p99 = scmp.lt.s32.totalorder %s8, 2
    // Predicated region
    $region17: #{encoder_forward.5} parent=5 // pred_check
      %p100 = pneg %p99
    $region18: #{encoder_forward.5} parent=5 // pred_check_branch
      %102 = sbr.rel (%p100) target = $region20
    $region19: #{encoder_forward.5} parent=5 // pred_region
      // Predicated region
      $region21: #{encoder_forward.5} parent=19 // pred_check
        %p103 = pneg %p28
      $region22: #{encoder_forward.5} parent=19 // pred_check_branch
        %105 = sbr.rel (%p103) target = $region24
      $region23: #{encoder_forward.5} parent=19 // pred_region
        %s106 = smul.u32 128, %s8
        %p107 = scmp.lt.s32.totalorder %s106, 255
        %s108 = scalar_select %p107, %s106, 255
        %s109 = smul.addr %s108, 4
        %s110 = scalar_lea.vmem %s0, %s109
        %s111 = smul.u32 128, %s8
      $region24: #{encoder_forward.5} parent=19 // pred_fallthru
        _
    $region20: #{encoder_forward.5} parent=5 // pred_fallthru
      _
    %p112 = scmp.le.s32.totalorder 1, %s8
    %p113 = scmp.lt.s32.totalorder %s8, 3
    %p114 = pnand %p112, %p113
    %p115 = pneg %p114
    // Predicated region
    $region25: #{encoder_forward.5} parent=5 // pred_check
      _
    $region26: #{encoder_forward.5} parent=5 // pred_check_branch
      %117 = sbr.rel (%p114) target = $region28
    $region27: #{encoder_forward.5} parent=5 // pred_region
      %s118 = ssub.s32 %s8, 1
      %s119 = smul.u32 128, %s13
      %p120 = scmp.lt.s32.totalorder %s119, 255
      %s121 = scalar_select %p120, %s119, 255
      %s122 = smul.addr %s121, 4
      %s123 = scalar_lea.vmem %s0, %s122
      %p124 = pneg %p34
      %p125 = pneg %p31
      %p126 = pneg %p55
      %p127 = pneg %p52
      %p128 = pneg %p81
      %p129 = pneg %p78
      %s130 = smul.u32 128, %s13
      %p131 = scmp.lt.s32.totalorder %s130, 255
      %s132 = scalar_select %p131, %s130, 255
      %s133 = smul.addr %s132, 4
      %s134 = scalar_lea.vmem %s2, %s133
      %s135 = smul.u32 128, %s13
      %p136 = scmp.lt.s32.totalorder %s135, 255
      %s137 = scalar_select %p136, %s135, 255
      %s138 = smul.addr %s137, 4
      %s139 = scalar_lea.vmem %s0, %s138
      %s140 = smul.u32 128, %s13
      %s141 = smul.u32 128, %s13
      %p142 = scmp.lt.s32.totalorder %s141, 255
      %s143 = scalar_select %p142, %s141, 255
      %s144 = smul.addr %s143, 4
      %s145 = scalar_lea.vmem %s2, %s144
      %s146 = smul.u32 128, %s13
      %v148 = vld [vmem:[%s139] sm:$0xf]
      %v149 = vld [vmem:[%s139 + $0x4] sm:$0xf]
      %v150 = vld [vmem:[%s139 + $0x8] sm:$0xf]
      %v151 = vld [vmem:[%s139 + $0xc] sm:$0xf]
      %v152 = vld [vmem:[%s139 + $0x10] sm:$0xf]
      %v153 = vld [vmem:[%s139 + $0x14] sm:$0xf]
      %v154 = vld [vmem:[%s139 + $0x18] sm:$0xf]
      %v155 = vld [vmem:[%s139 + $0x1c] sm:$0xf]
      %v156 = vld [vmem:[%s139 + $0x20] sm:$0xf]
      %v157 = vld [vmem:[%s139 + $0x24] sm:$0xf]
      %v158 = vld [vmem:[%s139 + $0x28] sm:$0xf]
      %v159 = vld [vmem:[%s139 + $0x2c] sm:$0xf]
      %v160 = vld [vmem:[%s139 + $0x30] sm:$0xf]
      %v161 = vld [vmem:[%s139 + $0x34] sm:$0xf]
      %v162 = vld [vmem:[%s139 + $0x38] sm:$0xf]
      %v163 = vld [vmem:[%s139 + $0x3c] sm:$0xf]
      %v164 = vld [vmem:[%s139 + $0x40] sm:$0xf]
      %v165 = vld [vmem:[%s139 + $0x44] sm:$0xf]
      %v166 = vld [vmem:[%s139 + $0x48] sm:$0xf]
      %v167 = vld [vmem:[%s139 + $0x4c] sm:$0xf]
      %v168 = vld [vmem:[%s139 + $0x50] sm:$0xf]
      %v169 = vld [vmem:[%s139 + $0x54] sm:$0xf]
      %v170 = vld [vmem:[%s139 + $0x58] sm:$0xf]
      %v171 = vld [vmem:[%s139 + $0x5c] sm:$0xf]
      %v172 = vld [vmem:[%s139 + $0x60] sm:$0xf]
      %v173 = vld [vmem:[%s139 + $0x64] sm:$0xf]
      %v174 = vld [vmem:[%s139 + $0x68] sm:$0xf]
      %v175 = vld [vmem:[%s139 + $0x6c] sm:$0xf]
      %v176 = vld [vmem:[%s139 + $0x70] sm:$0xf]
      %v177 = vld [vmem:[%s139 + $0x74] sm:$0xf]
      %v178 = vld [vmem:[%s139 + $0x78] sm:$0xf]
      %v179 = vld [vmem:[%s139 + $0x7c] sm:$0xf]
      %v180 = vld [vmem:[%s139 + $0x80] sm:$0xf]
      %v181 = vld [vmem:[%s139 + $0x84] sm:$0xf]
      %v182 = vld [vmem:[%s139 + $0x88] sm:$0xf]
      %v183 = vld [vmem:[%s139 + $0x8c] sm:$0xf]
      %v184 = vld [vmem:[%s139 + $0x90] sm:$0xf]
      %v185 = vld [vmem:[%s139 + $0x94] sm:$0xf]
      %v186 = vld [vmem:[%s139 + $0x98] sm:$0xf]
      %v187 = vld [vmem:[%s139 + $0x9c] sm:$0xf]
      %v188 = vld [vmem:[%s139 + $0xa0] sm:$0xf]
      %v189 = vld [vmem:[%s139 + $0xa4] sm:$0xf]
      %v190 = vld [vmem:[%s139 + $0xa8] sm:$0xf]
      %v191 = vld [vmem:[%s139 + $0xac] sm:$0xf]
      %v192 = vld [vmem:[%s139 + $0xb0] sm:$0xf]
      %v193 = vld [vmem:[%s139 + $0xb4] sm:$0xf]
      %v194 = vld [vmem:[%s139 + $0xb8] sm:$0xf]
      %v195 = vld [vmem:[%s139 + $0xbc] sm:$0xf]
      %v196 = vld [vmem:[%s139 + $0xc0] sm:$0xf]
      %v197 = vld [vmem:[%s139 + $0xc4] sm:$0xf]
      %v198 = vld [vmem:[%s139 + $0xc8] sm:$0xf]
      %v199 = vld [vmem:[%s139 + $0xcc] sm:$0xf]
      %v200 = vld [vmem:[%s139 + $0xd0] sm:$0xf]
      %v201 = vld [vmem:[%s139 + $0xd4] sm:$0xf]
      %v202 = vld [vmem:[%s139 + $0xd8] sm:$0xf]
      %v203 = vld [vmem:[%s139 + $0xdc] sm:$0xf]
      %v204 = vld [vmem:[%s139 + $0xe0] sm:$0xf]
      %v205 = vld [vmem:[%s139 + $0xe4] sm:$0xf]
      %v206 = vld [vmem:[%s139 + $0xe8] sm:$0xf]
      %v207 = vld [vmem:[%s139 + $0xec] sm:$0xf]
      %v208 = vld [vmem:[%s139 + $0xf0] sm:$0xf]
      %v209 = vld [vmem:[%s139 + $0xf4] sm:$0xf]
      %v210 = vld [vmem:[%s139 + $0xf8] sm:$0xf]
      %v211 = vld [vmem:[%s139 + $0xfc] sm:$0xf]
      %v212 = vld [vmem:[%s139 + $0x100] sm:$0xf]
      %v213 = vld [vmem:[%s139 + $0x104] sm:$0xf]
      %v214 = vld [vmem:[%s139 + $0x108] sm:$0xf]
      %v215 = vld [vmem:[%s139 + $0x10c] sm:$0xf]
      %v216 = vld [vmem:[%s139 + $0x110] sm:$0xf]
      %v217 = vld [vmem:[%s139 + $0x114] sm:$0xf]
      %v218 = vld [vmem:[%s139 + $0x118] sm:$0xf]
      %v219 = vld [vmem:[%s139 + $0x11c] sm:$0xf]
      %v220 = vld [vmem:[%s139 + $0x120] sm:$0xf]
      %v221 = vld [vmem:[%s139 + $0x124] sm:$0xf]
      %v222 = vld [vmem:[%s139 + $0x128] sm:$0xf]
      %v223 = vld [vmem:[%s139 + $0x12c] sm:$0xf]
      %v224 = vld [vmem:[%s139 + $0x130] sm:$0xf]
      %v225 = vld [vmem:[%s139 + $0x134] sm:$0xf]
      %v226 = vld [vmem:[%s139 + $0x138] sm:$0xf]
      %v227 = vld [vmem:[%s139 + $0x13c] sm:$0xf]
      %v228 = vld [vmem:[%s139 + $0x140] sm:$0xf]
      %v229 = vld [vmem:[%s139 + $0x144] sm:$0xf]
      %v230 = vld [vmem:[%s139 + $0x148] sm:$0xf]
      %v231 = vld [vmem:[%s139 + $0x14c] sm:$0xf]
      %v232 = vld [vmem:[%s139 + $0x150] sm:$0xf]
      %v233 = vld [vmem:[%s139 + $0x154] sm:$0xf]
      %v234 = vld [vmem:[%s139 + $0x158] sm:$0xf]
      %v235 = vld [vmem:[%s139 + $0x15c] sm:$0xf]
      %v236 = vld [vmem:[%s139 + $0x160] sm:$0xf]
      %v237 = vld [vmem:[%s139 + $0x164] sm:$0xf]
      %v238 = vld [vmem:[%s139 + $0x168] sm:$0xf]
      %v239 = vld [vmem:[%s139 + $0x16c] sm:$0xf]
      %v240 = vld [vmem:[%s139 + $0x170] sm:$0xf]
      %v241 = vld [vmem:[%s139 + $0x174] sm:$0xf]
      %v242 = vld [vmem:[%s139 + $0x178] sm:$0xf]
      %v243 = vld [vmem:[%s139 + $0x17c] sm:$0xf]
      %v244 = vld [vmem:[%s139 + $0x180] sm:$0xf]
      %v245 = vld [vmem:[%s139 + $0x184] sm:$0xf]
      %v246 = vld [vmem:[%s139 + $0x188] sm:$0xf]
      %v247 = vld [vmem:[%s139 + $0x18c] sm:$0xf]
      %v248 = vld [vmem:[%s139 + $0x190] sm:$0xf]
      %v249 = vld [vmem:[%s139 + $0x194] sm:$0xf]
      %v250 = vld [vmem:[%s139 + $0x198] sm:$0xf]
      %v251 = vld [vmem:[%s139 + $0x19c] sm:$0xf]
      %v252 = vld [vmem:[%s139 + $0x1a0] sm:$0xf]
      %v253 = vld [vmem:[%s139 + $0x1a4] sm:$0xf]
      %v254 = vld [vmem:[%s139 + $0x1a8] sm:$0xf]
      %v255 = vld [vmem:[%s139 + $0x1ac] sm:$0xf]
      %v256 = vld [vmem:[%s139 + $0x1b0] sm:$0xf]
      %v257 = vld [vmem:[%s139 + $0x1b4] sm:$0xf]
      %v258 = vld [vmem:[%s139 + $0x1b8] sm:$0xf]
      %v259 = vld [vmem:[%s139 + $0x1bc] sm:$0xf]
      %v260 = vld [vmem:[%s139 + $0x1c0] sm:$0xf]
      %v261 = vld [vmem:[%s139 + $0x1c4] sm:$0xf]
      %v262 = vld [vmem:[%s139 + $0x1c8] sm:$0xf]
      %v263 = vld [vmem:[%s139 + $0x1cc] sm:$0xf]
      %v264 = vld [vmem:[%s139 + $0x1d0] sm:$0xf]
      %v265 = vld [vmem:[%s139 + $0x1d4] sm:$0xf]
      %v266 = vld [vmem:[%s139 + $0x1d8] sm:$0xf]
      %v267 = vld [vmem:[%s139 + $0x1dc] sm:$0xf]
      %v268 = vld [vmem:[%s139 + $0x1e0] sm:$0xf]
      %v269 = vld [vmem:[%s139 + $0x1e4] sm:$0xf]
      %v270 = vld [vmem:[%s139 + $0x1e8] sm:$0xf]
      %v271 = vld [vmem:[%s139 + $0x1ec] sm:$0xf]
      %v272 = vld [vmem:[%s139 + $0x1f0] sm:$0xf]
      %v273 = vld [vmem:[%s139 + $0x1f4] sm:$0xf]
      %v274 = vld [vmem:[%s139 + $0x1f8] sm:$0xf]
      %v275 = vld [vmem:[%s139 + $0x1fc] sm:$0xf]
      %v276 = vld [vmem:[%s1] sm:$0xf]
      %v277 = vld [vmem:[%s1 + $0x4] sm:$0xf]
      %v278 = vld [vmem:[%s1 + $0x8] sm:$0xf]
      %v279 = vld [vmem:[%s1 + $0xc] sm:$0xf]
      %v280 = vld [vmem:[%s1 + $0x10] sm:$0xf]
      %v281 = vld [vmem:[%s1 + $0x14] sm:$0xf]
      %v410 = vunpack.c.l.b16 %v148
      %v411 = vunpack.c.l.b16 %v149
      %v412 = vunpack.c.l.b16 %v150
      %v413 = vunpack.c.l.b16 %v151
      %v414 = vunpack.c.l.b16 %v152
      %v415 = vunpack.c.l.b16 %v153
      %v416 = vunpack.c.l.b16 %v154
      %v417 = vunpack.c.l.b16 %v155
      %v418 = vunpack.c.l.b16 %v156
      %v419 = vunpack.c.l.b16 %v157
      %v420 = vunpack.c.l.b16 %v158
      %v421 = vunpack.c.l.b16 %v159
      %v422 = vunpack.c.l.b16 %v160
      %v423 = vunpack.c.l.b16 %v161
      %v424 = vunpack.c.l.b16 %v162
      %v425 = vunpack.c.l.b16 %v163
      %v426 = vunpack.c.l.b16 %v164
      %v427 = vunpack.c.l.b16 %v165
      %v428 = vunpack.c.l.b16 %v166
      %v429 = vunpack.c.l.b16 %v167
      %v430 = vunpack.c.l.b16 %v168
      %v431 = vunpack.c.l.b16 %v169
      %v432 = vunpack.c.l.b16 %v170
      %v433 = vunpack.c.l.b16 %v171
      %v434 = vunpack.c.l.b16 %v172
      %v435 = vunpack.c.l.b16 %v173
      %v436 = vunpack.c.l.b16 %v174
      %v437 = vunpack.c.l.b16 %v175
      %v438 = vunpack.c.l.b16 %v176
      %v439 = vunpack.c.l.b16 %v177
      %v440 = vunpack.c.l.b16 %v178
      %v441 = vunpack.c.l.b16 %v179
      %v442 = vunpack.c.l.b16 %v180
      %v443 = vunpack.c.l.b16 %v181
      %v444 = vunpack.c.l.b16 %v182
      %v445 = vunpack.c.l.b16 %v183
      %v446 = vunpack.c.l.b16 %v184
      %v447 = vunpack.c.l.b16 %v185
      %v448 = vunpack.c.l.b16 %v186
      %v449 = vunpack.c.l.b16 %v187
      %v450 = vunpack.c.l.b16 %v188
      %v451 = vunpack.c.l.b16 %v189
      %v452 = vunpack.c.l.b16 %v190
      %v453 = vunpack.c.l.b16 %v191
      %v454 = vunpack.c.l.b16 %v192
      %v455 = vunpack.c.l.b16 %v193
      %v456 = vunpack.c.l.b16 %v194
      %v457 = vunpack.c.l.b16 %v195
      %v458 = vunpack.c.l.b16 %v196
      %v459 = vunpack.c.l.b16 %v197
      %v460 = vunpack.c.l.b16 %v198
      %v461 = vunpack.c.l.b16 %v199
      %v462 = vunpack.c.l.b16 %v200
      %v463 = vunpack.c.l.b16 %v201
      %v464 = vunpack.c.l.b16 %v202
      %v465 = vunpack.c.l.b16 %v203
      %v466 = vunpack.c.l.b16 %v204
      %v467 = vunpack.c.l.b16 %v205
      %v468 = vunpack.c.l.b16 %v206
      %v469 = vunpack.c.l.b16 %v207
      %v470 = vunpack.c.l.b16 %v208
      %v471 = vunpack.c.l.b16 %v209
      %v472 = vunpack.c.l.b16 %v210
      %v473 = vunpack.c.l.b16 %v211
      %v474 = vunpack.c.l.b16 %v212
      %v475 = vunpack.c.l.b16 %v213
      %v476 = vunpack.c.l.b16 %v214
      %v477 = vunpack.c.l.b16 %v215
      %v478 = vunpack.c.l.b16 %v216
      %v479 = vunpack.c.l.b16 %v217
      %v480 = vunpack.c.l.b16 %v218
      %v481 = vunpack.c.l.b16 %v219
      %v482 = vunpack.c.l.b16 %v220
      %v483 = vunpack.c.l.b16 %v221
      %v484 = vunpack.c.l.b16 %v222
      %v485 = vunpack.c.l.b16 %v223
      %v486 = vunpack.c.l.b16 %v224
      %v487 = vunpack.c.l.b16 %v225
      %v488 = vunpack.c.l.b16 %v226
      %v489 = vunpack.c.l.b16 %v227
      %v490 = vunpack.c.l.b16 %v228
      %v491 = vunpack.c.l.b16 %v229
      %v492 = vunpack.c.l.b16 %v230
      %v493 = vunpack.c.l.b16 %v231
      %v494 = vunpack.c.l.b16 %v232
      %v495 = vunpack.c.l.b16 %v233
      %v496 = vunpack.c.l.b16 %v234
      %v497 = vunpack.c.l.b16 %v235
      %v498 = vunpack.c.l.b16 %v236
      %v499 = vunpack.c.l.b16 %v237
      %v500 = vunpack.c.l.b16 %v238
      %v501 = vunpack.c.l.b16 %v239
      %v502 = vunpack.c.l.b16 %v240
      %v503 = vunpack.c.l.b16 %v241
      %v504 = vunpack.c.l.b16 %v242
      %v505 = vunpack.c.l.b16 %v243
      %v506 = vunpack.c.l.b16 %v244
      %v507 = vunpack.c.l.b16 %v245
      %v508 = vunpack.c.l.b16 %v246
      %v509 = vunpack.c.l.b16 %v247
      %v510 = vunpack.c.l.b16 %v248
      %v511 = vunpack.c.l.b16 %v249
      %v512 = vunpack.c.l.b16 %v250
      %v513 = vunpack.c.l.b16 %v251
      %v514 = vunpack.c.l.b16 %v252
      %v515 = vunpack.c.l.b16 %v253
      %v516 = vunpack.c.l.b16 %v254
      %v517 = vunpack.c.l.b16 %v255
      %v518 = vunpack.c.l.b16 %v256
      %v519 = vunpack.c.l.b16 %v257
      %v520 = vunpack.c.l.b16 %v258
      %v521 = vunpack.c.l.b16 %v259
      %v522 = vunpack.c.l.b16 %v260
      %v523 = vunpack.c.l.b16 %v261
      %v524 = vunpack.c.l.b16 %v262
      %v525 = vunpack.c.l.b16 %v263
      %v526 = vunpack.c.l.b16 %v264
      %v527 = vunpack.c.l.b16 %v265
      %v528 = vunpack.c.l.b16 %v266
      %v529 = vunpack.c.l.b16 %v267
      %v530 = vunpack.c.l.b16 %v268
      %v531 = vunpack.c.l.b16 %v269
      %v532 = vunpack.c.l.b16 %v270
      %v533 = vunpack.c.l.b16 %v271
      %v534 = vunpack.c.l.b16 %v272
      %v535 = vunpack.c.l.b16 %v273
      %v536 = vunpack.c.l.b16 %v274
      %v537 = vunpack.c.l.b16 %v275
      %v538 = vpack.c.b16 %v411, %v410
      %v539 = vpack.c.b16 %v413, %v412
      %v540 = vpack.c.b16 %v415, %v414
      %v541 = vpack.c.b16 %v417, %v416
      %v542 = vpack.c.b16 %v419, %v418
      %v543 = vpack.c.b16 %v421, %v420
      %v544 = vpack.c.b16 %v423, %v422
      %v545 = vpack.c.b16 %v425, %v424
      %v546 = vpack.c.b16 %v427, %v426
      %v547 = vpack.c.b16 %v429, %v428
      %v548 = vpack.c.b16 %v431, %v430
      %v549 = vpack.c.b16 %v433, %v432
      %v550 = vpack.c.b16 %v435, %v434
      %v551 = vpack.c.b16 %v437, %v436
      %v552 = vpack.c.b16 %v439, %v438
      %v553 = vpack.c.b16 %v441, %v440
      %v554 = vpack.c.b16 %v443, %v442
      %v555 = vpack.c.b16 %v445, %v444
      %v556 = vpack.c.b16 %v447, %v446
      %v557 = vpack.c.b16 %v449, %v448
      %v558 = vpack.c.b16 %v451, %v450
      %v559 = vpack.c.b16 %v453, %v452
      %v560 = vpack.c.b16 %v455, %v454
      %v561 = vpack.c.b16 %v457, %v456
      %v562 = vpack.c.b16 %v459, %v458
      %v563 = vpack.c.b16 %v461, %v460
      %v564 = vpack.c.b16 %v463, %v462
      %v565 = vpack.c.b16 %v465, %v464
      %v566 = vpack.c.b16 %v467, %v466
      %v567 = vpack.c.b16 %v469, %v468
      %v568 = vpack.c.b16 %v471, %v470
      %v569 = vpack.c.b16 %v473, %v472
      %v570 = vpack.c.b16 %v475, %v474
      %v571 = vpack.c.b16 %v477, %v476
      %v572 = vpack.c.b16 %v479, %v478
      %v573 = vpack.c.b16 %v481, %v480
      %v574 = vpack.c.b16 %v483, %v482
      %v575 = vpack.c.b16 %v485, %v484
      %v576 = vpack.c.b16 %v487, %v486
      %v577 = vpack.c.b16 %v489, %v488
      %v578 = vpack.c.b16 %v491, %v490
      %v579 = vpack.c.b16 %v493, %v492
      %v580 = vpack.c.b16 %v495, %v494
      %v581 = vpack.c.b16 %v497, %v496
      %v582 = vpack.c.b16 %v499, %v498
      %v583 = vpack.c.b16 %v501, %v500
      %v584 = vpack.c.b16 %v503, %v502
      %v585 = vpack.c.b16 %v505, %v504
      %v586 = vpack.c.b16 %v507, %v506
      %v587 = vpack.c.b16 %v509, %v508
      %v588 = vpack.c.b16 %v511, %v510
      %v589 = vpack.c.b16 %v513, %v512
      %v590 = vpack.c.b16 %v515, %v514
      %v591 = vpack.c.b16 %v517, %v516
      %v592 = vpack.c.b16 %v519, %v518
      %v593 = vpack.c.b16 %v521, %v520
      %v594 = vpack.c.b16 %v523, %v522
      %v595 = vpack.c.b16 %v525, %v524
      %v596 = vpack.c.b16 %v527, %v526
      %v597 = vpack.c.b16 %v529, %v528
      %v598 = vpack.c.b16 %v531, %v530
      %v599 = vpack.c.b16 %v533, %v532
      %v600 = vpack.c.b16 %v535, %v534
      %v601 = vpack.c.b16 %v537, %v536
      %v608 = vunpack.c.l.b16 %v276
      %v609 = vunpack.c.l.b16 %v277
      %v610 = vunpack.c.l.b16 %v278
      %v611 = vunpack.c.l.b16 %v279
      %v612 = vunpack.c.l.b16 %v280
      %v613 = vunpack.c.l.b16 %v281
      %v614 = vpack.c.b16 %v609, %v608
      %v615 = vpack.c.b16 %v611, %v610
      %v616 = vpack.c.b16 %v613, %v612
      %vm620 = vcmask 392192
      %v622 = vsel %vm620, %v538, 0
      %v625 = vsel %vm620, %v539, 0
      %v628 = vsel %vm620, %v540, 0
      %v631 = vsel %vm620, %v541, 0
      %v634 = vsel %vm620, %v542, 0
      %v637 = vsel %vm620, %v543, 0
      %v640 = vsel %vm620, %v544, 0
      %v643 = vsel %vm620, %v545, 0
      %v646 = vsel %vm620, %v546, 0
      %v649 = vsel %vm620, %v547, 0
      %v652 = vsel %vm620, %v548, 0
      %v655 = vsel %vm620, %v549, 0
      %v658 = vsel %vm620, %v550, 0
      %v661 = vsel %vm620, %v551, 0
      %v664 = vsel %vm620, %v552, 0
      %v667 = vsel %vm620, %v553, 0
      %v670 = vsel %vm620, %v554, 0
      %v673 = vsel %vm620, %v555, 0
      %v676 = vsel %vm620, %v556, 0
      %v679 = vsel %vm620, %v557, 0
      %v682 = vsel %vm620, %v558, 0
      %v685 = vsel %vm620, %v559, 0
      %v688 = vsel %vm620, %v560, 0
      %v691 = vsel %vm620, %v561, 0
      %v694 = vsel %vm620, %v562, 0
      %v697 = vsel %vm620, %v563, 0
      %v700 = vsel %vm620, %v564, 0
      %v703 = vsel %vm620, %v565, 0
      %v706 = vsel %vm620, %v566, 0
      %v709 = vsel %vm620, %v567, 0
      %v712 = vsel %vm620, %v568, 0
      %v715 = vsel %vm620, %v569, 0
      %v718 = vsel %vm620, %v570, 0
      %v721 = vsel %vm620, %v571, 0
      %v724 = vsel %vm620, %v572, 0
      %v727 = vsel %vm620, %v573, 0
      %v730 = vsel %vm620, %v574, 0
      %v733 = vsel %vm620, %v575, 0
      %v736 = vsel %vm620, %v576, 0
      %v739 = vsel %vm620, %v577, 0
      %v742 = vsel %vm620, %v578, 0
      %v745 = vsel %vm620, %v579, 0
      %v748 = vsel %vm620, %v580, 0
      %v751 = vsel %vm620, %v581, 0
      %v754 = vsel %vm620, %v582, 0
      %v757 = vsel %vm620, %v583, 0
      %v760 = vsel %vm620, %v584, 0
      %v763 = vsel %vm620, %v585, 0
      %v766 = vsel %vm620, %v586, 0
      %v769 = vsel %vm620, %v587, 0
      %v772 = vsel %vm620, %v588, 0
      %v775 = vsel %vm620, %v589, 0
      %v778 = vsel %vm620, %v590, 0
      %v781 = vsel %vm620, %v591, 0
      %v784 = vsel %vm620, %v592, 0
      %v787 = vsel %vm620, %v593, 0
      %v790 = vsel %vm620, %v594, 0
      %v793 = vsel %vm620, %v595, 0
      %v796 = vsel %vm620, %v596, 0
      %v799 = vsel %vm620, %v597, 0
      %v802 = vsel %vm620, %v598, 0
      %v805 = vsel %vm620, %v599, 0
      %v808 = vsel %vm620, %v600, 0
      %v811 = vsel %vm620, %v601, 0
      %813 = vmatprep.subr.bf16.mxu0 0
      %814 = vmatpush1.bf16.msra.mxu0 %v614
      %815 = vmatprep.subr.bf16.mxu0 0
      %816 = vmatpush1.bf16.msra.mxu0 %v615
      %817 = vmatprep.subr.bf16.mxu0 0
      %818 = vmatpush1.bf16.msra.mxu0 %v616
      %819 = vmatprep.subr.bf16.mxu0 0
      %820 = vmatpush1.bf16.msra.mxu0 0
      %821 = vmatprep.subr.bf16.mxu0 0
      %822 = vmatpush1.bf16.msra.mxu0 0
      %823 = vmatprep.subr.bf16.mxu0 0
      %824 = vmatpush1.bf16.msra.mxu0 0
      %825 = vmatprep.subr.bf16.mxu0 0
      %826 = vmatpush1.bf16.msra.mxu0 0
      %827 = vmatprep.subr.bf16.mxu0 0
      %828 = vmatpush1.bf16.msra.mxu0 0
      %829 = vmatprep.subr.bf16.mxu0 0
      %830 = vmatpush1.bf16.msra.mxu0 0
      %831 = vmatprep.subr.bf16.mxu0 0
      %832 = vmatpush1.bf16.msra.mxu0 0
      %833 = vmatprep.subr.bf16.mxu0 0
      %834 = vmatpush1.bf16.msra.mxu0 0
      %835 = vmatprep.subr.bf16.mxu0 0
      %836 = vmatpush1.bf16.msra.mxu0 0
      %837 = vmatprep.subr.bf16.mxu0 0
      %838 = vmatpush1.bf16.msra.mxu0 0
      %839 = vmatprep.subr.bf16.mxu0 0
      %840 = vmatpush1.bf16.msra.mxu0 0
      %841 = vmatprep.subr.bf16.mxu0 0
      %842 = vmatpush1.bf16.msra.mxu0 0
      %843 = vmatprep.subr.bf16.mxu0 0
      %844 = vmatpush1.bf16.msra.mxu0 0
      %845 = vmatprep.mubr.bf16.mxu0 0
      %846 = vmatmul.mubr.bf16.gmra.mrb[0].mxu0 %v622
      %v847 = vpop.f32.mrb[0].mxu0
      %v848 = vadd.f32 0.0, %v847
      %v849 = vpop.f32.mrb[0].mxu0
      %v850 = vpop.f32.mrb[0].mxu0
      %v851 = vadd.f32 0.0, %v850
      %v852 = vpop.f32.mrb[0].mxu0
      %853 = vmatprep.mubr.bf16.mxu0 0
      %854 = vmatmul.mubr.bf16.gmra.mrb[0].mxu0 %v625
      %v855 = vpop.f32.mrb[0].mxu0
      %v856 = vadd.f32 0.0, %v855
      %v857 = vpop.f32.mrb[0].mxu0
      %v858 = vpop.f32.mrb[0].mxu0
      %v859 = vadd.f32 0.0, %v858
      %v860 = vpop.f32.mrb[0].mxu0
      %861 = vmatprep.mubr.bf16.mxu0 0
      %862 = vmatmul.mubr.bf16.gmra.mrb[0].mxu0 %v628
      %v863 = vpop.f32.mrb[0].mxu0
      %v864 = vadd.f32 0.0, %v863
      %v865 = vpop.f32.mrb[0].mxu0
      %v866 = vpop.f32.mrb[0].mxu0
      %v867 = vadd.f32 0.0, %v866
      %v868 = vpop.f32.mrb[0].mxu0
      %869 = vmatprep.mubr.bf16.mxu0 0
      %870 = vmatmul.mubr.bf16.gmra.mrb[0].mxu0 %v631
      %v871 = vpop.f32.mrb[0].mxu0
      %v872 = vadd.f32 0.0, %v871
      %v873 = vpop.f32.mrb[0].mxu0
      %v874 = vpop.f32.mrb[0].mxu0
      %v875 = vadd.f32 0.0, %v874
      %v876 = vpop.f32.mrb[0].mxu0
      %877 = vmatprep.mubr.bf16.mxu0 0
      %878 = vmatmul.mubr.bf16.gmra.mrb[0].mxu0 %v634
      %v879 = vpop.f32.mrb[0].mxu0
      %v880 = vadd.f32 0.0, %v879
      %v881 = vpop.f32.mrb[0].mxu0
      %v882 = vpop.f32.mrb[0].mxu0
      %v883 = vadd.f32 0.0, %v882
      %v884 = vpop.f32.mrb[0].mxu0
      %885 = vmatprep.mubr.bf16.mxu0 0
      %886 = vmatmul.mubr.bf16.gmra.mrb[0].mxu0 %v637
      %v887 = vpop.f32.mrb[0].mxu0
      %v888 = vadd.f32 0.0, %v887
      %v889 = vpop.f32.mrb[0].mxu0
      %v890 = vpop.f32.mrb[0].mxu0
      %v891 = vadd.f32 0.0, %v890
      %v892 = vpop.f32.mrb[0].mxu0
      %893 = vmatprep.mubr.bf16.mxu0 0
      %894 = vmatmul.mubr.bf16.gmra.mrb[0].mxu0 %v640
      %v895 = vpop.f32.mrb[0].mxu0
      %v896 = vadd.f32 0.0, %v895
      %v897 = vpop.f32.mrb[0].mxu0
      %v898 = vpop.f32.mrb[0].mxu0
      %v899 = vadd.f32 0.0, %v898
      %v900 = vpop.f32.mrb[0].mxu0
      %901 = vmatprep.mubr.bf16.mxu0 0
      %902 = vmatmul.mubr.bf16.gmra.mrb[0].mxu0 %v643
      %v903 = vpop.f32.mrb[0].mxu0
      %v904 = vadd.f32 0.0, %v903
      %v905 = vpop.f32.mrb[0].mxu0
      %v906 = vpop.f32.mrb[0].mxu0
      %v907 = vadd.f32 0.0, %v906
      %v908 = vpop.f32.mrb[0].mxu0
      %909 = vmatprep.mubr.bf16.mxu0 0
      %910 = vmatmul.mubr.bf16.gmra.mrb[0].mxu0 %v646
      %v911 = vpop.f32.mrb[0].mxu0
      %v912 = vadd.f32 0.0, %v911
      %v913 = vpop.f32.mrb[0].mxu0
      %v914 = vpop.f32.mrb[0].mxu0
      %v915 = vadd.f32 0.0, %v914
      %v916 = vpop.f32.mrb[0].mxu0
      %917 = vmatprep.mubr.bf16.mxu0 0
      %918 = vmatmul.mubr.bf16.gmra.mrb[0].mxu0 %v649
      %v919 = vpop.f32.mrb[0].mxu0
      %v920 = vadd.f32 0.0, %v919
      %v921 = vpop.f32.mrb[0].mxu0
      %v922 = vpop.f32.mrb[0].mxu0
      %v923 = vadd.f32 0.0, %v922
      %v924 = vpop.f32.mrb[0].mxu0
      %925 = vmatprep.mubr.bf16.mxu0 0
      %926 = vmatmul.mubr.bf16.gmra.mrb[0].mxu0 %v652
      %v927 = vpop.f32.mrb[0].mxu0
      %v928 = vadd.f32 0.0, %v927
      %v929 = vpop.f32.mrb[0].mxu0
      %v930 = vpop.f32.mrb[0].mxu0
      %v931 = vadd.f32 0.0, %v930
      %v932 = vpop.f32.mrb[0].mxu0
      %933 = vmatprep.mubr.bf16.mxu0 0
      %934 = vmatmul.mubr.bf16.gmra.mrb[0].mxu0 %v655
      %v935 = vpop.f32.mrb[0].mxu0
      %v936 = vadd.f32 0.0, %v935
      %v937 = vpop.f32.mrb[0].mxu0
      %v938 = vpop.f32.mrb[0].mxu0
      %v939 = vadd.f32 0.0, %v938
      %v940 = vpop.f32.mrb[0].mxu0
      %941 = vmatprep.mubr.bf16.mxu0 0
      %942 = vmatmul.mubr.bf16.gmra.mrb[0].mxu0 %v658
      %v943 = vpop.f32.mrb[0].mxu0
      %v944 = vadd.f32 0.0, %v943
      %v945 = vpop.f32.mrb[0].mxu0
      %v946 = vpop.f32.mrb[0].mxu0
      %v947 = vadd.f32 0.0, %v946
      %v948 = vpop.f32.mrb[0].mxu0
      %949 = vmatprep.mubr.bf16.mxu0 0
      %950 = vmatmul.mubr.bf16.gmra.mrb[0].mxu0 %v661
      %v951 = vpop.f32.mrb[0].mxu0
      %v952 = vadd.f32 0.0, %v951
      %v953 = vpop.f32.mrb[0].mxu0
      %v954 = vpop.f32.mrb[0].mxu0
      %v955 = vadd.f32 0.0, %v954
      %v956 = vpop.f32.mrb[0].mxu0
      %957 = vmatprep.mubr.bf16.mxu0 0
      %958 = vmatmul.mubr.bf16.gmra.mrb[0].mxu0 %v664
      %v959 = vpop.f32.mrb[0].mxu0
      %v960 = vadd.f32 0.0, %v959
      %v961 = vpop.f32.mrb[0].mxu0
      %v962 = vpop.f32.mrb[0].mxu0
      %v963 = vadd.f32 0.0, %v962
      %v964 = vpop.f32.mrb[0].mxu0
      %965 = vmatprep.mubr.bf16.mxu0 0
      %966 = vmatmul.mubr.bf16.gmra.mrb[0].mxu0 %v667
      %v967 = vpop.f32.mrb[0].mxu0
      %v968 = vadd.f32 0.0, %v967
      %v969 = vpop.f32.mrb[0].mxu0
      %v970 = vpop.f32.mrb[0].mxu0
      %v971 = vadd.f32 0.0, %v970
      %v972 = vpop.f32.mrb[0].mxu0
      %973 = vmatprep.mubr.bf16.mxu0 0
      %974 = vmatmul.mubr.bf16.gmra.mrb[0].mxu0 %v670
      %v975 = vpop.f32.mrb[0].mxu0
      %v976 = vadd.f32 0.0, %v975
      %v977 = vpop.f32.mrb[0].mxu0
      %v978 = vpop.f32.mrb[0].mxu0
      %v979 = vadd.f32 0.0, %v978
      %v980 = vpop.f32.mrb[0].mxu0
      %981 = vmatprep.mubr.bf16.mxu0 0
      %982 = vmatmul.mubr.bf16.gmra.mrb[0].mxu0 %v673
      %v983 = vpop.f32.mrb[0].mxu0
      %v984 = vadd.f32 0.0, %v983
      %v985 = vpop.f32.mrb[0].mxu0
      %v986 = vpop.f32.mrb[0].mxu0
      %v987 = vadd.f32 0.0, %v986
      %v988 = vpop.f32.mrb[0].mxu0
      %989 = vmatprep.mubr.bf16.mxu0 0
      %990 = vmatmul.mubr.bf16.gmra.mrb[0].mxu0 %v676
      %v991 = vpop.f32.mrb[0].mxu0
      %v992 = vadd.f32 0.0, %v991
      %v993 = vpop.f32.mrb[0].mxu0
      %v994 = vpop.f32.mrb[0].mxu0
      %v995 = vadd.f32 0.0, %v994
      %v996 = vpop.f32.mrb[0].mxu0
      %997 = vmatprep.mubr.bf16.mxu0 0
      %998 = vmatmul.mubr.bf16.gmra.mrb[0].mxu0 %v679
      %v999 = vpop.f32.mrb[0].mxu0
      %v1000 = vadd.f32 0.0, %v999
      %v1001 = vpop.f32.mrb[0].mxu0
      %v1002 = vpop.f32.mrb[0].mxu0
      %v1003 = vadd.f32 0.0, %v1002
      %v1004 = vpop.f32.mrb[0].mxu0
      %1005 = vmatprep.mubr.bf16.mxu0 0
      %1006 = vmatmul.mubr.bf16.gmra.mrb[0].mxu0 %v682
      %v1007 = vpop.f32.mrb[0].mxu0
      %v1008 = vadd.f32 0.0, %v1007
      %v1009 = vpop.f32.mrb[0].mxu0
      %v1010 = vpop.f32.mrb[0].mxu0
      %v1011 = vadd.f32 0.0, %v1010
      %v1012 = vpop.f32.mrb[0].mxu0
      %1013 = vmatprep.mubr.bf16.mxu0 0
      %1014 = vmatmul.mubr.bf16.gmra.mrb[0].mxu0 %v685
      %v1015 = vpop.f32.mrb[0].mxu0
      %v1016 = vadd.f32 0.0, %v1015
      %v1017 = vpop.f32.mrb[0].mxu0
      %v1018 = vpop.f32.mrb[0].mxu0
      %v1019 = vadd.f32 0.0, %v1018
      %v1020 = vpop.f32.mrb[0].mxu0
      %1021 = vmatprep.mubr.bf16.mxu0 0
      %1022 = vmatmul.mubr.bf16.gmra.mrb[0].mxu0 %v688
      %v1023 = vpop.f32.mrb[0].mxu0
      %v1024 = vadd.f32 0.0, %v1023
      %v1025 = vpop.f32.mrb[0].mxu0
      %v1026 = vpop.f32.mrb[0].mxu0
      %v1027 = vadd.f32 0.0, %v1026
      %v1028 = vpop.f32.mrb[0].mxu0
      %1029 = vmatprep.mubr.bf16.mxu0 0
      %1030 = vmatmul.mubr.bf16.gmra.mrb[0].mxu0 %v691
      %v1031 = vpop.f32.mrb[0].mxu0
      %v1032 = vadd.f32 0.0, %v1031
      %v1033 = vpop.f32.mrb[0].mxu0
      %v1034 = vpop.f32.mrb[0].mxu0
      %v1035 = vadd.f32 0.0, %v1034
      %v1036 = vpop.f32.mrb[0].mxu0
      %1037 = vmatprep.mubr.bf16.mxu0 0
      %1038 = vmatmul.mubr.bf16.gmra.mrb[0].mxu0 %v694
      %v1039 = vpop.f32.mrb[0].mxu0
      %v1040 = vadd.f32 0.0, %v1039
      %v1041 = vpop.f32.mrb[0].mxu0
      %v1042 = vpop.f32.mrb[0].mxu0
      %v1043 = vadd.f32 0.0, %v1042
      %v1044 = vpop.f32.mrb[0].mxu0
      %1045 = vmatprep.mubr.bf16.mxu0 0
      %1046 = vmatmul.mubr.bf16.gmra.mrb[0].mxu0 %v697
      %v1047 = vpop.f32.mrb[0].mxu0
      %v1048 = vadd.f32 0.0, %v1047
      %v1049 = vpop.f32.mrb[0].mxu0
      %v1050 = vpop.f32.mrb[0].mxu0
      %v1051 = vadd.f32 0.0, %v1050
      %v1052 = vpop.f32.mrb[0].mxu0
      %1053 = vmatprep.mubr.bf16.mxu0 0
      %1054 = vmatmul.mubr.bf16.gmra.mrb[0].mxu0 %v700
      %v1055 = vpop.f32.mrb[0].mxu0
      %v1056 = vadd.f32 0.0, %v1055
      %v1057 = vpop.f32.mrb[0].mxu0
      %v1058 = vpop.f32.mrb[0].mxu0
      %v1059 = vadd.f32 0.0, %v1058
      %v1060 = vpop.f32.mrb[0].mxu0
      %1061 = vmatprep.mubr.bf16.mxu0 0
      %1062 = vmatmul.mubr.bf16.gmra.mrb[0].mxu0 %v703
      %v1063 = vpop.f32.mrb[0].mxu0
      %v1064 = vadd.f32 0.0, %v1063
      %v1065 = vpop.f32.mrb[0].mxu0
      %v1066 = vpop.f32.mrb[0].mxu0
      %v1067 = vadd.f32 0.0, %v1066
      %v1068 = vpop.f32.mrb[0].mxu0
      %1069 = vmatprep.mubr.bf16.mxu0 0
      %1070 = vmatmul.mubr.bf16.gmra.mrb[0].mxu0 %v706
      %v1071 = vpop.f32.mrb[0].mxu0
      %v1072 = vadd.f32 0.0, %v1071
      %v1073 = vpop.f32.mrb[0].mxu0
      %v1074 = vpop.f32.mrb[0].mxu0
      %v1075 = vadd.f32 0.0, %v1074
      %v1076 = vpop.f32.mrb[0].mxu0
      %1077 = vmatprep.mubr.bf16.mxu0 0
      %1078 = vmatmul.mubr.bf16.gmra.mrb[0].mxu0 %v709
      %v1079 = vpop.f32.mrb[0].mxu0
      %v1080 = vadd.f32 0.0, %v1079
      %v1081 = vpop.f32.mrb[0].mxu0
      %v1082 = vpop.f32.mrb[0].mxu0
      %v1083 = vadd.f32 0.0, %v1082
      %v1084 = vpop.f32.mrb[0].mxu0
      %1085 = vmatprep.mubr.bf16.mxu0 0
      %1086 = vmatmul.mubr.bf16.gmra.mrb[0].mxu0 %v712
      %v1087 = vpop.f32.mrb[0].mxu0
      %v1088 = vadd.f32 0.0, %v1087
      %v1089 = vpop.f32.mrb[0].mxu0
      %v1090 = vpop.f32.mrb[0].mxu0
      %v1091 = vadd.f32 0.0, %v1090
      %v1092 = vpop.f32.mrb[0].mxu0
      %1093 = vmatprep.mubr.bf16.mxu0 0
      %1094 = vmatmul.mubr.bf16.gmra.mrb[0].mxu0 %v715
      %v1095 = vpop.f32.mrb[0].mxu0
      %v1096 = vadd.f32 0.0, %v1095
      %v1097 = vpop.f32.mrb[0].mxu0
      %v1098 = vpop.f32.mrb[0].mxu0
      %v1099 = vadd.f32 0.0, %v1098
      %v1100 = vpop.f32.mrb[0].mxu0
      %1101 = vmatprep.mubr.bf16.mxu0 0
      %1102 = vmatmul.mubr.bf16.gmra.mrb[0].mxu0 %v718
      %v1103 = vpop.f32.mrb[0].mxu0
      %v1104 = vadd.f32 0.0, %v1103
      %v1105 = vpop.f32.mrb[0].mxu0
      %v1106 = vpop.f32.mrb[0].mxu0
      %v1107 = vadd.f32 0.0, %v1106
      %v1108 = vpop.f32.mrb[0].mxu0
      %1109 = vmatprep.mubr.bf16.mxu0 0
      %1110 = vmatmul.mubr.bf16.gmra.mrb[0].mxu0 %v721
      %v1111 = vpop.f32.mrb[0].mxu0
      %v1112 = vadd.f32 0.0, %v1111
      %v1113 = vpop.f32.mrb[0].mxu0
      %v1114 = vpop.f32.mrb[0].mxu0
      %v1115 = vadd.f32 0.0, %v1114
      %v1116 = vpop.f32.mrb[0].mxu0
      %1117 = vmatprep.mubr.bf16.mxu0 0
      %1118 = vmatmul.mubr.bf16.gmra.mrb[0].mxu0 %v724
      %v1119 = vpop.f32.mrb[0].mxu0
      %v1120 = vadd.f32 0.0, %v1119
      %v1121 = vpop.f32.mrb[0].mxu0
      %v1122 = vpop.f32.mrb[0].mxu0
      %v1123 = vadd.f32 0.0, %v1122
      %v1124 = vpop.f32.mrb[0].mxu0
      %1125 = vmatprep.mubr.bf16.mxu0 0
      %1126 = vmatmul.mubr.bf16.gmra.mrb[0].mxu0 %v727
      %v1127 = vpop.f32.mrb[0].mxu0
      %v1128 = vadd.f32 0.0, %v1127
      %v1129 = vpop.f32.mrb[0].mxu0
      %v1130 = vpop.f32.mrb[0].mxu0
      %v1131 = vadd.f32 0.0, %v1130
      %v1132 = vpop.f32.mrb[0].mxu0
      %1133 = vmatprep.mubr.bf16.mxu0 0
      %1134 = vmatmul.mubr.bf16.gmra.mrb[0].mxu0 %v730
      %v1135 = vpop.f32.mrb[0].mxu0
      %v1136 = vadd.f32 0.0, %v1135
      %v1137 = vpop.f32.mrb[0].mxu0
      %v1138 = vpop.f32.mrb[0].mxu0
      %v1139 = vadd.f32 0.0, %v1138
      %v1140 = vpop.f32.mrb[0].mxu0
      %1141 = vmatprep.mubr.bf16.mxu0 0
      %1142 = vmatmul.mubr.bf16.gmra.mrb[0].mxu0 %v733
      %v1143 = vpop.f32.mrb[0].mxu0
      %v1144 = vadd.f32 0.0, %v1143
      %v1145 = vpop.f32.mrb[0].mxu0
      %v1146 = vpop.f32.mrb[0].mxu0
      %v1147 = vadd.f32 0.0, %v1146
      %v1148 = vpop.f32.mrb[0].mxu0
      %1149 = vmatprep.mubr.bf16.mxu0 0
      %1150 = vmatmul.mubr.bf16.gmra.mrb[0].mxu0 %v736
      %v1151 = vpop.f32.mrb[0].mxu0
      %v1152 = vadd.f32 0.0, %v1151
      %v1153 = vpop.f32.mrb[0].mxu0
      %v1154 = vpop.f32.mrb[0].mxu0
      %v1155 = vadd.f32 0.0, %v1154
      %v1156 = vpop.f32.mrb[0].mxu0
      %1157 = vmatprep.mubr.bf16.mxu0 0
      %1158 = vmatmul.mubr.bf16.gmra.mrb[0].mxu0 %v739
      %v1159 = vpop.f32.mrb[0].mxu0
      %v1160 = vadd.f32 0.0, %v1159
      %v1161 = vpop.f32.mrb[0].mxu0
      %v1162 = vpop.f32.mrb[0].mxu0
      %v1163 = vadd.f32 0.0, %v1162
      %v1164 = vpop.f32.mrb[0].mxu0
      %1165 = vmatprep.mubr.bf16.mxu0 0
      %1166 = vmatmul.mubr.bf16.gmra.mrb[0].mxu0 %v742
      %v1167 = vpop.f32.mrb[0].mxu0
      %v1168 = vadd.f32 0.0, %v1167
      %v1169 = vpop.f32.mrb[0].mxu0
      %v1170 = vpop.f32.mrb[0].mxu0
      %v1171 = vadd.f32 0.0, %v1170
      %v1172 = vpop.f32.mrb[0].mxu0
      %1173 = vmatprep.mubr.bf16.mxu0 0
      %1174 = vmatmul.mubr.bf16.gmra.mrb[0].mxu0 %v745
      %v1175 = vpop.f32.mrb[0].mxu0
      %v1176 = vadd.f32 0.0, %v1175
      %v1177 = vpop.f32.mrb[0].mxu0
      %v1178 = vpop.f32.mrb[0].mxu0
      %v1179 = vadd.f32 0.0, %v1178
      %v1180 = vpop.f32.mrb[0].mxu0
      %1181 = vmatprep.mubr.bf16.mxu0 0
      %1182 = vmatmul.mubr.bf16.gmra.mrb[0].mxu0 %v748
      %v1183 = vpop.f32.mrb[0].mxu0
      %v1184 = vadd.f32 0.0, %v1183
      %v1185 = vpop.f32.mrb[0].mxu0
      %v1186 = vpop.f32.mrb[0].mxu0
      %v1187 = vadd.f32 0.0, %v1186
      %v1188 = vpop.f32.mrb[0].mxu0
      %1189 = vmatprep.mubr.bf16.mxu0 0
      %1190 = vmatmul.mubr.bf16.gmra.mrb[0].mxu0 %v751
      %v1191 = vpop.f32.mrb[0].mxu0
      %v1192 = vadd.f32 0.0, %v1191
      %v1193 = vpop.f32.mrb[0].mxu0
      %v1194 = vpop.f32.mrb[0].mxu0
      %v1195 = vadd.f32 0.0, %v1194
      %v1196 = vpop.f32.mrb[0].mxu0
      %1197 = vmatprep.mubr.bf16.mxu0 0
      %1198 = vmatmul.mubr.bf16.gmra.mrb[0].mxu0 %v754
      %v1199 = vpop.f32.mrb[0].mxu0
      %v1200 = vadd.f32 0.0, %v1199
      %v1201 = vpop.f32.mrb[0].mxu0
      %v1202 = vpop.f32.mrb[0].mxu0
      %v1203 = vadd.f32 0.0, %v1202
      %v1204 = vpop.f32.mrb[0].mxu0
      %1205 = vmatprep.mubr.bf16.mxu0 0
      %1206 = vmatmul.mubr.bf16.gmra.mrb[0].mxu0 %v757
      %v1207 = vpop.f32.mrb[0].mxu0
      %v1208 = vadd.f32 0.0, %v1207
      %v1209 = vpop.f32.mrb[0].mxu0
      %v1210 = vpop.f32.mrb[0].mxu0
      %v1211 = vadd.f32 0.0, %v1210
      %v1212 = vpop.f32.mrb[0].mxu0
      %1213 = vmatprep.mubr.bf16.mxu0 0
      %1214 = vmatmul.mubr.bf16.gmra.mrb[0].mxu0 %v760
      %v1215 = vpop.f32.mrb[0].mxu0
      %v1216 = vadd.f32 0.0, %v1215
      %v1217 = vpop.f32.mrb[0].mxu0
      %v1218 = vpop.f32.mrb[0].mxu0
      %v1219 = vadd.f32 0.0, %v1218
      %v1220 = vpop.f32.mrb[0].mxu0
      %1221 = vmatprep.mubr.bf16.mxu0 0
      %1222 = vmatmul.mubr.bf16.gmra.mrb[0].mxu0 %v763
      %v1223 = vpop.f32.mrb[0].mxu0
      %v1224 = vadd.f32 0.0, %v1223
      %v1225 = vpop.f32.mrb[0].mxu0
      %v1226 = vpop.f32.mrb[0].mxu0
      %v1227 = vadd.f32 0.0, %v1226
      %v1228 = vpop.f32.mrb[0].mxu0
      %1229 = vmatprep.mubr.bf16.mxu0 0
      %1230 = vmatmul.mubr.bf16.gmra.mrb[0].mxu0 %v766
      %v1231 = vpop.f32.mrb[0].mxu0
      %v1232 = vadd.f32 0.0, %v1231
      %v1233 = vpop.f32.mrb[0].mxu0
      %v1234 = vpop.f32.mrb[0].mxu0
      %v1235 = vadd.f32 0.0, %v1234
      %v1236 = vpop.f32.mrb[0].mxu0
      %1237 = vmatprep.mubr.bf16.mxu0 0
      %1238 = vmatmul.mubr.bf16.gmra.mrb[0].mxu0 %v769
      %v1239 = vpop.f32.mrb[0].mxu0
      %v1240 = vadd.f32 0.0, %v1239
      %v1241 = vpop.f32.mrb[0].mxu0
      %v1242 = vpop.f32.mrb[0].mxu0
      %v1243 = vadd.f32 0.0, %v1242
      %v1244 = vpop.f32.mrb[0].mxu0
      %1245 = vmatprep.mubr.bf16.mxu0 0
      %1246 = vmatmul.mubr.bf16.gmra.mrb[0].mxu0 %v772
      %v1247 = vpop.f32.mrb[0].mxu0
      %v1248 = vadd.f32 0.0, %v1247
      %v1249 = vpop.f32.mrb[0].mxu0
      %v1250 = vpop.f32.mrb[0].mxu0
      %v1251 = vadd.f32 0.0, %v1250
      %v1252 = vpop.f32.mrb[0].mxu0
      %1253 = vmatprep.mubr.bf16.mxu0 0
      %1254 = vmatmul.mubr.bf16.gmra.mrb[0].mxu0 %v775
      %v1255 = vpop.f32.mrb[0].mxu0
      %v1256 = vadd.f32 0.0, %v1255
      %v1257 = vpop.f32.mrb[0].mxu0
      %v1258 = vpop.f32.mrb[0].mxu0
      %v1259 = vadd.f32 0.0, %v1258
      %v1260 = vpop.f32.mrb[0].mxu0
      %1261 = vmatprep.mubr.bf16.mxu0 0
      %1262 = vmatmul.mubr.bf16.gmra.mrb[0].mxu0 %v778
      %v1263 = vpop.f32.mrb[0].mxu0
      %v1264 = vadd.f32 0.0, %v1263
      %v1265 = vpop.f32.mrb[0].mxu0
      %v1266 = vpop.f32.mrb[0].mxu0
      %v1267 = vadd.f32 0.0, %v1266
      %v1268 = vpop.f32.mrb[0].mxu0
      %1269 = vmatprep.mubr.bf16.mxu0 0
      %1270 = vmatmul.mubr.bf16.gmra.mrb[0].mxu0 %v781
      %v1271 = vpop.f32.mrb[0].mxu0
      %v1272 = vadd.f32 0.0, %v1271
      %v1273 = vpop.f32.mrb[0].mxu0
      %v1274 = vpop.f32.mrb[0].mxu0
      %v1275 = vadd.f32 0.0, %v1274
      %v1276 = vpop.f32.mrb[0].mxu0
      %1277 = vmatprep.mubr.bf16.mxu0 0
      %1278 = vmatmul.mubr.bf16.gmra.mrb[0].mxu0 %v784
      %v1279 = vpop.f32.mrb[0].mxu0
      %v1280 = vadd.f32 0.0, %v1279
      %v1281 = vpop.f32.mrb[0].mxu0
      %v1282 = vpop.f32.mrb[0].mxu0
      %v1283 = vadd.f32 0.0, %v1282
      %v1284 = vpop.f32.mrb[0].mxu0
      %1285 = vmatprep.mubr.bf16.mxu0 0
      %1286 = vmatmul.mubr.bf16.gmra.mrb[0].mxu0 %v787
      %v1287 = vpop.f32.mrb[0].mxu0
      %v1288 = vadd.f32 0.0, %v1287
      %v1289 = vpop.f32.mrb[0].mxu0
      %v1290 = vpop.f32.mrb[0].mxu0
      %v1291 = vadd.f32 0.0, %v1290
      %v1292 = vpop.f32.mrb[0].mxu0
      %1293 = vmatprep.mubr.bf16.mxu0 0
      %1294 = vmatmul.mubr.bf16.gmra.mrb[0].mxu0 %v790
      %v1295 = vpop.f32.mrb[0].mxu0
      %v1296 = vadd.f32 0.0, %v1295
      %v1297 = vpop.f32.mrb[0].mxu0
      %v1298 = vpop.f32.mrb[0].mxu0
      %v1299 = vadd.f32 0.0, %v1298
      %v1300 = vpop.f32.mrb[0].mxu0
      %1301 = vmatprep.mubr.bf16.mxu0 0
      %1302 = vmatmul.mubr.bf16.gmra.mrb[0].mxu0 %v793
      %v1303 = vpop.f32.mrb[0].mxu0
      %v1304 = vadd.f32 0.0, %v1303
      %v1305 = vpop.f32.mrb[0].mxu0
      %v1306 = vpop.f32.mrb[0].mxu0
      %v1307 = vadd.f32 0.0, %v1306
      %v1308 = vpop.f32.mrb[0].mxu0
      %1309 = vmatprep.mubr.bf16.mxu0 0
      %1310 = vmatmul.mubr.bf16.gmra.mrb[0].mxu0 %v796
      %v1311 = vpop.f32.mrb[0].mxu0
      %v1312 = vadd.f32 0.0, %v1311
      %v1313 = vpop.f32.mrb[0].mxu0
      %v1314 = vpop.f32.mrb[0].mxu0
      %v1315 = vadd.f32 0.0, %v1314
      %v1316 = vpop.f32.mrb[0].mxu0
      %1317 = vmatprep.mubr.bf16.mxu0 0
      %1318 = vmatmul.mubr.bf16.gmra.mrb[0].mxu0 %v799
      %v1319 = vpop.f32.mrb[0].mxu0
      %v1320 = vadd.f32 0.0, %v1319
      %v1321 = vpop.f32.mrb[0].mxu0
      %v1322 = vpop.f32.mrb[0].mxu0
      %v1323 = vadd.f32 0.0, %v1322
      %v1324 = vpop.f32.mrb[0].mxu0
      %1325 = vmatprep.mubr.bf16.mxu0 0
      %1326 = vmatmul.mubr.bf16.gmra.mrb[0].mxu0 %v802
      %v1327 = vpop.f32.mrb[0].mxu0
      %v1328 = vadd.f32 0.0, %v1327
      %v1329 = vpop.f32.mrb[0].mxu0
      %v1330 = vpop.f32.mrb[0].mxu0
      %v1331 = vadd.f32 0.0, %v1330
      %v1332 = vpop.f32.mrb[0].mxu0
      %1333 = vmatprep.mubr.bf16.mxu0 0
      %1334 = vmatmul.mubr.bf16.gmra.mrb[0].mxu0 %v805
      %v1335 = vpop.f32.mrb[0].mxu0
      %v1336 = vadd.f32 0.0, %v1335
      %v1337 = vpop.f32.mrb[0].mxu0
      %v1338 = vpop.f32.mrb[0].mxu0
      %v1339 = vadd.f32 0.0, %v1338
      %v1340 = vpop.f32.mrb[0].mxu0
      %1341 = vmatprep.mubr.bf16.mxu0 0
      %1342 = vmatmul.mubr.bf16.gmra.mrb[0].mxu0 %v808
      %v1343 = vpop.f32.mrb[0].mxu0
      %v1344 = vadd.f32 0.0, %v1343
      %v1345 = vpop.f32.mrb[0].mxu0
      %v1346 = vpop.f32.mrb[0].mxu0
      %v1347 = vadd.f32 0.0, %v1346
      %v1348 = vpop.f32.mrb[0].mxu0
      %1349 = vmatprep.mubr.bf16.mxu0 0
      %1350 = vmatmul.mubr.bf16.gmra.mrb[0].mxu0 %v811
      %v1351 = vpop.f32.mrb[0].mxu0
      %v1352 = vadd.f32 0.0, %v1351
      %v1353 = vpop.f32.mrb[0].mxu0
      %v1354 = vpop.f32.mrb[0].mxu0
      %v1355 = vadd.f32 0.0, %v1354
      %v1356 = vpop.f32.mrb[0].mxu0
      %1357 = vdwg.mxu0
      %v1358 = vmul.f32 %v848, 0.2
      %v1359 = vmul.f32 %v851, 0.2
      %v1360 = vmul.f32 %v856, 0.2
      %v1361 = vmul.f32 %v859, 0.2
      %v1362 = vmul.f32 %v864, 0.2
      %v1363 = vmul.f32 %v867, 0.2
      %v1364 = vmul.f32 %v872, 0.2
      %v1365 = vmul.f32 %v875, 0.2
      %v1366 = vmul.f32 %v880, 0.2
      %v1367 = vmul.f32 %v883, 0.2
      %v1368 = vmul.f32 %v888, 0.2
      %v1369 = vmul.f32 %v891, 0.2
      %v1370 = vmul.f32 %v896, 0.2
      %v1371 = vmul.f32 %v899, 0.2
      %v1372 = vmul.f32 %v904, 0.2
      %v1373 = vmul.f32 %v907, 0.2
      %v1374 = vmul.f32 %v912, 0.2
      %v1375 = vmul.f32 %v915, 0.2
      %v1376 = vmul.f32 %v920, 0.2
      %v1377 = vmul.f32 %v923, 0.2
      %v1378 = vmul.f32 %v928, 0.2
      %v1379 = vmul.f32 %v931, 0.2
      %v1380 = vmul.f32 %v936, 0.2
      %v1381 = vmul.f32 %v939, 0.2
      %v1382 = vmul.f32 %v944, 0.2
      %v1383 = vmul.f32 %v947, 0.2
      %v1384 = vmul.f32 %v952, 0.2
      %v1385 = vmul.f32 %v955, 0.2
      %v1386 = vmul.f32 %v960, 0.2
      %v1387 = vmul.f32 %v963, 0.2
      %v1388 = vmul.f32 %v968, 0.2
      %v1389 = vmul.f32 %v971, 0.2
      %v1390 = vmul.f32 %v976, 0.2
      %v1391 = vmul.f32 %v979, 0.2
      %v1392 = vmul.f32 %v984, 0.2
      %v1393 = vmul.f32 %v987, 0.2
      %v1394 = vmul.f32 %v992, 0.2
      %v1395 = vmul.f32 %v995, 0.2
      %v1396 = vmul.f32 %v1000, 0.2
      %v1397 = vmul.f32 %v1003, 0.2
      %v1398 = vmul.f32 %v1008, 0.2
      %v1399 = vmul.f32 %v1011, 0.2
      %v1400 = vmul.f32 %v1016, 0.2
      %v1401 = vmul.f32 %v1019, 0.2
      %v1402 = vmul.f32 %v1024, 0.2
      %v1403 = vmul.f32 %v1027, 0.2
      %v1404 = vmul.f32 %v1032, 0.2
      %v1405 = vmul.f32 %v1035, 0.2
      %v1406 = vmul.f32 %v1040, 0.2
      %v1407 = vmul.f32 %v1043, 0.2
      %v1408 = vmul.f32 %v1048, 0.2
      %v1409 = vmul.f32 %v1051, 0.2
      %v1410 = vmul.f32 %v1056, 0.2
      %v1411 = vmul.f32 %v1059, 0.2
      %v1412 = vmul.f32 %v1064, 0.2
      %v1413 = vmul.f32 %v1067, 0.2
      %v1414 = vmul.f32 %v1072, 0.2
      %v1415 = vmul.f32 %v1075, 0.2
      %v1416 = vmul.f32 %v1080, 0.2
      %v1417 = vmul.f32 %v1083, 0.2
      %v1418 = vmul.f32 %v1088, 0.2
      %v1419 = vmul.f32 %v1091, 0.2
      %v1420 = vmul.f32 %v1096, 0.2
      %v1421 = vmul.f32 %v1099, 0.2
      %v1422 = vmul.f32 %v1104, 0.2
      %v1423 = vmul.f32 %v1107, 0.2
      %v1424 = vmul.f32 %v1112, 0.2
      %v1425 = vmul.f32 %v1115, 0.2
      %v1426 = vmul.f32 %v1120, 0.2
      %v1427 = vmul.f32 %v1123, 0.2
      %v1428 = vmul.f32 %v1128, 0.2
      %v1429 = vmul.f32 %v1131, 0.2
      %v1430 = vmul.f32 %v1136, 0.2
      %v1431 = vmul.f32 %v1139, 0.2
      %v1432 = vmul.f32 %v1144, 0.2
      %v1433 = vmul.f32 %v1147, 0.2
      %v1434 = vmul.f32 %v1152, 0.2
      %v1435 = vmul.f32 %v1155, 0.2
      %v1436 = vmul.f32 %v1160, 0.2
      %v1437 = vmul.f32 %v1163, 0.2
      %v1438 = vmul.f32 %v1168, 0.2
      %v1439 = vmul.f32 %v1171, 0.2
      %v1440 = vmul.f32 %v1176, 0.2
      %v1441 = vmul.f32 %v1179, 0.2
      %v1442 = vmul.f32 %v1184, 0.2
      %v1443 = vmul.f32 %v1187, 0.2
      %v1444 = vmul.f32 %v1192, 0.2
      %v1445 = vmul.f32 %v1195, 0.2
      %v1446 = vmul.f32 %v1200, 0.2
      %v1447 = vmul.f32 %v1203, 0.2
      %v1448 = vmul.f32 %v1208, 0.2
      %v1449 = vmul.f32 %v1211, 0.2
      %v1450 = vmul.f32 %v1216, 0.2
      %v1451 = vmul.f32 %v1219, 0.2
      %v1452 = vmul.f32 %v1224, 0.2
      %v1453 = vmul.f32 %v1227, 0.2
      %v1454 = vmul.f32 %v1232, 0.2
      %v1455 = vmul.f32 %v1235, 0.2
      %v1456 = vmul.f32 %v1240, 0.2
      %v1457 = vmul.f32 %v1243, 0.2
      %v1458 = vmul.f32 %v1248, 0.2
      %v1459 = vmul.f32 %v1251, 0.2
      %v1460 = vmul.f32 %v1256, 0.2
      %v1461 = vmul.f32 %v1259, 0.2
      %v1462 = vmul.f32 %v1264, 0.2
      %v1463 = vmul.f32 %v1267, 0.2
      %v1464 = vmul.f32 %v1272, 0.2
      %v1465 = vmul.f32 %v1275, 0.2
      %v1466 = vmul.f32 %v1280, 0.2
      %v1467 = vmul.f32 %v1283, 0.2
      %v1468 = vmul.f32 %v1288, 0.2
      %v1469 = vmul.f32 %v1291, 0.2
      %v1470 = vmul.f32 %v1296, 0.2
      %v1471 = vmul.f32 %v1299, 0.2
      %v1472 = vmul.f32 %v1304, 0.2
      %v1473 = vmul.f32 %v1307, 0.2
      %v1474 = vmul.f32 %v1312, 0.2
      %v1475 = vmul.f32 %v1315, 0.2
      %v1476 = vmul.f32 %v1320, 0.2
      %v1477 = vmul.f32 %v1323, 0.2
      %v1478 = vmul.f32 %v1328, 0.2
      %v1479 = vmul.f32 %v1331, 0.2
      %v1480 = vmul.f32 %v1336, 0.2
      %v1481 = vmul.f32 %v1339, 0.2
      %v1482 = vmul.f32 %v1344, 0.2
      %v1483 = vmul.f32 %v1347, 0.2
      %v1484 = vmul.f32 %v1352, 0.2
      %v1485 = vmul.f32 %v1355, 0.2
      %v1486 = vmax.f32 %v848, %v1358
      %v1487 = vmax.f32 %v851, %v1359
      %v1488 = vmax.f32 %v856, %v1360
      %v1489 = vmax.f32 %v859, %v1361
      %v1490 = vmax.f32 %v864, %v1362
      %v1491 = vmax.f32 %v867, %v1363
      %v1492 = vmax.f32 %v872, %v1364
      %v1493 = vmax.f32 %v875, %v1365
      %v1494 = vmax.f32 %v880, %v1366
      %v1495 = vmax.f32 %v883, %v1367
      %v1496 = vmax.f32 %v888, %v1368
      %v1497 = vmax.f32 %v891, %v1369
      %v1498 = vmax.f32 %v896, %v1370
      %v1499 = vmax.f32 %v899, %v1371
      %v1500 = vmax.f32 %v904, %v1372
      %v1501 = vmax.f32 %v907, %v1373
      %v1502 = vmax.f32 %v912, %v1374
      %v1503 = vmax.f32 %v915, %v1375
      %v1504 = vmax.f32 %v920, %v1376
      %v1505 = vmax.f32 %v923, %v1377
      %v1506 = vmax.f32 %v928, %v1378
      %v1507 = vmax.f32 %v931, %v1379
      %v1508 = vmax.f32 %v936, %v1380
      %v1509 = vmax.f32 %v939, %v1381
      %v1510 = vmax.f32 %v944, %v1382
      %v1511 = vmax.f32 %v947, %v1383
      %v1512 = vmax.f32 %v952, %v1384
      %v1513 = vmax.f32 %v955, %v1385
      %v1514 = vmax.f32 %v960, %v1386
      %v1515 = vmax.f32 %v963, %v1387
      %v1516 = vmax.f32 %v968, %v1388
      %v1517 = vmax.f32 %v971, %v1389
      %v1518 = vmax.f32 %v976, %v1390
      %v1519 = vmax.f32 %v979, %v1391
      %v1520 = vmax.f32 %v984, %v1392
      %v1521 = vmax.f32 %v987, %v1393
      %v1522 = vmax.f32 %v992, %v1394
      %v1523 = vmax.f32 %v995, %v1395
      %v1524 = vmax.f32 %v1000, %v1396
      %v1525 = vmax.f32 %v1003, %v1397
      %v1526 = vmax.f32 %v1008, %v1398
      %v1527 = vmax.f32 %v1011, %v1399
      %v1528 = vmax.f32 %v1016, %v1400
      %v1529 = vmax.f32 %v1019, %v1401
      %v1530 = vmax.f32 %v1024, %v1402
      %v1531 = vmax.f32 %v1027, %v1403
      %v1532 = vmax.f32 %v1032, %v1404
      %v1533 = vmax.f32 %v1035, %v1405
      %v1534 = vmax.f32 %v1040, %v1406
      %v1535 = vmax.f32 %v1043, %v1407
      %v1536 = vmax.f32 %v1048, %v1408
      %v1537 = vmax.f32 %v1051, %v1409
      %v1538 = vmax.f32 %v1056, %v1410
      %v1539 = vmax.f32 %v1059, %v1411
      %v1540 = vmax.f32 %v1064, %v1412
      %v1541 = vmax.f32 %v1067, %v1413
      %v1542 = vmax.f32 %v1072, %v1414
      %v1543 = vmax.f32 %v1075, %v1415
      %v1544 = vmax.f32 %v1080, %v1416
      %v1545 = vmax.f32 %v1083, %v1417
      %v1546 = vmax.f32 %v1088, %v1418
      %v1547 = vmax.f32 %v1091, %v1419
      %v1548 = vmax.f32 %v1096, %v1420
      %v1549 = vmax.f32 %v1099, %v1421
      %v1550 = vmax.f32 %v1104, %v1422
      %v1551 = vmax.f32 %v1107, %v1423
      %v1552 = vmax.f32 %v1112, %v1424
      %v1553 = vmax.f32 %v1115, %v1425
      %v1554 = vmax.f32 %v1120, %v1426
      %v1555 = vmax.f32 %v1123, %v1427
      %v1556 = vmax.f32 %v1128, %v1428
      %v1557 = vmax.f32 %v1131, %v1429
      %v1558 = vmax.f32 %v1136, %v1430
      %v1559 = vmax.f32 %v1139, %v1431
      %v1560 = vmax.f32 %v1144, %v1432
      %v1561 = vmax.f32 %v1147, %v1433
      %v1562 = vmax.f32 %v1152, %v1434
      %v1563 = vmax.f32 %v1155, %v1435
      %v1564 = vmax.f32 %v1160, %v1436
      %v1565 = vmax.f32 %v1163, %v1437
      %v1566 = vmax.f32 %v1168, %v1438
      %v1567 = vmax.f32 %v1171, %v1439
      %v1568 = vmax.f32 %v1176, %v1440
      %v1569 = vmax.f32 %v1179, %v1441
      %v1570 = vmax.f32 %v1184, %v1442
      %v1571 = vmax.f32 %v1187, %v1443
      %v1572 = vmax.f32 %v1192, %v1444
      %v1573 = vmax.f32 %v1195, %v1445
      %v1574 = vmax.f32 %v1200, %v1446
      %v1575 = vmax.f32 %v1203, %v1447
      %v1576 = vmax.f32 %v1208, %v1448
      %v1577 = vmax.f32 %v1211, %v1449
      %v1578 = vmax.f32 %v1216, %v1450
      %v1579 = vmax.f32 %v1219, %v1451
      %v1580 = vmax.f32 %v1224, %v1452
      %v1581 = vmax.f32 %v1227, %v1453
      %v1582 = vmax.f32 %v1232, %v1454
      %v1583 = vmax.f32 %v1235, %v1455
      %v1584 = vmax.f32 %v1240, %v1456
      %v1585 = vmax.f32 %v1243, %v1457
      %v1586 = vmax.f32 %v1248, %v1458
      %v1587 = vmax.f32 %v1251, %v1459
      %v1588 = vmax.f32 %v1256, %v1460
      %v1589 = vmax.f32 %v1259, %v1461
      %v1590 = vmax.f32 %v1264, %v1462
      %v1591 = vmax.f32 %v1267, %v1463
      %v1592 = vmax.f32 %v1272, %v1464
      %v1593 = vmax.f32 %v1275, %v1465
      %v1594 = vmax.f32 %v1280, %v1466
      %v1595 = vmax.f32 %v1283, %v1467
      %v1596 = vmax.f32 %v1288, %v1468
      %v1597 = vmax.f32 %v1291, %v1469
      %v1598 = vmax.f32 %v1296, %v1470
      %v1599 = vmax.f32 %v1299, %v1471
      %v1600 = vmax.f32 %v1304, %v1472
      %v1601 = vmax.f32 %v1307, %v1473
      %v1602 = vmax.f32 %v1312, %v1474
      %v1603 = vmax.f32 %v1315, %v1475
      %v1604 = vmax.f32 %v1320, %v1476
      %v1605 = vmax.f32 %v1323, %v1477
      %v1606 = vmax.f32 %v1328, %v1478
      %v1607 = vmax.f32 %v1331, %v1479
      %v1608 = vmax.f32 %v1336, %v1480
      %v1609 = vmax.f32 %v1339, %v1481
      %v1610 = vmax.f32 %v1344, %v1482
      %v1611 = vmax.f32 %v1347, %v1483
      %v1612 = vmax.f32 %v1352, %v1484
      %v1613 = vmax.f32 %v1355, %v1485
      %v1614 = vpack.c.bf16 %v1487, %v1486
      %v1615 = vpack.c.bf16 %v1489, %v1488
      %v1616 = vpack.c.bf16 %v1491, %v1490
      %v1617 = vpack.c.bf16 %v1493, %v1492
      %v1618 = vpack.c.bf16 %v1495, %v1494
      %v1619 = vpack.c.bf16 %v1497, %v1496
      %v1620 = vpack.c.bf16 %v1499, %v1498
      %v1621 = vpack.c.bf16 %v1501, %v1500
      %v1622 = vpack.c.bf16 %v1503, %v1502
      %v1623 = vpack.c.bf16 %v1505, %v1504
      %v1624 = vpack.c.bf16 %v1507, %v1506
      %v1625 = vpack.c.bf16 %v1509, %v1508
      %v1626 = vpack.c.bf16 %v1511, %v1510
      %v1627 = vpack.c.bf16 %v1513, %v1512
      %v1628 = vpack.c.bf16 %v1515, %v1514
      %v1629 = vpack.c.bf16 %v1517, %v1516
      %v1630 = vpack.c.bf16 %v1519, %v1518
      %v1631 = vpack.c.bf16 %v1521, %v1520
      %v1632 = vpack.c.bf16 %v1523, %v1522
      %v1633 = vpack.c.bf16 %v1525, %v1524
      %v1634 = vpack.c.bf16 %v1527, %v1526
      %v1635 = vpack.c.bf16 %v1529, %v1528
      %v1636 = vpack.c.bf16 %v1531, %v1530
      %v1637 = vpack.c.bf16 %v1533, %v1532
      %v1638 = vpack.c.bf16 %v1535, %v1534
      %v1639 = vpack.c.bf16 %v1537, %v1536
      %v1640 = vpack.c.bf16 %v1539, %v1538
      %v1641 = vpack.c.bf16 %v1541, %v1540
      %v1642 = vpack.c.bf16 %v1543, %v1542
      %v1643 = vpack.c.bf16 %v1545, %v1544
      %v1644 = vpack.c.bf16 %v1547, %v1546
      %v1645 = vpack.c.bf16 %v1549, %v1548
      %v1646 = vpack.c.bf16 %v1551, %v1550
      %v1647 = vpack.c.bf16 %v1553, %v1552
      %v1648 = vpack.c.bf16 %v1555, %v1554
      %v1649 = vpack.c.bf16 %v1557, %v1556
      %v1650 = vpack.c.bf16 %v1559, %v1558
      %v1651 = vpack.c.bf16 %v1561, %v1560
      %v1652 = vpack.c.bf16 %v1563, %v1562
      %v1653 = vpack.c.bf16 %v1565, %v1564
      %v1654 = vpack.c.bf16 %v1567, %v1566
      %v1655 = vpack.c.bf16 %v1569, %v1568
      %v1656 = vpack.c.bf16 %v1571, %v1570
      %v1657 = vpack.c.bf16 %v1573, %v1572
      %v1658 = vpack.c.bf16 %v1575, %v1574
      %v1659 = vpack.c.bf16 %v1577, %v1576
      %v1660 = vpack.c.bf16 %v1579, %v1578
      %v1661 = vpack.c.bf16 %v1581, %v1580
      %v1662 = vpack.c.bf16 %v1583, %v1582
      %v1663 = vpack.c.bf16 %v1585, %v1584
      %v1664 = vpack.c.bf16 %v1587, %v1586
      %v1665 = vpack.c.bf16 %v1589, %v1588
      %v1666 = vpack.c.bf16 %v1591, %v1590
      %v1667 = vpack.c.bf16 %v1593, %v1592
      %v1668 = vpack.c.bf16 %v1595, %v1594
      %v1669 = vpack.c.bf16 %v1597, %v1596
      %v1670 = vpack.c.bf16 %v1599, %v1598
      %v1671 = vpack.c.bf16 %v1601, %v1600
      %v1672 = vpack.c.bf16 %v1603, %v1602
      %v1673 = vpack.c.bf16 %v1605, %v1604
      %v1674 = vpack.c.bf16 %v1607, %v1606
      %v1675 = vpack.c.bf16 %v1609, %v1608
      %v1676 = vpack.c.bf16 %v1611, %v1610
      %v1677 = vpack.c.bf16 %v1613, %v1612
      %v1742 = vunpack.c.l.b16 %v1614
      %v1743 = vunpack.c.h.b16 %v1614
      %v1744 = vunpack.c.l.b16 %v1615
      %v1745 = vunpack.c.h.b16 %v1615
      %v1746 = vunpack.c.l.b16 %v1616
      %v1747 = vunpack.c.h.b16 %v1616
      %v1748 = vunpack.c.l.b16 %v1617
      %v1749 = vunpack.c.h.b16 %v1617
      %v1750 = vunpack.c.l.b16 %v1618
      %v1751 = vunpack.c.h.b16 %v1618
      %v1752 = vunpack.c.l.b16 %v1619
      %v1753 = vunpack.c.h.b16 %v1619
      %v1754 = vunpack.c.l.b16 %v1620
      %v1755 = vunpack.c.h.b16 %v1620
      %v1756 = vunpack.c.l.b16 %v1621
      %v1757 = vunpack.c.h.b16 %v1621
      %v1758 = vunpack.c.l.b16 %v1622
      %v1759 = vunpack.c.h.b16 %v1622
      %v1760 = vunpack.c.l.b16 %v1623
      %v1761 = vunpack.c.h.b16 %v1623
      %v1762 = vunpack.c.l.b16 %v1624
      %v1763 = vunpack.c.h.b16 %v1624
      %v1764 = vunpack.c.l.b16 %v1625
      %v1765 = vunpack.c.h.b16 %v1625
      %v1766 = vunpack.c.l.b16 %v1626
      %v1767 = vunpack.c.h.b16 %v1626
      %v1768 = vunpack.c.l.b16 %v1627
      %v1769 = vunpack.c.h.b16 %v1627
      %v1770 = vunpack.c.l.b16 %v1628
      %v1771 = vunpack.c.h.b16 %v1628
      %v1772 = vunpack.c.l.b16 %v1629
      %v1773 = vunpack.c.h.b16 %v1629
      %v1774 = vunpack.c.l.b16 %v1630
      %v1775 = vunpack.c.h.b16 %v1630
      %v1776 = vunpack.c.l.b16 %v1631
      %v1777 = vunpack.c.h.b16 %v1631
      %v1778 = vunpack.c.l.b16 %v1632
      %v1779 = vunpack.c.h.b16 %v1632
      %v1780 = vunpack.c.l.b16 %v1633
      %v1781 = vunpack.c.h.b16 %v1633
      %v1782 = vunpack.c.l.b16 %v1634
      %v1783 = vunpack.c.h.b16 %v1634
      %v1784 = vunpack.c.l.b16 %v1635
      %v1785 = vunpack.c.h.b16 %v1635
      %v1786 = vunpack.c.l.b16 %v1636
      %v1787 = vunpack.c.h.b16 %v1636
      %v1788 = vunpack.c.l.b16 %v1637
      %v1789 = vunpack.c.h.b16 %v1637
      %v1790 = vunpack.c.l.b16 %v1638
      %v1791 = vunpack.c.h.b16 %v1638
      %v1792 = vunpack.c.l.b16 %v1639
      %v1793 = vunpack.c.h.b16 %v1639
      %v1794 = vunpack.c.l.b16 %v1640
      %v1795 = vunpack.c.h.b16 %v1640
      %v1796 = vunpack.c.l.b16 %v1641
      %v1797 = vunpack.c.h.b16 %v1641
      %v1798 = vunpack.c.l.b16 %v1642
      %v1799 = vunpack.c.h.b16 %v1642
      %v1800 = vunpack.c.l.b16 %v1643
      %v1801 = vunpack.c.h.b16 %v1643
      %v1802 = vunpack.c.l.b16 %v1644
      %v1803 = vunpack.c.h.b16 %v1644
      %v1804 = vunpack.c.l.b16 %v1645
      %v1805 = vunpack.c.h.b16 %v1645
      %v1806 = vunpack.c.l.b16 %v1646
      %v1807 = vunpack.c.h.b16 %v1646
      %v1808 = vunpack.c.l.b16 %v1647
      %v1809 = vunpack.c.h.b16 %v1647
      %v1810 = vunpack.c.l.b16 %v1648
      %v1811 = vunpack.c.h.b16 %v1648
      %v1812 = vunpack.c.l.b16 %v1649
      %v1813 = vunpack.c.h.b16 %v1649
      %v1814 = vunpack.c.l.b16 %v1650
      %v1815 = vunpack.c.h.b16 %v1650
      %v1816 = vunpack.c.l.b16 %v1651
      %v1817 = vunpack.c.h.b16 %v1651
      %v1818 = vunpack.c.l.b16 %v1652
      %v1819 = vunpack.c.h.b16 %v1652
      %v1820 = vunpack.c.l.b16 %v1653
      %v1821 = vunpack.c.h.b16 %v1653
      %v1822 = vunpack.c.l.b16 %v1654
      %v1823 = vunpack.c.h.b16 %v1654
      %v1824 = vunpack.c.l.b16 %v1655
      %v1825 = vunpack.c.h.b16 %v1655
      %v1826 = vunpack.c.l.b16 %v1656
      %v1827 = vunpack.c.h.b16 %v1656
      %v1828 = vunpack.c.l.b16 %v1657
      %v1829 = vunpack.c.h.b16 %v1657
      %v1830 = vunpack.c.l.b16 %v1658
      %v1831 = vunpack.c.h.b16 %v1658
      %v1832 = vunpack.c.l.b16 %v1659
      %v1833 = vunpack.c.h.b16 %v1659
      %v1834 = vunpack.c.l.b16 %v1660
      %v1835 = vunpack.c.h.b16 %v1660
      %v1836 = vunpack.c.l.b16 %v1661
      %v1837 = vunpack.c.h.b16 %v1661
      %v1838 = vunpack.c.l.b16 %v1662
      %v1839 = vunpack.c.h.b16 %v1662
      %v1840 = vunpack.c.l.b16 %v1663
      %v1841 = vunpack.c.h.b16 %v1663
      %v1842 = vunpack.c.l.b16 %v1664
      %v1843 = vunpack.c.h.b16 %v1664
      %v1844 = vunpack.c.l.b16 %v1665
      %v1845 = vunpack.c.h.b16 %v1665
      %v1846 = vunpack.c.l.b16 %v1666
      %v1847 = vunpack.c.h.b16 %v1666
      %v1848 = vunpack.c.l.b16 %v1667
      %v1849 = vunpack.c.h.b16 %v1667
      %v1850 = vunpack.c.l.b16 %v1668
      %v1851 = vunpack.c.h.b16 %v1668
      %v1852 = vunpack.c.l.b16 %v1669
      %v1853 = vunpack.c.h.b16 %v1669
      %v1854 = vunpack.c.l.b16 %v1670
      %v1855 = vunpack.c.h.b16 %v1670
      %v1856 = vunpack.c.l.b16 %v1671
      %v1857 = vunpack.c.h.b16 %v1671
      %v1858 = vunpack.c.l.b16 %v1672
      %v1859 = vunpack.c.h.b16 %v1672
      %v1860 = vunpack.c.l.b16 %v1673
      %v1861 = vunpack.c.h.b16 %v1673
      %v1862 = vunpack.c.l.b16 %v1674
      %v1863 = vunpack.c.h.b16 %v1674
      %v1864 = vunpack.c.l.b16 %v1675
      %v1865 = vunpack.c.h.b16 %v1675
      %v1866 = vunpack.c.l.b16 %v1676
      %v1867 = vunpack.c.h.b16 %v1676
      %v1868 = vunpack.c.l.b16 %v1677
      %v1869 = vunpack.c.h.b16 %v1677
      %v1870 = vpack.c.b16 %v1742, %v1742
      %v1871 = vpack.c.b16 %v1743, %v1743
      %v1872 = vpack.c.b16 %v1744, %v1744
      %v1873 = vpack.c.b16 %v1745, %v1745
      %v1874 = vpack.c.b16 %v1746, %v1746
      %v1875 = vpack.c.b16 %v1747, %v1747
      %v1876 = vpack.c.b16 %v1748, %v1748
      %v1877 = vpack.c.b16 %v1749, %v1749
      %v1878 = vpack.c.b16 %v1750, %v1750
      %v1879 = vpack.c.b16 %v1751, %v1751
      %v1880 = vpack.c.b16 %v1752, %v1752
      %v1881 = vpack.c.b16 %v1753, %v1753
      %v1882 = vpack.c.b16 %v1754, %v1754
      %v1883 = vpack.c.b16 %v1755, %v1755
      %v1884 = vpack.c.b16 %v1756, %v1756
      %v1885 = vpack.c.b16 %v1757, %v1757
      %v1886 = vpack.c.b16 %v1758, %v1758
      %v1887 = vpack.c.b16 %v1759, %v1759
      %v1888 = vpack.c.b16 %v1760, %v1760
      %v1889 = vpack.c.b16 %v1761, %v1761
      %v1890 = vpack.c.b16 %v1762, %v1762
      %v1891 = vpack.c.b16 %v1763, %v1763
      %v1892 = vpack.c.b16 %v1764, %v1764
      %v1893 = vpack.c.b16 %v1765, %v1765
      %v1894 = vpack.c.b16 %v1766, %v1766
      %v1895 = vpack.c.b16 %v1767, %v1767
      %v1896 = vpack.c.b16 %v1768, %v1768
      %v1897 = vpack.c.b16 %v1769, %v1769
      %v1898 = vpack.c.b16 %v1770, %v1770
      %v1899 = vpack.c.b16 %v1771, %v1771
      %v1900 = vpack.c.b16 %v1772, %v1772
      %v1901 = vpack.c.b16 %v1773, %v1773
      %v1902 = vpack.c.b16 %v1774, %v1774
      %v1903 = vpack.c.b16 %v1775, %v1775
      %v1904 = vpack.c.b16 %v1776, %v1776
      %v1905 = vpack.c.b16 %v1777, %v1777
      %v1906 = vpack.c.b16 %v1778, %v1778
      %v1907 = vpack.c.b16 %v1779, %v1779
      %v1908 = vpack.c.b16 %v1780, %v1780
      %v1909 = vpack.c.b16 %v1781, %v1781
      %v1910 = vpack.c.b16 %v1782, %v1782
      %v1911 = vpack.c.b16 %v1783, %v1783
      %v1912 = vpack.c.b16 %v1784, %v1784
      %v1913 = vpack.c.b16 %v1785, %v1785
      %v1914 = vpack.c.b16 %v1786, %v1786
      %v1915 = vpack.c.b16 %v1787, %v1787
      %v1916 = vpack.c.b16 %v1788, %v1788
      %v1917 = vpack.c.b16 %v1789, %v1789
      %v1918 = vpack.c.b16 %v1790, %v1790
      %v1919 = vpack.c.b16 %v1791, %v1791
      %v1920 = vpack.c.b16 %v1792, %v1792
      %v1921 = vpack.c.b16 %v1793, %v1793
      %v1922 = vpack.c.b16 %v1794, %v1794
      %v1923 = vpack.c.b16 %v1795, %v1795
      %v1924 = vpack.c.b16 %v1796, %v1796
      %v1925 = vpack.c.b16 %v1797, %v1797
      %v1926 = vpack.c.b16 %v1798, %v1798
      %v1927 = vpack.c.b16 %v1799, %v1799
      %v1928 = vpack.c.b16 %v1800, %v1800
      %v1929 = vpack.c.b16 %v1801, %v1801
      %v1930 = vpack.c.b16 %v1802, %v1802
      %v1931 = vpack.c.b16 %v1803, %v1803
      %v1932 = vpack.c.b16 %v1804, %v1804
      %v1933 = vpack.c.b16 %v1805, %v1805
      %v1934 = vpack.c.b16 %v1806, %v1806
      %v1935 = vpack.c.b16 %v1807, %v1807
      %v1936 = vpack.c.b16 %v1808, %v1808
      %v1937 = vpack.c.b16 %v1809, %v1809
      %v1938 = vpack.c.b16 %v1810, %v1810
      %v1939 = vpack.c.b16 %v1811, %v1811
      %v1940 = vpack.c.b16 %v1812, %v1812
      %v1941 = vpack.c.b16 %v1813, %v1813
      %v1942 = vpack.c.b16 %v1814, %v1814
      %v1943 = vpack.c.b16 %v1815, %v1815
      %v1944 = vpack.c.b16 %v1816, %v1816
      %v1945 = vpack.c.b16 %v1817, %v1817
      %v1946 = vpack.c.b16 %v1818, %v1818
      %v1947 = vpack.c.b16 %v1819, %v1819
      %v1948 = vpack.c.b16 %v1820, %v1820
      %v1949 = vpack.c.b16 %v1821, %v1821
      %v1950 = vpack.c.b16 %v1822, %v1822
      %v1951 = vpack.c.b16 %v1823, %v1823
      %v1952 = vpack.c.b16 %v1824, %v1824
      %v1953 = vpack.c.b16 %v1825, %v1825
      %v1954 = vpack.c.b16 %v1826, %v1826
      %v1955 = vpack.c.b16 %v1827, %v1827
      %v1956 = vpack.c.b16 %v1828, %v1828
      %v1957 = vpack.c.b16 %v1829, %v1829
      %v1958 = vpack.c.b16 %v1830, %v1830
      %v1959 = vpack.c.b16 %v1831, %v1831
      %v1960 = vpack.c.b16 %v1832, %v1832
      %v1961 = vpack.c.b16 %v1833, %v1833
      %v1962 = vpack.c.b16 %v1834, %v1834
      %v1963 = vpack.c.b16 %v1835, %v1835
      %v1964 = vpack.c.b16 %v1836, %v1836
      %v1965 = vpack.c.b16 %v1837, %v1837
      %v1966 = vpack.c.b16 %v1838, %v1838
      %v1967 = vpack.c.b16 %v1839, %v1839
      %v1968 = vpack.c.b16 %v1840, %v1840
      %v1969 = vpack.c.b16 %v1841, %v1841
      %v1970 = vpack.c.b16 %v1842, %v1842
      %v1971 = vpack.c.b16 %v1843, %v1843
      %v1972 = vpack.c.b16 %v1844, %v1844
      %v1973 = vpack.c.b16 %v1845, %v1845
      %v1974 = vpack.c.b16 %v1846, %v1846
      %v1975 = vpack.c.b16 %v1847, %v1847
      %v1976 = vpack.c.b16 %v1848, %v1848
      %v1977 = vpack.c.b16 %v1849, %v1849
      %v1978 = vpack.c.b16 %v1850, %v1850
      %v1979 = vpack.c.b16 %v1851, %v1851
      %v1980 = vpack.c.b16 %v1852, %v1852
      %v1981 = vpack.c.b16 %v1853, %v1853
      %v1982 = vpack.c.b16 %v1854, %v1854
      %v1983 = vpack.c.b16 %v1855, %v1855
      %v1984 = vpack.c.b16 %v1856, %v1856
      %v1985 = vpack.c.b16 %v1857, %v1857
      %v1986 = vpack.c.b16 %v1858, %v1858
      %v1987 = vpack.c.b16 %v1859, %v1859
      %v1988 = vpack.c.b16 %v1860, %v1860
      %v1989 = vpack.c.b16 %v1861, %v1861
      %v1990 = vpack.c.b16 %v1862, %v1862
      %v1991 = vpack.c.b16 %v1863, %v1863
      %v1992 = vpack.c.b16 %v1864, %v1864
      %v1993 = vpack.c.b16 %v1865, %v1865
      %v1994 = vpack.c.b16 %v1866, %v1866
      %v1995 = vpack.c.b16 %v1867, %v1867
      %v1996 = vpack.c.b16 %v1868, %v1868
      %v1997 = vpack.c.b16 %v1869, %v1869
      %vm2126 = vcmask 60416
      %2127 = vst.msk [vmem:[%s145] sm:$0xf] %vm2126, %v1870
      %2128 = vst.msk [vmem:[%s145 + $0x4] sm:$0xf] %vm2126, %v1871
      %2129 = vst.msk [vmem:[%s145 + $0x8] sm:$0xf] %vm2126, %v1872
      %2130 = vst.msk [vmem:[%s145 + $0xc] sm:$0xf] %vm2126, %v1873
      %2131 = vst.msk [vmem:[%s145 + $0x10] sm:$0xf] %vm2126, %v1874
      %2132 = vst.msk [vmem:[%s145 + $0x14] sm:$0xf] %vm2126, %v1875
      %2133 = vst.msk [vmem:[%s145 + $0x18] sm:$0xf] %vm2126, %v1876
      %2134 = vst.msk [vmem:[%s145 + $0x1c] sm:$0xf] %vm2126, %v1877
      %2135 = vst.msk [vmem:[%s145 + $0x20] sm:$0xf] %vm2126, %v1878
      %2136 = vst.msk [vmem:[%s145 + $0x24] sm:$0xf] %vm2126, %v1879
      %2137 = vst.msk [vmem:[%s145 + $0x28] sm:$0xf] %vm2126, %v1880
      %2138 = vst.msk [vmem:[%s145 + $0x2c] sm:$0xf] %vm2126, %v1881
      %2139 = vst.msk [vmem:[%s145 + $0x30] sm:$0xf] %vm2126, %v1882
      %2140 = vst.msk [vmem:[%s145 + $0x34] sm:$0xf] %vm2126, %v1883
      %2141 = vst.msk [vmem:[%s145 + $0x38] sm:$0xf] %vm2126, %v1884
      %2142 = vst.msk [vmem:[%s145 + $0x3c] sm:$0xf] %vm2126, %v1885
      %2143 = vst.msk [vmem:[%s145 + $0x40] sm:$0xf] %vm2126, %v1886
      %2144 = vst.msk [vmem:[%s145 + $0x44] sm:$0xf] %vm2126, %v1887
      %2145 = vst.msk [vmem:[%s145 + $0x48] sm:$0xf] %vm2126, %v1888
      %2146 = vst.msk [vmem:[%s145 + $0x4c] sm:$0xf] %vm2126, %v1889
      %2147 = vst.msk [vmem:[%s145 + $0x50] sm:$0xf] %vm2126, %v1890
      %2148 = vst.msk [vmem:[%s145 + $0x54] sm:$0xf] %vm2126, %v1891
      %2149 = vst.msk [vmem:[%s145 + $0x58] sm:$0xf] %vm2126, %v1892
      %2150 = vst.msk [vmem:[%s145 + $0x5c] sm:$0xf] %vm2126, %v1893
      %2151 = vst.msk [vmem:[%s145 + $0x60] sm:$0xf] %vm2126, %v1894
      %2152 = vst.msk [vmem:[%s145 + $0x64] sm:$0xf] %vm2126, %v1895
      %2153 = vst.msk [vmem:[%s145 + $0x68] sm:$0xf] %vm2126, %v1896
      %2154 = vst.msk [vmem:[%s145 + $0x6c] sm:$0xf] %vm2126, %v1897
      %2155 = vst.msk [vmem:[%s145 + $0x70] sm:$0xf] %vm2126, %v1898
      %2156 = vst.msk [vmem:[%s145 + $0x74] sm:$0xf] %vm2126, %v1899
      %2157 = vst.msk [vmem:[%s145 + $0x78] sm:$0xf] %vm2126, %v1900
      %2158 = vst.msk [vmem:[%s145 + $0x7c] sm:$0xf] %vm2126, %v1901
      %2159 = vst.msk [vmem:[%s145 + $0x80] sm:$0xf] %vm2126, %v1902
      %2160 = vst.msk [vmem:[%s145 + $0x84] sm:$0xf] %vm2126, %v1903
      %2161 = vst.msk [vmem:[%s145 + $0x88] sm:$0xf] %vm2126, %v1904
      %2162 = vst.msk [vmem:[%s145 + $0x8c] sm:$0xf] %vm2126, %v1905
      %2163 = vst.msk [vmem:[%s145 + $0x90] sm:$0xf] %vm2126, %v1906
      %2164 = vst.msk [vmem:[%s145 + $0x94] sm:$0xf] %vm2126, %v1907
      %2165 = vst.msk [vmem:[%s145 + $0x98] sm:$0xf] %vm2126, %v1908
      %2166 = vst.msk [vmem:[%s145 + $0x9c] sm:$0xf] %vm2126, %v1909
      %2167 = vst.msk [vmem:[%s145 + $0xa0] sm:$0xf] %vm2126, %v1910
      %2168 = vst.msk [vmem:[%s145 + $0xa4] sm:$0xf] %vm2126, %v1911
      %2169 = vst.msk [vmem:[%s145 + $0xa8] sm:$0xf] %vm2126, %v1912
      %2170 = vst.msk [vmem:[%s145 + $0xac] sm:$0xf] %vm2126, %v1913
      %2171 = vst.msk [vmem:[%s145 + $0xb0] sm:$0xf] %vm2126, %v1914
      %2172 = vst.msk [vmem:[%s145 + $0xb4] sm:$0xf] %vm2126, %v1915
      %2173 = vst.msk [vmem:[%s145 + $0xb8] sm:$0xf] %vm2126, %v1916
      %2174 = vst.msk [vmem:[%s145 + $0xbc] sm:$0xf] %vm2126, %v1917
      %2175 = vst.msk [vmem:[%s145 + $0xc0] sm:$0xf] %vm2126, %v1918
      %2176 = vst.msk [vmem:[%s145 + $0xc4] sm:$0xf] %vm2126, %v1919
      %2177 = vst.msk [vmem:[%s145 + $0xc8] sm:$0xf] %vm2126, %v1920
      %2178 = vst.msk [vmem:[%s145 + $0xcc] sm:$0xf] %vm2126, %v1921
      %2179 = vst.msk [vmem:[%s145 + $0xd0] sm:$0xf] %vm2126, %v1922
      %2180 = vst.msk [vmem:[%s145 + $0xd4] sm:$0xf] %vm2126, %v1923
      %2181 = vst.msk [vmem:[%s145 + $0xd8] sm:$0xf] %vm2126, %v1924
      %2182 = vst.msk [vmem:[%s145 + $0xdc] sm:$0xf] %vm2126, %v1925
      %2183 = vst.msk [vmem:[%s145 + $0xe0] sm:$0xf] %vm2126, %v1926
      %2184 = vst.msk [vmem:[%s145 + $0xe4] sm:$0xf] %vm2126, %v1927
      %2185 = vst.msk [vmem:[%s145 + $0xe8] sm:$0xf] %vm2126, %v1928
      %2186 = vst.msk [vmem:[%s145 + $0xec] sm:$0xf] %vm2126, %v1929
      %2187 = vst.msk [vmem:[%s145 + $0xf0] sm:$0xf] %vm2126, %v1930
      %2188 = vst.msk [vmem:[%s145 + $0xf4] sm:$0xf] %vm2126, %v1931
      %2189 = vst.msk [vmem:[%s145 + $0xf8] sm:$0xf] %vm2126, %v1932
      %2190 = vst.msk [vmem:[%s145 + $0xfc] sm:$0xf] %vm2126, %v1933
      %2191 = vst.msk [vmem:[%s145 + $0x100] sm:$0xf] %vm2126, %v1934
      %2192 = vst.msk [vmem:[%s145 + $0x104] sm:$0xf] %vm2126, %v1935
      %2193 = vst.msk [vmem:[%s145 + $0x108] sm:$0xf] %vm2126, %v1936
      %2194 = vst.msk [vmem:[%s145 + $0x10c] sm:$0xf] %vm2126, %v1937
      %2195 = vst.msk [vmem:[%s145 + $0x110] sm:$0xf] %vm2126, %v1938
      %2196 = vst.msk [vmem:[%s145 + $0x114] sm:$0xf] %vm2126, %v1939
      %2197 = vst.msk [vmem:[%s145 + $0x118] sm:$0xf] %vm2126, %v1940
      %2198 = vst.msk [vmem:[%s145 + $0x11c] sm:$0xf] %vm2126, %v1941
      %2199 = vst.msk [vmem:[%s145 + $0x120] sm:$0xf] %vm2126, %v1942
      %2200 = vst.msk [vmem:[%s145 + $0x124] sm:$0xf] %vm2126, %v1943
      %2201 = vst.msk [vmem:[%s145 + $0x128] sm:$0xf] %vm2126, %v1944
      %2202 = vst.msk [vmem:[%s145 + $0x12c] sm:$0xf] %vm2126, %v1945
      %2203 = vst.msk [vmem:[%s145 + $0x130] sm:$0xf] %vm2126, %v1946
      %2204 = vst.msk [vmem:[%s145 + $0x134] sm:$0xf] %vm2126, %v1947
      %2205 = vst.msk [vmem:[%s145 + $0x138] sm:$0xf] %vm2126, %v1948
      %2206 = vst.msk [vmem:[%s145 + $0x13c] sm:$0xf] %vm2126, %v1949
      %2207 = vst.msk [vmem:[%s145 + $0x140] sm:$0xf] %vm2126, %v1950
      %2208 = vst.msk [vmem:[%s145 + $0x144] sm:$0xf] %vm2126, %v1951
      %2209 = vst.msk [vmem:[%s145 + $0x148] sm:$0xf] %vm2126, %v1952
      %2210 = vst.msk [vmem:[%s145 + $0x14c] sm:$0xf] %vm2126, %v1953
      %2211 = vst.msk [vmem:[%s145 + $0x150] sm:$0xf] %vm2126, %v1954
      %2212 = vst.msk [vmem:[%s145 + $0x154] sm:$0xf] %vm2126, %v1955
      %2213 = vst.msk [vmem:[%s145 + $0x158] sm:$0xf] %vm2126, %v1956
      %2214 = vst.msk [vmem:[%s145 + $0x15c] sm:$0xf] %vm2126, %v1957
      %2215 = vst.msk [vmem:[%s145 + $0x160] sm:$0xf] %vm2126, %v1958
      %2216 = vst.msk [vmem:[%s145 + $0x164] sm:$0xf] %vm2126, %v1959
      %2217 = vst.msk [vmem:[%s145 + $0x168] sm:$0xf] %vm2126, %v1960
      %2218 = vst.msk [vmem:[%s145 + $0x16c] sm:$0xf] %vm2126, %v1961
      %2219 = vst.msk [vmem:[%s145 + $0x170] sm:$0xf] %vm2126, %v1962
      %2220 = vst.msk [vmem:[%s145 + $0x174] sm:$0xf] %vm2126, %v1963
      %2221 = vst.msk [vmem:[%s145 + $0x178] sm:$0xf] %vm2126, %v1964
      %2222 = vst.msk [vmem:[%s145 + $0x17c] sm:$0xf] %vm2126, %v1965
      %2223 = vst.msk [vmem:[%s145 + $0x180] sm:$0xf] %vm2126, %v1966
      %2224 = vst.msk [vmem:[%s145 + $0x184] sm:$0xf] %vm2126, %v1967
      %2225 = vst.msk [vmem:[%s145 + $0x188] sm:$0xf] %vm2126, %v1968
      %2226 = vst.msk [vmem:[%s145 + $0x18c] sm:$0xf] %vm2126, %v1969
      %2227 = vst.msk [vmem:[%s145 + $0x190] sm:$0xf] %vm2126, %v1970
      %2228 = vst.msk [vmem:[%s145 + $0x194] sm:$0xf] %vm2126, %v1971
      %2229 = vst.msk [vmem:[%s145 + $0x198] sm:$0xf] %vm2126, %v1972
      %2230 = vst.msk [vmem:[%s145 + $0x19c] sm:$0xf] %vm2126, %v1973
      %2231 = vst.msk [vmem:[%s145 + $0x1a0] sm:$0xf] %vm2126, %v1974
      %2232 = vst.msk [vmem:[%s145 + $0x1a4] sm:$0xf] %vm2126, %v1975
      %2233 = vst.msk [vmem:[%s145 + $0x1a8] sm:$0xf] %vm2126, %v1976
      %2234 = vst.msk [vmem:[%s145 + $0x1ac] sm:$0xf] %vm2126, %v1977
      %2235 = vst.msk [vmem:[%s145 + $0x1b0] sm:$0xf] %vm2126, %v1978
      %2236 = vst.msk [vmem:[%s145 + $0x1b4] sm:$0xf] %vm2126, %v1979
      %2237 = vst.msk [vmem:[%s145 + $0x1b8] sm:$0xf] %vm2126, %v1980
      %2238 = vst.msk [vmem:[%s145 + $0x1bc] sm:$0xf] %vm2126, %v1981
      %2239 = vst.msk [vmem:[%s145 + $0x1c0] sm:$0xf] %vm2126, %v1982
      %2240 = vst.msk [vmem:[%s145 + $0x1c4] sm:$0xf] %vm2126, %v1983
      %2241 = vst.msk [vmem:[%s145 + $0x1c8] sm:$0xf] %vm2126, %v1984
      %2242 = vst.msk [vmem:[%s145 + $0x1cc] sm:$0xf] %vm2126, %v1985
      %2243 = vst.msk [vmem:[%s145 + $0x1d0] sm:$0xf] %vm2126, %v1986
      %2244 = vst.msk [vmem:[%s145 + $0x1d4] sm:$0xf] %vm2126, %v1987
      %2245 = vst.msk [vmem:[%s145 + $0x1d8] sm:$0xf] %vm2126, %v1988
      %2246 = vst.msk [vmem:[%s145 + $0x1dc] sm:$0xf] %vm2126, %v1989
      %2247 = vst.msk [vmem:[%s145 + $0x1e0] sm:$0xf] %vm2126, %v1990
      %2248 = vst.msk [vmem:[%s145 + $0x1e4] sm:$0xf] %vm2126, %v1991
      %2249 = vst.msk [vmem:[%s145 + $0x1e8] sm:$0xf] %vm2126, %v1992
      %2250 = vst.msk [vmem:[%s145 + $0x1ec] sm:$0xf] %vm2126, %v1993
      %2251 = vst.msk [vmem:[%s145 + $0x1f0] sm:$0xf] %vm2126, %v1994
      %2252 = vst.msk [vmem:[%s145 + $0x1f4] sm:$0xf] %vm2126, %v1995
      %2253 = vst.msk [vmem:[%s145 + $0x1f8] sm:$0xf] %vm2126, %v1996
      %2254 = vst.msk [vmem:[%s145 + $0x1fc] sm:$0xf] %vm2126, %v1997
      %s2255 = smul.u32 128, %s13
      %p2256 = scmp.lt.s32.totalorder %s2255, 255
      %s2257 = scalar_select %p2256, %s2255, 255
      %s2258 = smul.addr %s2257, 4
      %s2259 = scalar_lea.vmem %s2, %s2258
      // Predicated region
      $region29: #{encoder_forward.5} parent=27 // pred_check
        %p2260 = pneg %p78
      $region30: #{encoder_forward.5} parent=27 // pred_check_branch
        %2262 = sbr.rel (%p2260) target = $region32
      $region31: #{encoder_forward.5} parent=27 // pred_region
        %s2263 = smul.u32 128, %s13
      $region32: #{encoder_forward.5} parent=27 // pred_fallthru
        _
    $region28: #{encoder_forward.5} parent=5 // pred_fallthru
      _
    %p2264 = scmp.le.s32.totalorder 2, %s8
    // Predicated region
    $region33: #{encoder_forward.5} parent=5 // pred_check
      %p2265 = pneg %p2264
    $region34: #{encoder_forward.5} parent=5 // pred_check_branch
      %2267 = sbr.rel (%p2265) target = $region36
    $region35: #{encoder_forward.5} parent=5 // pred_region
      %s2268 = ssub.s32 %s8, 2
      // Predicated region
      $region37: #{encoder_forward.5} parent=35 // pred_check
        %p2269 = pneg %p84
      $region38: #{encoder_forward.5} parent=35 // pred_check_branch
        %2271 = sbr.rel (%p2269) target = $region40
      $region39: #{encoder_forward.5} parent=35 // pred_region
        %s2272 = smul.u32 128, %s14
        %p2273 = scmp.lt.s32.totalorder %s2272, 255
        %s2274 = scalar_select %p2273, %s2272, 255
        %s2275 = smul.addr %s2274, 4
        %s2276 = scalar_lea.vmem %s2, %s2275
      $region40: #{encoder_forward.5} parent=35 // pred_fallthru
        _
    $region36: #{encoder_forward.5} parent=5 // pred_fallthru
      _
  $region6: #{encoder_forward.5} parent=0 // loop_footer
    %s12 = sadd.s32 1, %s8
  $region7: #{encoder_forward.5} parent=0 // loop_footer_branch
    %7 = sbr.rel target = $region3
  $region8: #{encoder_forward.5} parent=0 // loop_exit
    _

// kernel: encoder_forward.6
$region0: #{encoder_forward.6}
  #allocation0 [shape = 'u32[]', space=smem, size = 0x4, offset = 0x4, fixed_abs, tag = 'smem constant byte address 0x4 - core index']
  #allocation1 [shape = 'u32[144,128]{1,0:T(1,128)}', space=vmem, size = 0x12000, scoped, tag = 'internal scratch']
  %s0 = inlined_call_operand.vmem [shape: bf16[512,128], index: 0, kind: input, shape index: {}]
  %s1 = inlined_call_operand.vmem [shape: bf16[128,16], index: 1, kind: input, shape index: {}]
  %s2 = inlined_call_operand.vmem [shape: bf16[512,16], index: 2, kind: output, shape index: {0}]
  %s3 = inlined_call_operand.vmem [shape: f32[2,2,16], index: 3, kind: output, shape index: {1}]
  %4 = xla_tuple %s2, %s3
  %s5 = sld [smem:[#allocation0]]
  $region49: #{encoder_forward.6} parent=0
    _
  %s7 = ssub.s32 1, %s5
  %s8 = scalar_select 0, %s7, %s5
  loop: start=0, step=1, limit=4
  $region2: #{encoder_forward.6} parent=0 // loop_pre_header
    _
  $region3: #{encoder_forward.6} parent=0 // loop_header
    %s10 = sphi 0, %s14
    %p11 = scmp.ge.s32.totalorder %s10, 4
    %s20 = sphi 0, %s22
    %s23 = sphi 0, %s20
    %s24 = sphi 0, %s23
    %s40 = sphi 0, %s24
    %s44 = sphi 0, %s44
    %s46 = sphi 0, %s44
    %s47 = sphi 0, %s46
    %s61 = sphi 0, %s47
    %s67 = sphi 0, %s69
    %s70 = sphi 0, %s67
    %s71 = sphi 0, %s70
    %s87 = sphi 0, %s71
    %s93 = sphi 0, %s95
    %s96 = sphi 0, %s93
    %s97 = sphi 0, %s96
    %s113 = sphi 0, %s97
  $region4: #{encoder_forward.6} parent=0 // loop_header_branch
    %13 = sbr.rel (%p11) target = $region8
  $region5: #{encoder_forward.6} parent=0 // loop_body
    %s15 = ssub.s32 %s10, 1
    %s16 = ssub.s32 %s10, 2
    %s17 = sadd.s32 %s10, 1
    %s18 = ssub.s32 %s10, %s17
    %p19 = scmp.eq.s32.totalorder %s18, 0
    %s21 = sadd.s32 %s20, 1
    %s22 = scalar_select %p19, %s20, %s21
    %p25 = pneg %p19
    %p26 = scmp.eq.s32.totalorder %s10, 1
    %p27 = por %p25, %p26
    %p28 = scmp.ne.s32.totalorder %s20, %s23
    %p29 = scmp.eq.s32.totalorder %s10, 0
    %p30 = por %p28, %p29
    %p31 = scmp.ne.s32.totalorder %s20, %s23
    %p32 = scmp.eq.s32.totalorder %s15, 1
    %p33 = por %p31, %p32
    %p34 = scmp.ne.s32.totalorder %s23, %s24
    %p35 = scmp.eq.s32.totalorder %s15, 0
    %p36 = por %p34, %p35
    %p37 = scmp.ne.s32.totalorder %s23, %s24
    %p38 = scmp.eq.s32.totalorder %s16, 1
    %p39 = por %p37, %p38
    %p41 = scmp.ne.s32.totalorder %s24, %s40
    %p42 = scmp.eq.s32.totalorder %s16, 0
    %p43 = por %p41, %p42
    %s45 = sadd.s32 %s44, 1
    %p48 = scmp.eq.s32.totalorder %s10, 1
    %p49 = scmp.ne.s32.totalorder %s44, %s46
    %p50 = scmp.eq.s32.totalorder %s10, 0
    %p51 = por %p49, %p50
    %p52 = scmp.ne.s32.totalorder %s44, %s46
    %p53 = scmp.eq.s32.totalorder %s15, 1
    %p54 = por %p52, %p53
    %p55 = scmp.ne.s32.totalorder %s46, %s47
    %p56 = scmp.eq.s32.totalorder %s15, 0
    %p57 = por %p55, %p56
    %p58 = scmp.ne.s32.totalorder %s46, %s47
    %p59 = scmp.eq.s32.totalorder %s16, 1
    %p60 = por %p58, %p59
    %p62 = scmp.ne.s32.totalorder %s47, %s61
    %p63 = scmp.eq.s32.totalorder %s16, 0
    %p64 = por %p62, %p63
    %s65 = ssub.s32 %s10, %s17
    %p66 = scmp.eq.s32.totalorder %s65, 0
    %s68 = sadd.s32 %s67, 1
    %s69 = scalar_select %p66, %s67, %s68
    %p72 = pneg %p66
    %p73 = scmp.eq.s32.totalorder %s10, 1
    %p74 = por %p72, %p73
    %p75 = scmp.ne.s32.totalorder %s67, %s70
    %p76 = scmp.eq.s32.totalorder %s10, 0
    %p77 = por %p75, %p76
    %p78 = scmp.ne.s32.totalorder %s67, %s70
    %p79 = scmp.eq.s32.totalorder %s15, 1
    %p80 = por %p78, %p79
    %p81 = scmp.ne.s32.totalorder %s70, %s71
    %p82 = scmp.eq.s32.totalorder %s15, 0
    %p83 = por %p81, %p82
    %p84 = scmp.ne.s32.totalorder %s70, %s71
    %p85 = scmp.eq.s32.totalorder %s16, 1
    %p86 = por %p84, %p85
    %p88 = scmp.ne.s32.totalorder %s71, %s87
    %p89 = scmp.eq.s32.totalorder %s16, 0
    %p90 = por %p88, %p89
    %s91 = ssub.s32 %s10, %s17
    %p92 = scmp.eq.s32.totalorder %s91, 0
    %s94 = sadd.s32 %s93, 1
    %s95 = scalar_select %p92, %s93, %s94
    %p98 = pneg %p92
    %p99 = scmp.eq.s32.totalorder %s10, 1
    %p100 = por %p98, %p99
    %p101 = scmp.ne.s32.totalorder %s93, %s96
    %p102 = scmp.eq.s32.totalorder %s10, 0
    %p103 = por %p101, %p102
    %p104 = scmp.ne.s32.totalorder %s93, %s96
    %p105 = scmp.eq.s32.totalorder %s15, 1
    %p106 = por %p104, %p105
    %p107 = scmp.ne.s32.totalorder %s96, %s97
    %p108 = scmp.eq.s32.totalorder %s15, 0
    %p109 = por %p107, %p108
    %p110 = scmp.ne.s32.totalorder %s96, %s97
    %p111 = scmp.eq.s32.totalorder %s16, 1
    %p112 = por %p110, %p111
    %p114 = scmp.ne.s32.totalorder %s97, %s113
    %p115 = scmp.eq.s32.totalorder %s16, 0
    %p116 = por %p114, %p115
    %p117 = scmp.le.s32.totalorder 1, %s10
    %p118 = scmp.lt.s32.totalorder %s10, 3
    %p119 = pnand %p117, %p118
    %p120 = pneg %p119
    // Predicated region
    $region9: #{encoder_forward.6} parent=5 // pred_check
      _
    $region10: #{encoder_forward.6} parent=5 // pred_check_branch
      %122 = sbr.rel (%p119) target = $region12
    $region11: #{encoder_forward.6} parent=5 // pred_region
      %s123 = ssub.s32 %s10, 1
      // Predicated region
      $region13: #{encoder_forward.6} parent=11 // pred_check
        %p124 = pneg %p57
      $region14: #{encoder_forward.6} parent=11 // pred_check_branch
        %126 = sbr.rel (%p124) target = $region16
      $region15: #{encoder_forward.6} parent=11 // pred_region
        _
      $region16: #{encoder_forward.6} parent=11 // pred_fallthru
        _
    $region12: #{encoder_forward.6} parent=5 // pred_fallthru
      _
    %p127 = scmp.lt.s32.totalorder %s10, 2
    // Predicated region
    $region17: #{encoder_forward.6} parent=5 // pred_check
      %p128 = pneg %p127
    $region18: #{encoder_forward.6} parent=5 // pred_check_branch
      %130 = sbr.rel (%p128) target = $region20
    $region19: #{encoder_forward.6} parent=5 // pred_region
      // Predicated region
      $region21: #{encoder_forward.6} parent=19 // pred_check
        %p131 = pneg %p30
      $region22: #{encoder_forward.6} parent=19 // pred_check_branch
        %133 = sbr.rel (%p131) target = $region24
      $region23: #{encoder_forward.6} parent=19 // pred_region
        %s134 = smul.u32 32, %s10
        %p135 = scmp.lt.s32.totalorder %s134, 63
        %s136 = scalar_select %p135, %s134, 63
        %s137 = smul.addr %s136, 4
        %s138 = scalar_lea.vmem %s0, %s137
        %s139 = smul.u32 32, %s10
      $region24: #{encoder_forward.6} parent=19 // pred_fallthru
        _
    $region20: #{encoder_forward.6} parent=5 // pred_fallthru
      _
    %p140 = scmp.le.s32.totalorder 1, %s10
    %p141 = scmp.lt.s32.totalorder %s10, 3
    %p142 = pnand %p140, %p141
    %p143 = pneg %p142
    // Predicated region
    $region25: #{encoder_forward.6} parent=5 // pred_check
      _
    $region26: #{encoder_forward.6} parent=5 // pred_check_branch
      %145 = sbr.rel (%p142) target = $region28
    $region27: #{encoder_forward.6} parent=5 // pred_region
      %s146 = ssub.s32 %s10, 1
      %s147 = smul.u32 32, %s15
      %p148 = scmp.lt.s32.totalorder %s147, 63
      %s149 = scalar_select %p148, %s147, 63
      %s150 = smul.addr %s149, 4
      %s151 = scalar_lea.vmem %s0, %s150
      %p152 = pneg %p36
      %p153 = pneg %p33
      %p154 = pneg %p57
      %p155 = pneg %p54
      %p156 = pneg %p83
      %p157 = pneg %p80
      %s158 = smul.u32 32, %s15
      %p159 = scmp.lt.s32.totalorder %s158, 63
      %s160 = scalar_select %p159, %s158, 63
      %s161 = smul.addr %s160, 4
      %s162 = scalar_lea.vmem %s2, %s161
      %p163 = pneg %p109
      %p164 = pneg %p106
      %p165 = scmp.lt.s32.totalorder %s15, 1
      %s166 = scalar_select %p165, %s15, 1
      %s167 = smul.addr %s166, 2
      %s168 = scalar_lea.vmem %s3, %s167
      %s169 = smul.u32 32, %s15
      %p170 = scmp.lt.s32.totalorder %s169, 63
      %s171 = scalar_select %p170, %s169, 63
      %s172 = smul.addr %s171, 4
      %s173 = scalar_lea.vmem %s0, %s172
      %s174 = smul.u32 32, %s15
      %s175 = smul.u32 32, %s15
      %p176 = scmp.lt.s32.totalorder %s175, 63
      %s177 = scalar_select %p176, %s175, 63
      %s178 = smul.addr %s177, 4
      %s179 = scalar_lea.vmem %s2, %s178
      %s180 = smul.u32 32, %s15
      %p181 = scmp.lt.s32.totalorder %s15, 1
      %s182 = scalar_select %p181, %s15, 1
      %s183 = smul.addr %s182, 2
      %s184 = scalar_lea.vmem %s3, %s183
      %v186 = vld [vmem:[%s173] sm:$0xf]
      %v187 = vld [vmem:[%s173 + $0x4] sm:$0xf]
      %v188 = vld [vmem:[%s173 + $0x8] sm:$0xf]
      %v189 = vld [vmem:[%s173 + $0xc] sm:$0xf]
      %v190 = vld [vmem:[%s173 + $0x10] sm:$0xf]
      %v191 = vld [vmem:[%s173 + $0x14] sm:$0xf]
      %v192 = vld [vmem:[%s173 + $0x18] sm:$0xf]
      %v193 = vld [vmem:[%s173 + $0x1c] sm:$0xf]
      %v194 = vld [vmem:[%s173 + $0x20] sm:$0xf]
      %v195 = vld [vmem:[%s173 + $0x24] sm:$0xf]
      %v196 = vld [vmem:[%s173 + $0x28] sm:$0xf]
      %v197 = vld [vmem:[%s173 + $0x2c] sm:$0xf]
      %v198 = vld [vmem:[%s173 + $0x30] sm:$0xf]
      %v199 = vld [vmem:[%s173 + $0x34] sm:$0xf]
      %v200 = vld [vmem:[%s173 + $0x38] sm:$0xf]
      %v201 = vld [vmem:[%s173 + $0x3c] sm:$0xf]
      %v202 = vld [vmem:[%s173 + $0x40] sm:$0xf]
      %v203 = vld [vmem:[%s173 + $0x44] sm:$0xf]
      %v204 = vld [vmem:[%s173 + $0x48] sm:$0xf]
      %v205 = vld [vmem:[%s173 + $0x4c] sm:$0xf]
      %v206 = vld [vmem:[%s173 + $0x50] sm:$0xf]
      %v207 = vld [vmem:[%s173 + $0x54] sm:$0xf]
      %v208 = vld [vmem:[%s173 + $0x58] sm:$0xf]
      %v209 = vld [vmem:[%s173 + $0x5c] sm:$0xf]
      %v210 = vld [vmem:[%s173 + $0x60] sm:$0xf]
      %v211 = vld [vmem:[%s173 + $0x64] sm:$0xf]
      %v212 = vld [vmem:[%s173 + $0x68] sm:$0xf]
      %v213 = vld [vmem:[%s173 + $0x6c] sm:$0xf]
      %v214 = vld [vmem:[%s173 + $0x70] sm:$0xf]
      %v215 = vld [vmem:[%s173 + $0x74] sm:$0xf]
      %v216 = vld [vmem:[%s173 + $0x78] sm:$0xf]
      %v217 = vld [vmem:[%s173 + $0x7c] sm:$0xf]
      %v218 = vld [vmem:[%s1] sm:$0xf]
      %v219 = vld [vmem:[%s1 + $0x4] sm:$0xf]
      %v220 = vld [vmem:[%s1 + $0x8] sm:$0xf]
      %v221 = vld [vmem:[%s1 + $0xc] sm:$0xf]
      %v222 = vld [vmem:[%s1 + $0x10] sm:$0xf]
      %v223 = vld [vmem:[%s1 + $0x14] sm:$0xf]
      %v224 = vld [vmem:[%s1 + $0x18] sm:$0xf]
      %v225 = vld [vmem:[%s1 + $0x1c] sm:$0xf]
      %v226 = vld [vmem:[%s1 + $0x20] sm:$0xf]
      %v227 = vld [vmem:[%s1 + $0x24] sm:$0xf]
      %v228 = vld [vmem:[%s1 + $0x28] sm:$0xf]
      %v229 = vld [vmem:[%s1 + $0x2c] sm:$0xf]
      %v230 = vld [vmem:[%s1 + $0x30] sm:$0xf]
      %v231 = vld [vmem:[%s1 + $0x34] sm:$0xf]
      %v232 = vld [vmem:[%s1 + $0x38] sm:$0xf]
      %v233 = vld [vmem:[%s1 + $0x3c] sm:$0xf]
      %v266 = vunpack.c.l.b16 %v186
      %v267 = vunpack.c.l.b16 %v187
      %v268 = vunpack.c.l.b16 %v188
      %v269 = vunpack.c.l.b16 %v189
      %v270 = vunpack.c.l.b16 %v190
      %v271 = vunpack.c.l.b16 %v191
      %v272 = vunpack.c.l.b16 %v192
      %v273 = vunpack.c.l.b16 %v193
      %v274 = vunpack.c.l.b16 %v194
      %v275 = vunpack.c.l.b16 %v195
      %v276 = vunpack.c.l.b16 %v196
      %v277 = vunpack.c.l.b16 %v197
      %v278 = vunpack.c.l.b16 %v198
      %v279 = vunpack.c.l.b16 %v199
      %v280 = vunpack.c.l.b16 %v200
      %v281 = vunpack.c.l.b16 %v201
      %v282 = vunpack.c.l.b16 %v202
      %v283 = vunpack.c.l.b16 %v203
      %v284 = vunpack.c.l.b16 %v204
      %v285 = vunpack.c.l.b16 %v205
      %v286 = vunpack.c.l.b16 %v206
      %v287 = vunpack.c.l.b16 %v207
      %v288 = vunpack.c.l.b16 %v208
      %v289 = vunpack.c.l.b16 %v209
      %v290 = vunpack.c.l.b16 %v210
      %v291 = vunpack.c.l.b16 %v211
      %v292 = vunpack.c.l.b16 %v212
      %v293 = vunpack.c.l.b16 %v213
      %v294 = vunpack.c.l.b16 %v214
      %v295 = vunpack.c.l.b16 %v215
      %v296 = vunpack.c.l.b16 %v216
      %v297 = vunpack.c.l.b16 %v217
      %v298 = vpack.c.b16 %v267, %v266
      %v299 = vpack.c.b16 %v269, %v268
      %v300 = vpack.c.b16 %v271, %v270
      %v301 = vpack.c.b16 %v273, %v272
      %v302 = vpack.c.b16 %v275, %v274
      %v303 = vpack.c.b16 %v277, %v276
      %v304 = vpack.c.b16 %v279, %v278
      %v305 = vpack.c.b16 %v281, %v280
      %v306 = vpack.c.b16 %v283, %v282
      %v307 = vpack.c.b16 %v285, %v284
      %v308 = vpack.c.b16 %v287, %v286
      %v309 = vpack.c.b16 %v289, %v288
      %v310 = vpack.c.b16 %v291, %v290
      %v311 = vpack.c.b16 %v293, %v292
      %v312 = vpack.c.b16 %v295, %v294
      %v313 = vpack.c.b16 %v297, %v296
      %v346 = vunpack.c.l.b16 %v218
      %v347 = vunpack.c.l.b16 %v219
      %v348 = vunpack.c.l.b16 %v220
      %v349 = vunpack.c.l.b16 %v221
      %v350 = vunpack.c.l.b16 %v222
      %v351 = vunpack.c.l.b16 %v223
      %v352 = vunpack.c.l.b16 %v224
      %v353 = vunpack.c.l.b16 %v225
      %v354 = vunpack.c.l.b16 %v226
      %v355 = vunpack.c.l.b16 %v227
      %v356 = vunpack.c.l.b16 %v228
      %v357 = vunpack.c.l.b16 %v229
      %v358 = vunpack.c.l.b16 %v230
      %v359 = vunpack.c.l.b16 %v231
      %v360 = vunpack.c.l.b16 %v232
      %v361 = vunpack.c.l.b16 %v233
      %v362 = vpack.c.b16 %v347, %v346
      %v363 = vpack.c.b16 %v349, %v348
      %v364 = vpack.c.b16 %v351, %v350
      %v365 = vpack.c.b16 %v353, %v352
      %v366 = vpack.c.b16 %v355, %v354
      %v367 = vpack.c.b16 %v357, %v356
      %v368 = vpack.c.b16 %v359, %v358
      %v369 = vpack.c.b16 %v361, %v360
      %378 = vmatprep.subr.bf16.mxu0 0
      %379 = vmatpush1.bf16.msra.mxu0 %v362
      %380 = vmatprep.subr.bf16.mxu0 0
      %381 = vmatpush1.bf16.msra.mxu0 %v363
      %382 = vmatprep.subr.bf16.mxu0 0
      %383 = vmatpush1.bf16.msra.mxu0 %v364
      %384 = vmatprep.subr.bf16.mxu0 0
      %385 = vmatpush1.bf16.msra.mxu0 %v365
      %386 = vmatprep.subr.bf16.mxu0 0
      %387 = vmatpush1.bf16.msra.mxu0 %v366
      %388 = vmatprep.subr.bf16.mxu0 0
      %389 = vmatpush1.bf16.msra.mxu0 %v367
      %390 = vmatprep.subr.bf16.mxu0 0
      %391 = vmatpush1.bf16.msra.mxu0 %v368
      %392 = vmatprep.subr.bf16.mxu0 0
      %393 = vmatpush1.bf16.msra.mxu0 %v369
      %394 = vmatprep.subr.bf16.mxu0 0
      %395 = vmatpush1.bf16.msra.mxu0 0
      %396 = vmatprep.subr.bf16.mxu0 0
      %397 = vmatpush1.bf16.msra.mxu0 0
      %398 = vmatprep.subr.bf16.mxu0 0
      %399 = vmatpush1.bf16.msra.mxu0 0
      %400 = vmatprep.subr.bf16.mxu0 0
      %401 = vmatpush1.bf16.msra.mxu0 0
      %402 = vmatprep.subr.bf16.mxu0 0
      %403 = vmatpush1.bf16.msra.mxu0 0
      %404 = vmatprep.subr.bf16.mxu0 0
      %405 = vmatpush1.bf16.msra.mxu0 0
      %406 = vmatprep.subr.bf16.mxu0 0
      %407 = vmatpush1.bf16.msra.mxu0 0
      %408 = vmatprep.subr.bf16.mxu0 0
      %409 = vmatpush1.bf16.msra.mxu0 0
      %410 = vmatprep.mubr.bf16.mxu0 0
      %411 = vmatmul.mubr.bf16.gmra.mrb[0].mxu0 %v298
      %v412 = vpop.f32.mrb[0].mxu0
      %v413 = vadd.f32 0.0, %v412
      %v414 = vpop.f32.mrb[0].mxu0
      %v415 = vpop.f32.mrb[0].mxu0
      %v416 = vadd.f32 0.0, %v415
      %v417 = vpop.f32.mrb[0].mxu0
      %418 = vmatprep.mubr.bf16.mxu0 0
      %419 = vmatmul.mubr.bf16.gmra.mrb[0].mxu0 %v299
      %v420 = vpop.f32.mrb[0].mxu0
      %v421 = vadd.f32 0.0, %v420
      %v422 = vpop.f32.mrb[0].mxu0
      %v423 = vpop.f32.mrb[0].mxu0
      %v424 = vadd.f32 0.0, %v423
      %v425 = vpop.f32.mrb[0].mxu0
      %426 = vmatprep.mubr.bf16.mxu0 0
      %427 = vmatmul.mubr.bf16.gmra.mrb[0].mxu0 %v300
      %v428 = vpop.f32.mrb[0].mxu0
      %v429 = vadd.f32 0.0, %v428
      %v430 = vpop.f32.mrb[0].mxu0
      %v431 = vpop.f32.mrb[0].mxu0
      %v432 = vadd.f32 0.0, %v431
      %v433 = vpop.f32.mrb[0].mxu0
      %434 = vmatprep.mubr.bf16.mxu0 0
      %435 = vmatmul.mubr.bf16.gmra.mrb[0].mxu0 %v301
      %v436 = vpop.f32.mrb[0].mxu0
      %v437 = vadd.f32 0.0, %v436
      %v438 = vpop.f32.mrb[0].mxu0
      %v439 = vpop.f32.mrb[0].mxu0
      %v440 = vadd.f32 0.0, %v439
      %v441 = vpop.f32.mrb[0].mxu0
      %442 = vmatprep.mubr.bf16.mxu0 0
      %443 = vmatmul.mubr.bf16.gmra.mrb[0].mxu0 %v302
      %v444 = vpop.f32.mrb[0].mxu0
      %v445 = vadd.f32 0.0, %v444
      %v446 = vpop.f32.mrb[0].mxu0
      %v447 = vpop.f32.mrb[0].mxu0
      %v448 = vadd.f32 0.0, %v447
      %v449 = vpop.f32.mrb[0].mxu0
      %450 = vmatprep.mubr.bf16.mxu0 0
      %451 = vmatmul.mubr.bf16.gmra.mrb[0].mxu0 %v303
      %v452 = vpop.f32.mrb[0].mxu0
      %v453 = vadd.f32 0.0, %v452
      %v454 = vpop.f32.mrb[0].mxu0
      %v455 = vpop.f32.mrb[0].mxu0
      %v456 = vadd.f32 0.0, %v455
      %v457 = vpop.f32.mrb[0].mxu0
      %458 = vmatprep.mubr.bf16.mxu0 0
      %459 = vmatmul.mubr.bf16.gmra.mrb[0].mxu0 %v304
      %v460 = vpop.f32.mrb[0].mxu0
      %v461 = vadd.f32 0.0, %v460
      %v462 = vpop.f32.mrb[0].mxu0
      %v463 = vpop.f32.mrb[0].mxu0
      %v464 = vadd.f32 0.0, %v463
      %v465 = vpop.f32.mrb[0].mxu0
      %466 = vmatprep.mubr.bf16.mxu0 0
      %467 = vmatmul.mubr.bf16.gmra.mrb[0].mxu0 %v305
      %v468 = vpop.f32.mrb[0].mxu0
      %v469 = vadd.f32 0.0, %v468
      %v470 = vpop.f32.mrb[0].mxu0
      %v471 = vpop.f32.mrb[0].mxu0
      %v472 = vadd.f32 0.0, %v471
      %v473 = vpop.f32.mrb[0].mxu0
      %474 = vmatprep.mubr.bf16.mxu0 0
      %475 = vmatmul.mubr.bf16.gmra.mrb[0].mxu0 %v306
      %v476 = vpop.f32.mrb[0].mxu0
      %v477 = vadd.f32 0.0, %v476
      %v478 = vpop.f32.mrb[0].mxu0
      %v479 = vpop.f32.mrb[0].mxu0
      %v480 = vadd.f32 0.0, %v479
      %v481 = vpop.f32.mrb[0].mxu0
      %482 = vmatprep.mubr.bf16.mxu0 0
      %483 = vmatmul.mubr.bf16.gmra.mrb[0].mxu0 %v307
      %v484 = vpop.f32.mrb[0].mxu0
      %v485 = vadd.f32 0.0, %v484
      %v486 = vpop.f32.mrb[0].mxu0
      %v487 = vpop.f32.mrb[0].mxu0
      %v488 = vadd.f32 0.0, %v487
      %v489 = vpop.f32.mrb[0].mxu0
      %490 = vmatprep.mubr.bf16.mxu0 0
      %491 = vmatmul.mubr.bf16.gmra.mrb[0].mxu0 %v308
      %v492 = vpop.f32.mrb[0].mxu0
      %v493 = vadd.f32 0.0, %v492
      %v494 = vpop.f32.mrb[0].mxu0
      %v495 = vpop.f32.mrb[0].mxu0
      %v496 = vadd.f32 0.0, %v495
      %v497 = vpop.f32.mrb[0].mxu0
      %498 = vmatprep.mubr.bf16.mxu0 0
      %499 = vmatmul.mubr.bf16.gmra.mrb[0].mxu0 %v309
      %v500 = vpop.f32.mrb[0].mxu0
      %v501 = vadd.f32 0.0, %v500
      %v502 = vpop.f32.mrb[0].mxu0
      %v503 = vpop.f32.mrb[0].mxu0
      %v504 = vadd.f32 0.0, %v503
      %v505 = vpop.f32.mrb[0].mxu0
      %506 = vmatprep.mubr.bf16.mxu0 0
      %507 = vmatmul.mubr.bf16.gmra.mrb[0].mxu0 %v310
      %v508 = vpop.f32.mrb[0].mxu0
      %v509 = vadd.f32 0.0, %v508
      %v510 = vpop.f32.mrb[0].mxu0
      %v511 = vpop.f32.mrb[0].mxu0
      %v512 = vadd.f32 0.0, %v511
      %v513 = vpop.f32.mrb[0].mxu0
      %514 = vmatprep.mubr.bf16.mxu0 0
      %515 = vmatmul.mubr.bf16.gmra.mrb[0].mxu0 %v311
      %v516 = vpop.f32.mrb[0].mxu0
      %v517 = vadd.f32 0.0, %v516
      %v518 = vpop.f32.mrb[0].mxu0
      %v519 = vpop.f32.mrb[0].mxu0
      %v520 = vadd.f32 0.0, %v519
      %v521 = vpop.f32.mrb[0].mxu0
      %522 = vmatprep.mubr.bf16.mxu0 0
      %523 = vmatmul.mubr.bf16.gmra.mrb[0].mxu0 %v312
      %v524 = vpop.f32.mrb[0].mxu0
      %v525 = vadd.f32 0.0, %v524
      %v526 = vpop.f32.mrb[0].mxu0
      %v527 = vpop.f32.mrb[0].mxu0
      %v528 = vadd.f32 0.0, %v527
      %v529 = vpop.f32.mrb[0].mxu0
      %530 = vmatprep.mubr.bf16.mxu0 0
      %531 = vmatmul.mubr.bf16.gmra.mrb[0].mxu0 %v313
      %v532 = vpop.f32.mrb[0].mxu0
      %v533 = vadd.f32 0.0, %v532
      %v534 = vpop.f32.mrb[0].mxu0
      %v535 = vpop.f32.mrb[0].mxu0
      %v536 = vadd.f32 0.0, %v535
      %v537 = vpop.f32.mrb[0].mxu0
      %538 = vdwg.mxu0
      %v539 = vpack.c.bf16 %v416, %v413
      %v540 = vpack.c.bf16 %v424, %v421
      %v541 = vpack.c.bf16 %v432, %v429
      %v542 = vpack.c.bf16 %v440, %v437
      %v543 = vpack.c.bf16 %v448, %v445
      %v544 = vpack.c.bf16 %v456, %v453
      %v545 = vpack.c.bf16 %v464, %v461
      %v546 = vpack.c.bf16 %v472, %v469
      %v547 = vpack.c.bf16 %v480, %v477
      %v548 = vpack.c.bf16 %v488, %v485
      %v549 = vpack.c.bf16 %v496, %v493
      %v550 = vpack.c.bf16 %v504, %v501
      %v551 = vpack.c.bf16 %v512, %v509
      %v552 = vpack.c.bf16 %v520, %v517
      %v553 = vpack.c.bf16 %v528, %v525
      %v554 = vpack.c.bf16 %v536, %v533
      %v571 = vunpack.c.l.b16 %v539
      %v572 = vunpack.c.h.b16 %v539
      %v573 = vunpack.c.l.b16 %v540
      %v574 = vunpack.c.h.b16 %v540
      %v575 = vunpack.c.l.b16 %v541
      %v576 = vunpack.c.h.b16 %v541
      %v577 = vunpack.c.l.b16 %v542
      %v578 = vunpack.c.h.b16 %v542
      %v579 = vunpack.c.l.b16 %v543
      %v580 = vunpack.c.h.b16 %v543
      %v581 = vunpack.c.l.b16 %v544
      %v582 = vunpack.c.h.b16 %v544
      %v583 = vunpack.c.l.b16 %v545
      %v584 = vunpack.c.h.b16 %v545
      %v585 = vunpack.c.l.b16 %v546
      %v586 = vunpack.c.h.b16 %v546
      %v587 = vunpack.c.l.b16 %v547
      %v588 = vunpack.c.h.b16 %v547
      %v589 = vunpack.c.l.b16 %v548
      %v590 = vunpack.c.h.b16 %v548
      %v591 = vunpack.c.l.b16 %v549
      %v592 = vunpack.c.h.b16 %v549
      %v593 = vunpack.c.l.b16 %v550
      %v594 = vunpack.c.h.b16 %v550
      %v595 = vunpack.c.l.b16 %v551
      %v596 = vunpack.c.h.b16 %v551
      %v597 = vunpack.c.l.b16 %v552
      %v598 = vunpack.c.h.b16 %v552
      %v599 = vunpack.c.l.b16 %v553
      %v600 = vunpack.c.h.b16 %v553
      %v601 = vunpack.c.l.b16 %v554
      %v602 = vunpack.c.h.b16 %v554
      %v603 = vpack.c.b16 %v571, %v571
      %v604 = vpack.c.b16 %v572, %v572
      %v605 = vpack.c.b16 %v573, %v573
      %v606 = vpack.c.b16 %v574, %v574
      %v607 = vpack.c.b16 %v575, %v575
      %v608 = vpack.c.b16 %v576, %v576
      %v609 = vpack.c.b16 %v577, %v577
      %v610 = vpack.c.b16 %v578, %v578
      %v611 = vpack.c.b16 %v579, %v579
      %v612 = vpack.c.b16 %v580, %v580
      %v613 = vpack.c.b16 %v581, %v581
      %v614 = vpack.c.b16 %v582, %v582
      %v615 = vpack.c.b16 %v583, %v583
      %v616 = vpack.c.b16 %v584, %v584
      %v617 = vpack.c.b16 %v585, %v585
      %v618 = vpack.c.b16 %v586, %v586
      %v619 = vpack.c.b16 %v587, %v587
      %v620 = vpack.c.b16 %v588, %v588
      %v621 = vpack.c.b16 %v589, %v589
      %v622 = vpack.c.b16 %v590, %v590
      %v623 = vpack.c.b16 %v591, %v591
      %v624 = vpack.c.b16 %v592, %v592
      %v625 = vpack.c.b16 %v593, %v593
      %v626 = vpack.c.b16 %v594, %v594
      %v627 = vpack.c.b16 %v595, %v595
      %v628 = vpack.c.b16 %v596, %v596
      %v629 = vpack.c.b16 %v597, %v597
      %v630 = vpack.c.b16 %v598, %v598
      %v631 = vpack.c.b16 %v599, %v599
      %v632 = vpack.c.b16 %v600, %v600
      %v633 = vpack.c.b16 %v601, %v601
      %v634 = vpack.c.b16 %v602, %v602
      %vm667 = vcmask 125952
      %668 = vst.msk [vmem:[%s179] sm:$0xf] %vm667, %v603
      %669 = vst.msk [vmem:[%s179 + $0x4] sm:$0xf] %vm667, %v604
      %670 = vst.msk [vmem:[%s179 + $0x8] sm:$0xf] %vm667, %v605
      %671 = vst.msk [vmem:[%s179 + $0xc] sm:$0xf] %vm667, %v606
      %672 = vst.msk [vmem:[%s179 + $0x10] sm:$0xf] %vm667, %v607
      %673 = vst.msk [vmem:[%s179 + $0x14] sm:$0xf] %vm667, %v608
      %674 = vst.msk [vmem:[%s179 + $0x18] sm:$0xf] %vm667, %v609
      %675 = vst.msk [vmem:[%s179 + $0x1c] sm:$0xf] %vm667, %v610
      %676 = vst.msk [vmem:[%s179 + $0x20] sm:$0xf] %vm667, %v611
      %677 = vst.msk [vmem:[%s179 + $0x24] sm:$0xf] %vm667, %v612
      %678 = vst.msk [vmem:[%s179 + $0x28] sm:$0xf] %vm667, %v613
      %679 = vst.msk [vmem:[%s179 + $0x2c] sm:$0xf] %vm667, %v614
      %680 = vst.msk [vmem:[%s179 + $0x30] sm:$0xf] %vm667, %v615
      %681 = vst.msk [vmem:[%s179 + $0x34] sm:$0xf] %vm667, %v616
      %682 = vst.msk [vmem:[%s179 + $0x38] sm:$0xf] %vm667, %v617
      %683 = vst.msk [vmem:[%s179 + $0x3c] sm:$0xf] %vm667, %v618
      %684 = vst.msk [vmem:[%s179 + $0x40] sm:$0xf] %vm667, %v619
      %685 = vst.msk [vmem:[%s179 + $0x44] sm:$0xf] %vm667, %v620
      %686 = vst.msk [vmem:[%s179 + $0x48] sm:$0xf] %vm667, %v621
      %687 = vst.msk [vmem:[%s179 + $0x4c] sm:$0xf] %vm667, %v622
      %688 = vst.msk [vmem:[%s179 + $0x50] sm:$0xf] %vm667, %v623
      %689 = vst.msk [vmem:[%s179 + $0x54] sm:$0xf] %vm667, %v624
      %690 = vst.msk [vmem:[%s179 + $0x58] sm:$0xf] %vm667, %v625
      %691 = vst.msk [vmem:[%s179 + $0x5c] sm:$0xf] %vm667, %v626
      %692 = vst.msk [vmem:[%s179 + $0x60] sm:$0xf] %vm667, %v627
      %693 = vst.msk [vmem:[%s179 + $0x64] sm:$0xf] %vm667, %v628
      %694 = vst.msk [vmem:[%s179 + $0x68] sm:$0xf] %vm667, %v629
      %695 = vst.msk [vmem:[%s179 + $0x6c] sm:$0xf] %vm667, %v630
      %696 = vst.msk [vmem:[%s179 + $0x70] sm:$0xf] %vm667, %v631
      %697 = vst.msk [vmem:[%s179 + $0x74] sm:$0xf] %vm667, %v632
      %698 = vst.msk [vmem:[%s179 + $0x78] sm:$0xf] %vm667, %v633
      %699 = vst.msk [vmem:[%s179 + $0x7c] sm:$0xf] %vm667, %v634
      %vm700 = vcmask 130048
      %v701 = vsel %vm700, %v413, 0.0
      %v702 = vsel %vm700, %v416, 0.0
      %v703 = vadd.f32 %v701, %v702
      %v704 = vsel %vm700, %v421, 0.0
      %v705 = vadd.f32 %v703, %v704
      %v706 = vsel %vm700, %v424, 0.0
      %v707 = vadd.f32 %v705, %v706
      %v708 = vsel %vm700, %v429, 0.0
      %v709 = vadd.f32 %v707, %v708
      %v710 = vsel %vm700, %v432, 0.0
      %v711 = vadd.f32 %v709, %v710
      %v712 = vsel %vm700, %v437, 0.0
      %v713 = vadd.f32 %v711, %v712
      %v714 = vsel %vm700, %v440, 0.0
      %v715 = vadd.f32 %v713, %v714
      %v716 = vsel %vm700, %v445, 0.0
      %v717 = vadd.f32 %v715, %v716
      %v718 = vsel %vm700, %v448, 0.0
      %v719 = vadd.f32 %v717, %v718
      %v720 = vsel %vm700, %v453, 0.0
      %v721 = vadd.f32 %v719, %v720
      %v722 = vsel %vm700, %v456, 0.0
      %v723 = vadd.f32 %v721, %v722
      %v724 = vsel %vm700, %v461, 0.0
      %v725 = vadd.f32 %v723, %v724
      %v726 = vsel %vm700, %v464, 0.0
      %v727 = vadd.f32 %v725, %v726
      %v728 = vsel %vm700, %v469, 0.0
      %v729 = vadd.f32 %v727, %v728
      %v730 = vsel %vm700, %v472, 0.0
      %v731 = vadd.f32 %v729, %v730
      %v732 = vsel %vm700, %v477, 0.0
      %v733 = vadd.f32 %v731, %v732
      %v734 = vsel %vm700, %v480, 0.0
      %v735 = vadd.f32 %v733, %v734
      %v736 = vsel %vm700, %v485, 0.0
      %v737 = vadd.f32 %v735, %v736
      %v738 = vsel %vm700, %v488, 0.0
      %v739 = vadd.f32 %v737, %v738
      %v740 = vsel %vm700, %v493, 0.0
      %v741 = vadd.f32 %v739, %v740
      %v742 = vsel %vm700, %v496, 0.0
      %v743 = vadd.f32 %v741, %v742
      %v744 = vsel %vm700, %v501, 0.0
      %v745 = vadd.f32 %v743, %v744
      %v746 = vsel %vm700, %v504, 0.0
      %v747 = vadd.f32 %v745, %v746
      %v748 = vsel %vm700, %v509, 0.0
      %v749 = vadd.f32 %v747, %v748
      %v750 = vsel %vm700, %v512, 0.0
      %v751 = vadd.f32 %v749, %v750
      %v752 = vsel %vm700, %v517, 0.0
      %v753 = vadd.f32 %v751, %v752
      %v754 = vsel %vm700, %v520, 0.0
      %v755 = vadd.f32 %v753, %v754
      %v756 = vsel %vm700, %v525, 0.0
      %v757 = vadd.f32 %v755, %v756
      %v758 = vsel %vm700, %v528, 0.0
      %v759 = vadd.f32 %v757, %v758
      %v760 = vsel %vm700, %v533, 0.0
      %v761 = vadd.f32 %v759, %v760
      %v762 = vsel %vm700, %v536, 0.0
      %v763 = vadd.f32 %v761, %v762
      %v764 = vrot.slane %v763, 4
      %v765 = vadd.f32 %v763, %v764
      %v766 = vrot.slane %v765, 2
      %v767 = vadd.f32 %v765, %v766
      %v768 = vrot.slane %v767, 1
      %v769 = vadd.f32 %v767, %v768
      %vm770 = vcmask 122880
      %771 = vst.msk [vmem:[%s184] sm:$0x1] %vm770, %v769
      %v772 = vmul.f32 %v413, %v413
      %v773 = vmul.f32 %v416, %v416
      %v774 = vmul.f32 %v421, %v421
      %v775 = vmul.f32 %v424, %v424
      %v776 = vmul.f32 %v429, %v429
      %v777 = vmul.f32 %v432, %v432
      %v778 = vmul.f32 %v437, %v437
      %v779 = vmul.f32 %v440, %v440
      %v780 = vmul.f32 %v445, %v445
      %v781 = vmul.f32 %v448, %v448
      %v782 = vmul.f32 %v453, %v453
      %v783 = vmul.f32 %v456, %v456
      %v784 = vmul.f32 %v461, %v461
      %v785 = vmul.f32 %v464, %v464
      %v786 = vmul.f32 %v469, %v469
      %v787 = vmul.f32 %v472, %v472
      %v788 = vmul.f32 %v477, %v477
      %v789 = vmul.f32 %v480, %v480
      %v790 = vmul.f32 %v485, %v485
      %v791 = vmul.f32 %v488, %v488
      %v792 = vmul.f32 %v493, %v493
      %v793 = vmul.f32 %v496, %v496
      %v794 = vmul.f32 %v501, %v501
      %v795 = vmul.f32 %v504, %v504
      %v796 = vmul.f32 %v509, %v509
      %v797 = vmul.f32 %v512, %v512
      %v798 = vmul.f32 %v517, %v517
      %v799 = vmul.f32 %v520, %v520
      %v800 = vmul.f32 %v525, %v525
      %v801 = vmul.f32 %v528, %v528
      %v802 = vmul.f32 %v533, %v533
      %v803 = vmul.f32 %v536, %v536
      %v804 = vsel %vm700, %v772, 0.0
      %v805 = vsel %vm700, %v773, 0.0
      %v806 = vadd.f32 %v804, %v805
      %v807 = vsel %vm700, %v774, 0.0
      %v808 = vadd.f32 %v806, %v807
      %v809 = vsel %vm700, %v775, 0.0
      %v810 = vadd.f32 %v808, %v809
      %v811 = vsel %vm700, %v776, 0.0
      %v812 = vadd.f32 %v810, %v811
      %v813 = vsel %vm700, %v777, 0.0
      %v814 = vadd.f32 %v812, %v813
      %v815 = vsel %vm700, %v778, 0.0
      %v816 = vadd.f32 %v814, %v815
      %v817 = vsel %vm700, %v779, 0.0
      %v818 = vadd.f32 %v816, %v817
      %v819 = vsel %vm700, %v780, 0.0
      %v820 = vadd.f32 %v818, %v819
      %v821 = vsel %vm700, %v781, 0.0
      %v822 = vadd.f32 %v820, %v821
      %v823 = vsel %vm700, %v782, 0.0
      %v824 = vadd.f32 %v822, %v823
      %v825 = vsel %vm700, %v783, 0.0
      %v826 = vadd.f32 %v824, %v825
      %v827 = vsel %vm700, %v784, 0.0
      %v828 = vadd.f32 %v826, %v827
      %v829 = vsel %vm700, %v785, 0.0
      %v830 = vadd.f32 %v828, %v829
      %v831 = vsel %vm700, %v786, 0.0
      %v832 = vadd.f32 %v830, %v831
      %v833 = vsel %vm700, %v787, 0.0
      %v834 = vadd.f32 %v832, %v833
      %v835 = vsel %vm700, %v788, 0.0
      %v836 = vadd.f32 %v834, %v835
      %v837 = vsel %vm700, %v789, 0.0
      %v838 = vadd.f32 %v836, %v837
      %v839 = vsel %vm700, %v790, 0.0
      %v840 = vadd.f32 %v838, %v839
      %v841 = vsel %vm700, %v791, 0.0
      %v842 = vadd.f32 %v840, %v841
      %v843 = vsel %vm700, %v792, 0.0
      %v844 = vadd.f32 %v842, %v843
      %v845 = vsel %vm700, %v793, 0.0
      %v846 = vadd.f32 %v844, %v845
      %v847 = vsel %vm700, %v794, 0.0
      %v848 = vadd.f32 %v846, %v847
      %v849 = vsel %vm700, %v795, 0.0
      %v850 = vadd.f32 %v848, %v849
      %v851 = vsel %vm700, %v796, 0.0
      %v852 = vadd.f32 %v850, %v851
      %v853 = vsel %vm700, %v797, 0.0
      %v854 = vadd.f32 %v852, %v853
      %v855 = vsel %vm700, %v798, 0.0
      %v856 = vadd.f32 %v854, %v855
      %v857 = vsel %vm700, %v799, 0.0
      %v858 = vadd.f32 %v856, %v857
      %v859 = vsel %vm700, %v800, 0.0
      %v860 = vadd.f32 %v858, %v859
      %v861 = vsel %vm700, %v801, 0.0
      %v862 = vadd.f32 %v860, %v861
      %v863 = vsel %vm700, %v802, 0.0
      %v864 = vadd.f32 %v862, %v863
      %v865 = vsel %vm700, %v803, 0.0
      %v866 = vadd.f32 %v864, %v865
      %v867 = vrot.slane %v866, 4
      %v868 = vadd.f32 %v866, %v867
      %v869 = vrot.slane %v868, 2
      %v870 = vadd.f32 %v868, %v869
      %v871 = vrot.slane %v870, 1
      %v872 = vadd.f32 %v870, %v871
      %873 = vst.msk [vmem:[%s184 + $0x1] sm:$0x1] %vm770, %v872
      %s874 = smul.u32 32, %s15
      %p875 = scmp.lt.s32.totalorder %s874, 63
      %s876 = scalar_select %p875, %s874, 63
      %s877 = smul.addr %s876, 4
      %s878 = scalar_lea.vmem %s2, %s877
      %p879 = scmp.lt.s32.totalorder %s15, 1
      %s880 = scalar_select %p879, %s15, 1
      %s881 = smul.addr %s880, 2
      %s882 = scalar_lea.vmem %s3, %s881
      // Predicated region
      $region29: #{encoder_forward.6} parent=27 // pred_check
        %p883 = pneg %p80
      $region30: #{encoder_forward.6} parent=27 // pred_check_branch
        %885 = sbr.rel (%p883) target = $region32
      $region31: #{encoder_forward.6} parent=27 // pred_region
        %s886 = smul.u32 32, %s15
      $region32: #{encoder_forward.6} parent=27 // pred_fallthru
        _
      // Predicated region
      $region33: #{encoder_forward.6} parent=27 // pred_check
        %p887 = pneg %p106
      $region34: #{encoder_forward.6} parent=27 // pred_check_branch
        %889 = sbr.rel (%p887) target = $region36
      $region35: #{encoder_forward.6} parent=27 // pred_region
        _
      $region36: #{encoder_forward.6} parent=27 // pred_fallthru
        _
    $region28: #{encoder_forward.6} parent=5 // pred_fallthru
      _
    %p890 = scmp.le.s32.totalorder 2, %s10
    // Predicated region
    $region37: #{encoder_forward.6} parent=5 // pred_check
      %p891 = pneg %p890
    $region38: #{encoder_forward.6} parent=5 // pred_check_branch
      %893 = sbr.rel (%p891) target = $region40
    $region39: #{encoder_forward.6} parent=5 // pred_region
      %s894 = ssub.s32 %s10, 2
      // Predicated region
      $region41: #{encoder_forward.6} parent=39 // pred_check
        %p895 = pneg %p86
      $region42: #{encoder_forward.6} parent=39 // pred_check_branch
        %897 = sbr.rel (%p895) target = $region44
      $region43: #{encoder_forward.6} parent=39 // pred_region
        %s898 = smul.u32 32, %s16
        %p899 = scmp.lt.s32.totalorder %s898, 63
        %s900 = scalar_select %p899, %s898, 63
        %s901 = smul.addr %s900, 4
        %s902 = scalar_lea.vmem %s2, %s901
      $region44: #{encoder_forward.6} parent=39 // pred_fallthru
        _
      // Predicated region
      $region45: #{encoder_forward.6} parent=39 // pred_check
        %p903 = pneg %p112
      $region46: #{encoder_forward.6} parent=39 // pred_check_branch
        %905 = sbr.rel (%p903) target = $region48
      $region47: #{encoder_forward.6} parent=39 // pred_region
        %p906 = scmp.lt.s32.totalorder %s16, 1
        %s907 = scalar_select %p906, %s16, 1
        %s908 = smul.addr %s907, 2
        %s909 = scalar_lea.vmem %s3, %s908
      $region48: #{encoder_forward.6} parent=39 // pred_fallthru
        _
    $region40: #{encoder_forward.6} parent=5 // pred_fallthru
      _
  $region6: #{encoder_forward.6} parent=0 // loop_footer
    %s14 = sadd.s32 1, %s10
  $region7: #{encoder_forward.6} parent=0 // loop_footer_branch
    %9 = sbr.rel target = $region3
  $region8: #{encoder_forward.6} parent=0 // loop_exit
    _

// kernel: encoder_forward.7
$region0: #{encoder_forward.7}
  #allocation0 [shape = 'u32[]', space=smem, size = 0x4, offset = 0x4, fixed_abs, tag = 'smem constant byte address 0x4 - core index']
  #allocation1 [shape = 'u32[144,128]{1,0:T(1,128)}', space=vmem, size = 0x12000, scoped, tag = 'internal scratch']
  %s0 = inlined_call_operand.vmem [shape: bf16[128,256], index: 0, kind: input, shape index: {}]
  %s1 = inlined_call_operand.vmem [shape: bf16[256,32], index: 1, kind: input, shape index: {}]
  %s2 = inlined_call_operand.vmem [shape: bf16[128,32], index: 2, kind: output, shape index: {0}]
  %s3 = inlined_call_operand.vmem [shape: f32[2,2,32], index: 3, kind: output, shape index: {1}]
  %4 = xla_tuple %s2, %s3
  %s5 = sld [smem:[#allocation0]]
  $region49: #{encoder_forward.7} parent=0
    _
  %s7 = ssub.s32 1, %s5
  %s8 = scalar_select 0, %s7, %s5
  loop: start=0, step=1, limit=4
  $region2: #{encoder_forward.7} parent=0 // loop_pre_header
    _
  $region3: #{encoder_forward.7} parent=0 // loop_header
    %s10 = sphi 0, %s14
    %p11 = scmp.ge.s32.totalorder %s10, 4
    %s20 = sphi 0, %s22
    %s23 = sphi 0, %s20
    %s24 = sphi 0, %s23
    %s40 = sphi 0, %s24
    %s44 = sphi 0, %s44
    %s46 = sphi 0, %s44
    %s47 = sphi 0, %s46
    %s61 = sphi 0, %s47
    %s67 = sphi 0, %s69
    %s70 = sphi 0, %s67
    %s71 = sphi 0, %s70
    %s87 = sphi 0, %s71
    %s93 = sphi 0, %s95
    %s96 = sphi 0, %s93
    %s97 = sphi 0, %s96
    %s113 = sphi 0, %s97
  $region4: #{encoder_forward.7} parent=0 // loop_header_branch
    %13 = sbr.rel (%p11) target = $region8
  $region5: #{encoder_forward.7} parent=0 // loop_body
    %s15 = ssub.s32 %s10, 1
    %s16 = ssub.s32 %s10, 2
    %s17 = sadd.s32 %s10, 1
    %s18 = ssub.s32 %s10, %s17
    %p19 = scmp.eq.s32.totalorder %s18, 0
    %s21 = sadd.s32 %s20, 1
    %s22 = scalar_select %p19, %s20, %s21
    %p25 = pneg %p19
    %p26 = scmp.eq.s32.totalorder %s10, 1
    %p27 = por %p25, %p26
    %p28 = scmp.ne.s32.totalorder %s20, %s23
    %p29 = scmp.eq.s32.totalorder %s10, 0
    %p30 = por %p28, %p29
    %p31 = scmp.ne.s32.totalorder %s20, %s23
    %p32 = scmp.eq.s32.totalorder %s15, 1
    %p33 = por %p31, %p32
    %p34 = scmp.ne.s32.totalorder %s23, %s24
    %p35 = scmp.eq.s32.totalorder %s15, 0
    %p36 = por %p34, %p35
    %p37 = scmp.ne.s32.totalorder %s23, %s24
    %p38 = scmp.eq.s32.totalorder %s16, 1
    %p39 = por %p37, %p38
    %p41 = scmp.ne.s32.totalorder %s24, %s40
    %p42 = scmp.eq.s32.totalorder %s16, 0
    %p43 = por %p41, %p42
    %s45 = sadd.s32 %s44, 1
    %p48 = scmp.eq.s32.totalorder %s10, 1
    %p49 = scmp.ne.s32.totalorder %s44, %s46
    %p50 = scmp.eq.s32.totalorder %s10, 0
    %p51 = por %p49, %p50
    %p52 = scmp.ne.s32.totalorder %s44, %s46
    %p53 = scmp.eq.s32.totalorder %s15, 1
    %p54 = por %p52, %p53
    %p55 = scmp.ne.s32.totalorder %s46, %s47
    %p56 = scmp.eq.s32.totalorder %s15, 0
    %p57 = por %p55, %p56
    %p58 = scmp.ne.s32.totalorder %s46, %s47
    %p59 = scmp.eq.s32.totalorder %s16, 1
    %p60 = por %p58, %p59
    %p62 = scmp.ne.s32.totalorder %s47, %s61
    %p63 = scmp.eq.s32.totalorder %s16, 0
    %p64 = por %p62, %p63
    %s65 = ssub.s32 %s10, %s17
    %p66 = scmp.eq.s32.totalorder %s65, 0
    %s68 = sadd.s32 %s67, 1
    %s69 = scalar_select %p66, %s67, %s68
    %p72 = pneg %p66
    %p73 = scmp.eq.s32.totalorder %s10, 1
    %p74 = por %p72, %p73
    %p75 = scmp.ne.s32.totalorder %s67, %s70
    %p76 = scmp.eq.s32.totalorder %s10, 0
    %p77 = por %p75, %p76
    %p78 = scmp.ne.s32.totalorder %s67, %s70
    %p79 = scmp.eq.s32.totalorder %s15, 1
    %p80 = por %p78, %p79
    %p81 = scmp.ne.s32.totalorder %s70, %s71
    %p82 = scmp.eq.s32.totalorder %s15, 0
    %p83 = por %p81, %p82
    %p84 = scmp.ne.s32.totalorder %s70, %s71
    %p85 = scmp.eq.s32.totalorder %s16, 1
    %p86 = por %p84, %p85
    %p88 = scmp.ne.s32.totalorder %s71, %s87
    %p89 = scmp.eq.s32.totalorder %s16, 0
    %p90 = por %p88, %p89
    %s91 = ssub.s32 %s10, %s17
    %p92 = scmp.eq.s32.totalorder %s91, 0
    %s94 = sadd.s32 %s93, 1
    %s95 = scalar_select %p92, %s93, %s94
    %p98 = pneg %p92
    %p99 = scmp.eq.s32.totalorder %s10, 1
    %p100 = por %p98, %p99
    %p101 = scmp.ne.s32.totalorder %s93, %s96
    %p102 = scmp.eq.s32.totalorder %s10, 0
    %p103 = por %p101, %p102
    %p104 = scmp.ne.s32.totalorder %s93, %s96
    %p105 = scmp.eq.s32.totalorder %s15, 1
    %p106 = por %p104, %p105
    %p107 = scmp.ne.s32.totalorder %s96, %s97
    %p108 = scmp.eq.s32.totalorder %s15, 0
    %p109 = por %p107, %p108
    %p110 = scmp.ne.s32.totalorder %s96, %s97
    %p111 = scmp.eq.s32.totalorder %s16, 1
    %p112 = por %p110, %p111
    %p114 = scmp.ne.s32.totalorder %s97, %s113
    %p115 = scmp.eq.s32.totalorder %s16, 0
    %p116 = por %p114, %p115
    %p117 = scmp.le.s32.totalorder 1, %s10
    %p118 = scmp.lt.s32.totalorder %s10, 3
    %p119 = pnand %p117, %p118
    %p120 = pneg %p119
    // Predicated region
    $region9: #{encoder_forward.7} parent=5 // pred_check
      _
    $region10: #{encoder_forward.7} parent=5 // pred_check_branch
      %122 = sbr.rel (%p119) target = $region12
    $region11: #{encoder_forward.7} parent=5 // pred_region
      %s123 = ssub.s32 %s10, 1
      // Predicated region
      $region13: #{encoder_forward.7} parent=11 // pred_check
        %p124 = pneg %p57
      $region14: #{encoder_forward.7} parent=11 // pred_check_branch
        %126 = sbr.rel (%p124) target = $region16
      $region15: #{encoder_forward.7} parent=11 // pred_region
        _
      $region16: #{encoder_forward.7} parent=11 // pred_fallthru
        _
    $region12: #{encoder_forward.7} parent=5 // pred_fallthru
      _
    %p127 = scmp.lt.s32.totalorder %s10, 2
    // Predicated region
    $region17: #{encoder_forward.7} parent=5 // pred_check
      %p128 = pneg %p127
    $region18: #{encoder_forward.7} parent=5 // pred_check_branch
      %130 = sbr.rel (%p128) target = $region20
    $region19: #{encoder_forward.7} parent=5 // pred_region
      // Predicated region
      $region21: #{encoder_forward.7} parent=19 // pred_check
        %p131 = pneg %p30
      $region22: #{encoder_forward.7} parent=19 // pred_check_branch
        %133 = sbr.rel (%p131) target = $region24
      $region23: #{encoder_forward.7} parent=19 // pred_region
        %s134 = smul.u32 8, %s10
        %p135 = scmp.lt.s32.totalorder %s134, 15
        %s136 = scalar_select %p135, %s134, 15
        %s137 = smul.addr %s136, 2
        %s138 = smul.addr %s137, 4
        %s139 = scalar_lea.vmem %s0, %s138
        %s140 = smul.u32 8, %s10
      $region24: #{encoder_forward.7} parent=19 // pred_fallthru
        _
    $region20: #{encoder_forward.7} parent=5 // pred_fallthru
      _
    %p141 = scmp.le.s32.totalorder 1, %s10
    %p142 = scmp.lt.s32.totalorder %s10, 3
    %p143 = pnand %p141, %p142
    %p144 = pneg %p143
    // Predicated region
    $region25: #{encoder_forward.7} parent=5 // pred_check
      _
    $region26: #{encoder_forward.7} parent=5 // pred_check_branch
      %146 = sbr.rel (%p143) target = $region28
    $region27: #{encoder_forward.7} parent=5 // pred_region
      %s147 = ssub.s32 %s10, 1
      %s148 = smul.u32 8, %s15
      %p149 = scmp.lt.s32.totalorder %s148, 15
      %s150 = scalar_select %p149, %s148, 15
      %s151 = smul.addr %s150, 2
      %s152 = smul.addr %s151, 4
      %s153 = scalar_lea.vmem %s0, %s152
      %p154 = pneg %p36
      %p155 = pneg %p33
      %p156 = pneg %p57
      %p157 = pneg %p54
      %p158 = pneg %p83
      %p159 = pneg %p80
      %s160 = smul.u32 8, %s15
      %p161 = scmp.lt.s32.totalorder %s160, 15
      %s162 = scalar_select %p161, %s160, 15
      %s163 = smul.addr %s162, 4
      %s164 = scalar_lea.vmem %s2, %s163
      %p165 = pneg %p109
      %p166 = pneg %p106
      %p167 = scmp.lt.s32.totalorder %s15, 1
      %s168 = scalar_select %p167, %s15, 1
      %s169 = smul.addr %s168, 2
      %s170 = scalar_lea.vmem %s3, %s169
      %s171 = smul.u32 8, %s15
      %p172 = scmp.lt.s32.totalorder %s171, 15
      %s173 = scalar_select %p172, %s171, 15
      %s174 = smul.addr %s173, 2
      %s175 = smul.addr %s174, 4
      %s176 = scalar_lea.vmem %s0, %s175
      %s177 = smul.u32 8, %s15
      %s178 = smul.u32 8, %s15
      %p179 = scmp.lt.s32.totalorder %s178, 15
      %s180 = scalar_select %p179, %s178, 15
      %s181 = smul.addr %s180, 4
      %s182 = scalar_lea.vmem %s2, %s181
      %s183 = smul.u32 8, %s15
      %p184 = scmp.lt.s32.totalorder %s15, 1
      %s185 = scalar_select %p184, %s15, 1
      %s186 = smul.addr %s185, 2
      %s187 = scalar_lea.vmem %s3, %s186
      %v189 = vld [vmem:[%s176] sm:$0xff]
      %v190 = vld [vmem:[%s176 + $0x8] sm:$0xff]
      %v191 = vld [vmem:[%s176 + $0x10] sm:$0xff]
      %v192 = vld [vmem:[%s176 + $0x18] sm:$0xff]
      %v193 = vld [vmem:[%s176 + $0x20] sm:$0xff]
      %v194 = vld [vmem:[%s176 + $0x28] sm:$0xff]
      %v195 = vld [vmem:[%s176 + $0x30] sm:$0xff]
      %v196 = vld [vmem:[%s176 + $0x38] sm:$0xff]
      %v197 = vld [vmem:[%s1] sm:$0xf]
      %v198 = vld [vmem:[%s1 + $0x4] sm:$0xf]
      %v199 = vld [vmem:[%s1 + $0x8] sm:$0xf]
      %v200 = vld [vmem:[%s1 + $0xc] sm:$0xf]
      %v201 = vld [vmem:[%s1 + $0x10] sm:$0xf]
      %v202 = vld [vmem:[%s1 + $0x14] sm:$0xf]
      %v203 = vld [vmem:[%s1 + $0x18] sm:$0xf]
      %v204 = vld [vmem:[%s1 + $0x1c] sm:$0xf]
      %v205 = vld [vmem:[%s1 + $0x20] sm:$0xf]
      %v206 = vld [vmem:[%s1 + $0x24] sm:$0xf]
      %v207 = vld [vmem:[%s1 + $0x28] sm:$0xf]
      %v208 = vld [vmem:[%s1 + $0x2c] sm:$0xf]
      %v209 = vld [vmem:[%s1 + $0x30] sm:$0xf]
      %v210 = vld [vmem:[%s1 + $0x34] sm:$0xf]
      %v211 = vld [vmem:[%s1 + $0x38] sm:$0xf]
      %v212 = vld [vmem:[%s1 + $0x3c] sm:$0xf]
      %v213 = vld [vmem:[%s1 + $0x40] sm:$0xf]
      %v214 = vld [vmem:[%s1 + $0x44] sm:$0xf]
      %v215 = vld [vmem:[%s1 + $0x48] sm:$0xf]
      %v216 = vld [vmem:[%s1 + $0x4c] sm:$0xf]
      %v217 = vld [vmem:[%s1 + $0x50] sm:$0xf]
      %v218 = vld [vmem:[%s1 + $0x54] sm:$0xf]
      %v219 = vld [vmem:[%s1 + $0x58] sm:$0xf]
      %v220 = vld [vmem:[%s1 + $0x5c] sm:$0xf]
      %v221 = vld [vmem:[%s1 + $0x60] sm:$0xf]
      %v222 = vld [vmem:[%s1 + $0x64] sm:$0xf]
      %v223 = vld [vmem:[%s1 + $0x68] sm:$0xf]
      %v224 = vld [vmem:[%s1 + $0x6c] sm:$0xf]
      %v225 = vld [vmem:[%s1 + $0x70] sm:$0xf]
      %v226 = vld [vmem:[%s1 + $0x74] sm:$0xf]
      %v227 = vld [vmem:[%s1 + $0x78] sm:$0xf]
      %v228 = vld [vmem:[%s1 + $0x7c] sm:$0xf]
      %v237 = vunpack.c.l.b16 %v189
      %v238 = vunpack.c.h.b16 %v189
      %v239 = vunpack.c.l.b16 %v190
      %v240 = vunpack.c.h.b16 %v190
      %v241 = vunpack.c.l.b16 %v191
      %v242 = vunpack.c.h.b16 %v191
      %v243 = vunpack.c.l.b16 %v192
      %v244 = vunpack.c.h.b16 %v192
      %v245 = vunpack.c.l.b16 %v193
      %v246 = vunpack.c.h.b16 %v193
      %v247 = vunpack.c.l.b16 %v194
      %v248 = vunpack.c.h.b16 %v194
      %v249 = vunpack.c.l.b16 %v195
      %v250 = vunpack.c.h.b16 %v195
      %v251 = vunpack.c.l.b16 %v196
      %v252 = vunpack.c.h.b16 %v196
      %v253 = vpack.c.b16 %v239, %v237
      %v254 = vpack.c.b16 %v240, %v238
      %v255 = vpack.c.b16 %v243, %v241
      %v256 = vpack.c.b16 %v244, %v242
      %v257 = vpack.c.b16 %v247, %v245
      %v258 = vpack.c.b16 %v248, %v246
      %v259 = vpack.c.b16 %v251, %v249
      %v260 = vpack.c.b16 %v252, %v250
      %v301 = vunpack.c.l.b16 %v197
      %v302 = vunpack.c.l.b16 %v198
      %v303 = vunpack.c.l.b16 %v199
      %v304 = vunpack.c.l.b16 %v200
      %v305 = vunpack.c.l.b16 %v201
      %v306 = vunpack.c.l.b16 %v202
      %v307 = vunpack.c.l.b16 %v203
      %v308 = vunpack.c.l.b16 %v204
      %v309 = vunpack.c.l.b16 %v205
      %v310 = vunpack.c.l.b16 %v206
      %v311 = vunpack.c.l.b16 %v207
      %v312 = vunpack.c.l.b16 %v208
      %v313 = vunpack.c.l.b16 %v209
      %v314 = vunpack.c.l.b16 %v210
      %v315 = vunpack.c.l.b16 %v211
      %v316 = vunpack.c.l.b16 %v212
      %v317 = vunpack.c.l.b16 %v213
      %v318 = vunpack.c.l.b16 %v214
      %v319 = vunpack.c.l.b16 %v215
      %v320 = vunpack.c.l.b16 %v216
      %v321 = vunpack.c.l.b16 %v217
      %v322 = vunpack.c.l.b16 %v218
      %v323 = vunpack.c.l.b16 %v219
      %v324 = vunpack.c.l.b16 %v220
      %v325 = vunpack.c.l.b16 %v221
      %v326 = vunpack.c.l.b16 %v222
      %v327 = vunpack.c.l.b16 %v223
      %v328 = vunpack.c.l.b16 %v224
      %v329 = vunpack.c.l.b16 %v225
      %v330 = vunpack.c.l.b16 %v226
      %v331 = vunpack.c.l.b16 %v227
      %v332 = vunpack.c.l.b16 %v228
      %v333 = vpack.c.b16 %v302, %v301
      %v334 = vpack.c.b16 %v304, %v303
      %v335 = vpack.c.b16 %v306, %v305
      %v336 = vpack.c.b16 %v308, %v307
      %v337 = vpack.c.b16 %v310, %v309
      %v338 = vpack.c.b16 %v312, %v311
      %v339 = vpack.c.b16 %v314, %v313
      %v340 = vpack.c.b16 %v316, %v315
      %v341 = vpack.c.b16 %v318, %v317
      %v342 = vpack.c.b16 %v320, %v319
      %v343 = vpack.c.b16 %v322, %v321
      %v344 = vpack.c.b16 %v324, %v323
      %v345 = vpack.c.b16 %v326, %v325
      %v346 = vpack.c.b16 %v328, %v327
      %v347 = vpack.c.b16 %v330, %v329
      %v348 = vpack.c.b16 %v332, %v331
      %365 = vmatprep.subr.bf16.mxu0 0
      %366 = vmatpush1.bf16.msra.mxu0 %v333
      %367 = vmatprep.subr.bf16.mxu0 0
      %368 = vmatpush1.bf16.msra.mxu0 %v334
      %369 = vmatprep.subr.bf16.mxu0 0
      %370 = vmatpush1.bf16.msra.mxu0 %v335
      %371 = vmatprep.subr.bf16.mxu0 0
      %372 = vmatpush1.bf16.msra.mxu0 %v336
      %373 = vmatprep.subr.bf16.mxu0 0
      %374 = vmatpush1.bf16.msra.mxu0 %v337
      %375 = vmatprep.subr.bf16.mxu0 0
      %376 = vmatpush1.bf16.msra.mxu0 %v338
      %377 = vmatprep.subr.bf16.mxu0 0
      %378 = vmatpush1.bf16.msra.mxu0 %v339
      %379 = vmatprep.subr.bf16.mxu0 0
      %380 = vmatpush1.bf16.msra.mxu0 %v340
      %381 = vmatprep.subr.bf16.mxu0 0
      %382 = vmatpush1.bf16.msra.mxu0 %v341
      %383 = vmatprep.subr.bf16.mxu0 0
      %384 = vmatpush1.bf16.msra.mxu0 %v342
      %385 = vmatprep.subr.bf16.mxu0 0
      %386 = vmatpush1.bf16.msra.mxu0 %v343
      %387 = vmatprep.subr.bf16.mxu0 0
      %388 = vmatpush1.bf16.msra.mxu0 %v344
      %389 = vmatprep.subr.bf16.mxu0 0
      %390 = vmatpush1.bf16.msra.mxu0 %v345
      %391 = vmatprep.subr.bf16.mxu0 0
      %392 = vmatpush1.bf16.msra.mxu0 %v346
      %393 = vmatprep.subr.bf16.mxu0 0
      %394 = vmatpush1.bf16.msra.mxu0 %v347
      %395 = vmatprep.subr.bf16.mxu0 0
      %396 = vmatpush1.bf16.msra.mxu0 %v348
      %397 = vmatprep.mubr.bf16.mxu0 %v254
      %398 = vmatmul.mubr.bf16.gmra.mrb[0].mxu0 %v253
      %v399 = vpop.f32.mrb[0].mxu0
      %v400 = vadd.f32 0.0, %v399
      %v401 = vpop.f32.mrb[0].mxu0
      %v402 = vpop.f32.mrb[0].mxu0
      %v403 = vadd.f32 0.0, %v402
      %v404 = vpop.f32.mrb[0].mxu0
      %405 = vmatprep.mubr.bf16.mxu0 %v256
      %406 = vmatmul.mubr.bf16.gmra.mrb[0].mxu0 %v255
      %v407 = vpop.f32.mrb[0].mxu0
      %v408 = vadd.f32 0.0, %v407
      %v409 = vpop.f32.mrb[0].mxu0
      %v410 = vpop.f32.mrb[0].mxu0
      %v411 = vadd.f32 0.0, %v410
      %v412 = vpop.f32.mrb[0].mxu0
      %413 = vmatprep.mubr.bf16.mxu0 %v258
      %414 = vmatmul.mubr.bf16.gmra.mrb[0].mxu0 %v257
      %v415 = vpop.f32.mrb[0].mxu0
      %v416 = vadd.f32 0.0, %v415
      %v417 = vpop.f32.mrb[0].mxu0
      %v418 = vpop.f32.mrb[0].mxu0
      %v419 = vadd.f32 0.0, %v418
      %v420 = vpop.f32.mrb[0].mxu0
      %421 = vmatprep.mubr.bf16.mxu0 %v260
      %422 = vmatmul.mubr.bf16.gmra.mrb[0].mxu0 %v259
      %v423 = vpop.f32.mrb[0].mxu0
      %v424 = vadd.f32 0.0, %v423
      %v425 = vpop.f32.mrb[0].mxu0
      %v426 = vpop.f32.mrb[0].mxu0
      %v427 = vadd.f32 0.0, %v426
      %v428 = vpop.f32.mrb[0].mxu0
      %429 = vdwg.mxu0
      %v430 = vpack.c.bf16 %v403, %v400
      %v431 = vpack.c.bf16 %v411, %v408
      %v432 = vpack.c.bf16 %v419, %v416
      %v433 = vpack.c.bf16 %v427, %v424
      %v438 = vunpack.c.l.b16 %v430
      %v439 = vunpack.c.h.b16 %v430
      %v440 = vunpack.c.l.b16 %v431
      %v441 = vunpack.c.h.b16 %v431
      %v442 = vunpack.c.l.b16 %v432
      %v443 = vunpack.c.h.b16 %v432
      %v444 = vunpack.c.l.b16 %v433
      %v445 = vunpack.c.h.b16 %v433
      %v446 = vpack.c.b16 %v438, %v438
      %v447 = vpack.c.b16 %v439, %v439
      %v448 = vpack.c.b16 %v440, %v440
      %v449 = vpack.c.b16 %v441, %v441
      %v450 = vpack.c.b16 %v442, %v442
      %v451 = vpack.c.b16 %v443, %v443
      %v452 = vpack.c.b16 %v444, %v444
      %v453 = vpack.c.b16 %v445, %v445
      %vm462 = vcmask 257024
      %463 = vst.msk [vmem:[%s182] sm:$0xf] %vm462, %v446
      %464 = vst.msk [vmem:[%s182 + $0x4] sm:$0xf] %vm462, %v447
      %465 = vst.msk [vmem:[%s182 + $0x8] sm:$0xf] %vm462, %v448
      %466 = vst.msk [vmem:[%s182 + $0xc] sm:$0xf] %vm462, %v449
      %467 = vst.msk [vmem:[%s182 + $0x10] sm:$0xf] %vm462, %v450
      %468 = vst.msk [vmem:[%s182 + $0x14] sm:$0xf] %vm462, %v451
      %469 = vst.msk [vmem:[%s182 + $0x18] sm:$0xf] %vm462, %v452
      %470 = vst.msk [vmem:[%s182 + $0x1c] sm:$0xf] %vm462, %v453
      %vm471 = vcmask 261120
      %v472 = vsel %vm471, %v400, 0.0
      %v473 = vsel %vm471, %v403, 0.0
      %v474 = vadd.f32 %v472, %v473
      %v475 = vsel %vm471, %v408, 0.0
      %v476 = vadd.f32 %v474, %v475
      %v477 = vsel %vm471, %v411, 0.0
      %v478 = vadd.f32 %v476, %v477
      %v479 = vsel %vm471, %v416, 0.0
      %v480 = vadd.f32 %v478, %v479
      %v481 = vsel %vm471, %v419, 0.0
      %v482 = vadd.f32 %v480, %v481
      %v483 = vsel %vm471, %v424, 0.0
      %v484 = vadd.f32 %v482, %v483
      %v485 = vsel %vm471, %v427, 0.0
      %v486 = vadd.f32 %v484, %v485
      %v487 = vrot.slane %v486, 4
      %v488 = vadd.f32 %v486, %v487
      %v489 = vrot.slane %v488, 2
      %v490 = vadd.f32 %v488, %v489
      %v491 = vrot.slane %v490, 1
      %v492 = vadd.f32 %v490, %v491
      %vm493 = vcmask 253952
      %494 = vst.msk [vmem:[%s187] sm:$0x1] %vm493, %v492
      %v495 = vmul.f32 %v400, %v400
      %v496 = vmul.f32 %v403, %v403
      %v497 = vmul.f32 %v408, %v408
      %v498 = vmul.f32 %v411, %v411
      %v499 = vmul.f32 %v416, %v416
      %v500 = vmul.f32 %v419, %v419
      %v501 = vmul.f32 %v424, %v424
      %v502 = vmul.f32 %v427, %v427
      %v503 = vsel %vm471, %v495, 0.0
      %v504 = vsel %vm471, %v496, 0.0
      %v505 = vadd.f32 %v503, %v504
      %v506 = vsel %vm471, %v497, 0.0
      %v507 = vadd.f32 %v505, %v506
      %v508 = vsel %vm471, %v498, 0.0
      %v509 = vadd.f32 %v507, %v508
      %v510 = vsel %vm471, %v499, 0.0
      %v511 = vadd.f32 %v509, %v510
      %v512 = vsel %vm471, %v500, 0.0
      %v513 = vadd.f32 %v511, %v512
      %v514 = vsel %vm471, %v501, 0.0
      %v515 = vadd.f32 %v513, %v514
      %v516 = vsel %vm471, %v502, 0.0
      %v517 = vadd.f32 %v515, %v516
      %v518 = vrot.slane %v517, 4
      %v519 = vadd.f32 %v517, %v518
      %v520 = vrot.slane %v519, 2
      %v521 = vadd.f32 %v519, %v520
      %v522 = vrot.slane %v521, 1
      %v523 = vadd.f32 %v521, %v522
      %524 = vst.msk [vmem:[%s187 + $0x1] sm:$0x1] %vm493, %v523
      %s525 = smul.u32 8, %s15
      %p526 = scmp.lt.s32.totalorder %s525, 15
      %s527 = scalar_select %p526, %s525, 15
      %s528 = smul.addr %s527, 4
      %s529 = scalar_lea.vmem %s2, %s528
      %p530 = scmp.lt.s32.totalorder %s15, 1
      %s531 = scalar_select %p530, %s15, 1
      %s532 = smul.addr %s531, 2
      %s533 = scalar_lea.vmem %s3, %s532
      // Predicated region
      $region29: #{encoder_forward.7} parent=27 // pred_check
        %p534 = pneg %p80
      $region30: #{encoder_forward.7} parent=27 // pred_check_branch
        %536 = sbr.rel (%p534) target = $region32
      $region31: #{encoder_forward.7} parent=27 // pred_region
        %s537 = smul.u32 8, %s15
      $region32: #{encoder_forward.7} parent=27 // pred_fallthru
        _
      // Predicated region
      $region33: #{encoder_forward.7} parent=27 // pred_check
        %p538 = pneg %p106
      $region34: #{encoder_forward.7} parent=27 // pred_check_branch
        %540 = sbr.rel (%p538) target = $region36
      $region35: #{encoder_forward.7} parent=27 // pred_region
        _
      $region36: #{encoder_forward.7} parent=27 // pred_fallthru
        _
    $region28: #{encoder_forward.7} parent=5 // pred_fallthru
      _
    %p541 = scmp.le.s32.totalorder 2, %s10
    // Predicated region
    $region37: #{encoder_forward.7} parent=5 // pred_check
      %p542 = pneg %p541
    $region38: #{encoder_forward.7} parent=5 // pred_check_branch
      %544 = sbr.rel (%p542) target = $region40
    $region39: #{encoder_forward.7} parent=5 // pred_region
      %s545 = ssub.s32 %s10, 2
      // Predicated region
      $region41: #{encoder_forward.7} parent=39 // pred_check
        %p546 = pneg %p86
      $region42: #{encoder_forward.7} parent=39 // pred_check_branch
        %548 = sbr.rel (%p546) target = $region44
      $region43: #{encoder_forward.7} parent=39 // pred_region
        %s549 = smul.u32 8, %s16
        %p550 = scmp.lt.s32.totalorder %s549, 15
        %s551 = scalar_select %p550, %s549, 15
        %s552 = smul.addr %s551, 4
        %s553 = scalar_lea.vmem %s2, %s552
      $region44: #{encoder_forward.7} parent=39 // pred_fallthru
        _
      // Predicated region
      $region45: #{encoder_forward.7} parent=39 // pred_check
        %p554 = pneg %p112
      $region46: #{encoder_forward.7} parent=39 // pred_check_branch
        %556 = sbr.rel (%p554) target = $region48
      $region47: #{encoder_forward.7} parent=39 // pred_region
        %p557 = scmp.lt.s32.totalorder %s16, 1
        %s558 = scalar_select %p557, %s16, 1
        %s559 = smul.addr %s558, 2
        %s560 = scalar_lea.vmem %s3, %s559
      $region48: #{encoder_forward.7} parent=39 // pred_fallthru
        _
    $region40: #{encoder_forward.7} parent=5 // pred_fallthru
      _
  $region6: #{encoder_forward.7} parent=0 // loop_footer
    %s14 = sadd.s32 1, %s10
  $region7: #{encoder_forward.7} parent=0 // loop_footer_branch
    %9 = sbr.rel target = $region3
  $region8: #{encoder_forward.7} parent=0 // loop_exit
    _

// kernel: tile.13
$region0: #{tile.13}
  #allocation0 [shape = 's32[1]{0}', space=sflag, size = 0x4, scoped, tag = 'scoped memory for tile.13']
  %s0 = inlined_call_operand.vmem [shape: f32[64], index: 0, kind: input, shape index: {}]
  %s1 = inlined_call_operand.vmem [shape: f32[16,64], index: 1, kind: output, shape index: {}]
  // Predicated region
  $region2: #{tile.13} parent=0 // pred_check
    _
  $region3: #{tile.13} parent=0 // pred_check_branch
    %3 = sbr.rel (0) target = $region5
  $region4: #{tile.13} parent=0 // pred_region
    _
  $region5: #{tile.13} parent=0 // pred_fallthru
    _
  %v4 = vld [vmem:[%s0] ss:$0 sm:$0xff]
  %5 = vst [vmem:[%s1] sm:$0xff] %v4
  %s6 = scalar_lea.vmem %s1, 8
  %7 = vst [vmem:[%s6] sm:$0xff] %v4

// kernel: tile.14
$region0: #{tile.14}
  %s0 = inlined_call_operand.vmem [shape: f32[16,64], index: 0, kind: input, shape index: {}]
  %s1 = inlined_call_operand.vmem [shape: f32[1,1024], index: 1, kind: output, shape index: {}]
  $region1: #{tile.14} parent=0
    #allocation0 [shape = 'u8[32768]{0}', space=vmem, size = 0x8000, scoped, tag = 'scoped mem for output reshape']
    %v2 = vld [vmem:[%s0] ss:$2 sm:$0xff]
    %vm3 = vcmask 523264
    %4 = vst.msk [vmem:[#allocation0] ss:$8 sm:$0xf] %vm3, %v2
    %5 = vst.msk [vmem:[#allocation0] ss:$8 sm:$0xf0] %vm3, %v2
    %s6 = scalar_lea.vmem %s0, 1
    %v7 = vld [vmem:[%s6] ss:$2 sm:$0xff]
    %8 = vrot.lane.b32.xlu0 %v7, 64
    %v9 = vpop.permute.xlu0 %8
    %vm10 = vcmask 1048064
    %11 = vst.msk [vmem:[#allocation0] ss:$8 sm:$0xf] %vm10, %v9
    %12 = vst.msk [vmem:[#allocation0] ss:$8 sm:$0xf0] %vm10, %v9
    %s14 = sshllo.u32 0, 1
    %v16 = vld [vmem:[#allocation0] sm:%s14]
    %s17 = sshllo.u32 0, 1
    %18 = vst [vmem:[%s1] sm:%s17] %v16
    %s19 = scalar_lea.vmem [#allocation0], 8
    %v20 = vld [vmem:[%s19] sm:%s14]
    %s21 = sshllo.u32 0, 1
    %s22 = scalar_lea.vmem %s1, 1
    %23 = vst [vmem:[%s22] sm:%s21] %v20
    %s24 = scalar_lea.vmem [#allocation0], 16
    %v25 = vld [vmem:[%s24] sm:%s14]
    %s26 = sshllo.u32 0, 1
    %s27 = smul.addr 1, 2
    %s28 = scalar_lea.vmem %s1, %s27
    %29 = vst [vmem:[%s28] sm:%s26] %v25
    %s30 = scalar_lea.vmem [#allocation0], 24
    %v31 = vld [vmem:[%s30] sm:%s14]
    %s32 = sshllo.u32 0, 1
    %s33 = smul.addr 1, 3
    %s34 = scalar_lea.vmem %s1, %s33
    %35 = vst [vmem:[%s34] sm:%s32] %v31
    %s36 = scalar_lea.vmem [#allocation0], 32
    %v37 = vld [vmem:[%s36] sm:%s14]
    %s38 = sshllo.u32 0, 1
    %s39 = smul.addr 1, 4
    %s40 = scalar_lea.vmem %s1, %s39
    %41 = vst [vmem:[%s40] sm:%s38] %v37
    %s42 = scalar_lea.vmem [#allocation0], 40
    %v43 = vld [vmem:[%s42] sm:%s14]
    %s44 = sshllo.u32 0, 1
    %s45 = smul.addr 1, 5
    %s46 = scalar_lea.vmem %s1, %s45
    %47 = vst [vmem:[%s46] sm:%s44] %v43
    %s48 = scalar_lea.vmem [#allocation0], 48
    %v49 = vld [vmem:[%s48] sm:%s14]
    %s50 = sshllo.u32 0, 1
    %s51 = smul.addr 1, 6
    %s52 = scalar_lea.vmem %s1, %s51
    %53 = vst [vmem:[%s52] sm:%s50] %v49
    %s54 = scalar_lea.vmem [#allocation0], 56
    %v55 = vld [vmem:[%s54] sm:%s14]
    %s56 = sshllo.u32 0, 1
    %s57 = smul.addr 1, 7
    %s58 = scalar_lea.vmem %s1, %s57
    %59 = vst [vmem:[%s58] sm:%s56] %v55

// kernel: encoder_forward.8
$region0: #{encoder_forward.8}
  #allocation0 [shape = 'u32[]', space=smem, size = 0x4, offset = 0x4, fixed_abs, tag = 'smem constant byte address 0x4 - core index']
  #allocation1 [shape = 'u32[144,128]{1,0:T(1,128)}', space=vmem, size = 0x12000, scoped, tag = 'internal scratch']
  %s0 = inlined_call_operand.vmem [shape: bf16[32,512], index: 0, kind: input, shape index: {}]
  %s1 = inlined_call_operand.vmem [shape: bf16[512,64], index: 1, kind: input, shape index: {}]
  %s2 = inlined_call_operand.vmem [shape: bf16[32,64], index: 2, kind: output, shape index: {0}]
  %s3 = inlined_call_operand.vmem [shape: f32[2,2,64], index: 3, kind: output, shape index: {1}]
  %4 = xla_tuple %s2, %s3
  %s5 = sld [smem:[#allocation0]]
  $region49: #{encoder_forward.8} parent=0
    _
  %s7 = ssub.s32 1, %s5
  %s8 = scalar_select 0, %s7, %s5
  loop: start=0, step=1, limit=4
  $region2: #{encoder_forward.8} parent=0 // loop_pre_header
    _
  $region3: #{encoder_forward.8} parent=0 // loop_header
    %s10 = sphi 0, %s14
    %p11 = scmp.ge.s32.totalorder %s10, 4
    %s20 = sphi 0, %s22
    %s23 = sphi 0, %s20
    %s24 = sphi 0, %s23
    %s40 = sphi 0, %s24
    %s44 = sphi 0, %s44
    %s46 = sphi 0, %s44
    %s47 = sphi 0, %s46
    %s61 = sphi 0, %s47
    %s67 = sphi 0, %s69
    %s70 = sphi 0, %s67
    %s71 = sphi 0, %s70
    %s87 = sphi 0, %s71
    %s93 = sphi 0, %s95
    %s96 = sphi 0, %s93
    %s97 = sphi 0, %s96
    %s113 = sphi 0, %s97
  $region4: #{encoder_forward.8} parent=0 // loop_header_branch
    %13 = sbr.rel (%p11) target = $region8
  $region5: #{encoder_forward.8} parent=0 // loop_body
    %s15 = ssub.s32 %s10, 1
    %s16 = ssub.s32 %s10, 2
    %s17 = sadd.s32 %s10, 1
    %s18 = ssub.s32 %s10, %s17
    %p19 = scmp.eq.s32.totalorder %s18, 0
    %s21 = sadd.s32 %s20, 1
    %s22 = scalar_select %p19, %s20, %s21
    %p25 = pneg %p19
    %p26 = scmp.eq.s32.totalorder %s10, 1
    %p27 = por %p25, %p26
    %p28 = scmp.ne.s32.totalorder %s20, %s23
    %p29 = scmp.eq.s32.totalorder %s10, 0
    %p30 = por %p28, %p29
    %p31 = scmp.ne.s32.totalorder %s20, %s23
    %p32 = scmp.eq.s32.totalorder %s15, 1
    %p33 = por %p31, %p32
    %p34 = scmp.ne.s32.totalorder %s23, %s24
    %p35 = scmp.eq.s32.totalorder %s15, 0
    %p36 = por %p34, %p35
    %p37 = scmp.ne.s32.totalorder %s23, %s24
    %p38 = scmp.eq.s32.totalorder %s16, 1
    %p39 = por %p37, %p38
    %p41 = scmp.ne.s32.totalorder %s24, %s40
    %p42 = scmp.eq.s32.totalorder %s16, 0
    %p43 = por %p41, %p42
    %s45 = sadd.s32 %s44, 1
    %p48 = scmp.eq.s32.totalorder %s10, 1
    %p49 = scmp.ne.s32.totalorder %s44, %s46
    %p50 = scmp.eq.s32.totalorder %s10, 0
    %p51 = por %p49, %p50
    %p52 = scmp.ne.s32.totalorder %s44, %s46
    %p53 = scmp.eq.s32.totalorder %s15, 1
    %p54 = por %p52, %p53
    %p55 = scmp.ne.s32.totalorder %s46, %s47
    %p56 = scmp.eq.s32.totalorder %s15, 0
    %p57 = por %p55, %p56
    %p58 = scmp.ne.s32.totalorder %s46, %s47
    %p59 = scmp.eq.s32.totalorder %s16, 1
    %p60 = por %p58, %p59
    %p62 = scmp.ne.s32.totalorder %s47, %s61
    %p63 = scmp.eq.s32.totalorder %s16, 0
    %p64 = por %p62, %p63
    %s65 = ssub.s32 %s10, %s17
    %p66 = scmp.eq.s32.totalorder %s65, 0
    %s68 = sadd.s32 %s67, 1
    %s69 = scalar_select %p66, %s67, %s68
    %p72 = pneg %p66
    %p73 = scmp.eq.s32.totalorder %s10, 1
    %p74 = por %p72, %p73
    %p75 = scmp.ne.s32.totalorder %s67, %s70
    %p76 = scmp.eq.s32.totalorder %s10, 0
    %p77 = por %p75, %p76
    %p78 = scmp.ne.s32.totalorder %s67, %s70
    %p79 = scmp.eq.s32.totalorder %s15, 1
    %p80 = por %p78, %p79
    %p81 = scmp.ne.s32.totalorder %s70, %s71
    %p82 = scmp.eq.s32.totalorder %s15, 0
    %p83 = por %p81, %p82
    %p84 = scmp.ne.s32.totalorder %s70, %s71
    %p85 = scmp.eq.s32.totalorder %s16, 1
    %p86 = por %p84, %p85
    %p88 = scmp.ne.s32.totalorder %s71, %s87
    %p89 = scmp.eq.s32.totalorder %s16, 0
    %p90 = por %p88, %p89
    %s91 = ssub.s32 %s10, %s17
    %p92 = scmp.eq.s32.totalorder %s91, 0
    %s94 = sadd.s32 %s93, 1
    %s95 = scalar_select %p92, %s93, %s94
    %p98 = pneg %p92
    %p99 = scmp.eq.s32.totalorder %s10, 1
    %p100 = por %p98, %p99
    %p101 = scmp.ne.s32.totalorder %s93, %s96
    %p102 = scmp.eq.s32.totalorder %s10, 0
    %p103 = por %p101, %p102
    %p104 = scmp.ne.s32.totalorder %s93, %s96
    %p105 = scmp.eq.s32.totalorder %s15, 1
    %p106 = por %p104, %p105
    %p107 = scmp.ne.s32.totalorder %s96, %s97
    %p108 = scmp.eq.s32.totalorder %s15, 0
    %p109 = por %p107, %p108
    %p110 = scmp.ne.s32.totalorder %s96, %s97
    %p111 = scmp.eq.s32.totalorder %s16, 1
    %p112 = por %p110, %p111
    %p114 = scmp.ne.s32.totalorder %s97, %s113
    %p115 = scmp.eq.s32.totalorder %s16, 0
    %p116 = por %p114, %p115
    %p117 = scmp.le.s32.totalorder 1, %s10
    %p118 = scmp.lt.s32.totalorder %s10, 3
    %p119 = pnand %p117, %p118
    %p120 = pneg %p119
    // Predicated region
    $region9: #{encoder_forward.8} parent=5 // pred_check
      _
    $region10: #{encoder_forward.8} parent=5 // pred_check_branch
      %122 = sbr.rel (%p119) target = $region12
    $region11: #{encoder_forward.8} parent=5 // pred_region
      %s123 = ssub.s32 %s10, 1
      // Predicated region
      $region13: #{encoder_forward.8} parent=11 // pred_check
        %p124 = pneg %p57
      $region14: #{encoder_forward.8} parent=11 // pred_check_branch
        %126 = sbr.rel (%p124) target = $region16
      $region15: #{encoder_forward.8} parent=11 // pred_region
        _
      $region16: #{encoder_forward.8} parent=11 // pred_fallthru
        _
    $region12: #{encoder_forward.8} parent=5 // pred_fallthru
      _
    %p127 = scmp.lt.s32.totalorder %s10, 2
    // Predicated region
    $region17: #{encoder_forward.8} parent=5 // pred_check
      %p128 = pneg %p127
    $region18: #{encoder_forward.8} parent=5 // pred_check_branch
      %130 = sbr.rel (%p128) target = $region20
    $region19: #{encoder_forward.8} parent=5 // pred_region
      // Predicated region
      $region21: #{encoder_forward.8} parent=19 // pred_check
        %p131 = pneg %p30
      $region22: #{encoder_forward.8} parent=19 // pred_check_branch
        %133 = sbr.rel (%p131) target = $region24
      $region23: #{encoder_forward.8} parent=19 // pred_region
        %s134 = smul.u32 2, %s10
        %p135 = scmp.lt.s32.totalorder %s134, 3
        %s136 = scalar_select %p135, %s134, 3
        %s137 = smul.addr %s136, 4
        %s138 = smul.addr %s137, 4
        %s139 = scalar_lea.vmem %s0, %s138
        %s140 = smul.u32 2, %s10
      $region24: #{encoder_forward.8} parent=19 // pred_fallthru
        _
    $region20: #{encoder_forward.8} parent=5 // pred_fallthru
      _
    %p141 = scmp.le.s32.totalorder 1, %s10
    %p142 = scmp.lt.s32.totalorder %s10, 3
    %p143 = pnand %p141, %p142
    %p144 = pneg %p143
    // Predicated region
    $region25: #{encoder_forward.8} parent=5 // pred_check
      _
    $region26: #{encoder_forward.8} parent=5 // pred_check_branch
      %146 = sbr.rel (%p143) target = $region28
    $region27: #{encoder_forward.8} parent=5 // pred_region
      %s147 = ssub.s32 %s10, 1
      %s148 = smul.u32 2, %s15
      %p149 = scmp.lt.s32.totalorder %s148, 3
      %s150 = scalar_select %p149, %s148, 3
      %s151 = smul.addr %s150, 4
      %s152 = smul.addr %s151, 4
      %s153 = scalar_lea.vmem %s0, %s152
      %p154 = pneg %p36
      %p155 = pneg %p33
      %p156 = pneg %p57
      %p157 = pneg %p54
      %p158 = pneg %p83
      %p159 = pneg %p80
      %s160 = smul.u32 2, %s15
      %p161 = scmp.lt.s32.totalorder %s160, 3
      %s162 = scalar_select %p161, %s160, 3
      %s163 = smul.addr %s162, 4
      %s164 = scalar_lea.vmem %s2, %s163
      %p165 = pneg %p109
      %p166 = pneg %p106
      %p167 = scmp.lt.s32.totalorder %s15, 1
      %s168 = scalar_select %p167, %s15, 1
      %s169 = smul.addr %s168, 2
      %s170 = scalar_lea.vmem %s3, %s169
      %s171 = smul.u32 2, %s15
      %p172 = scmp.lt.s32.totalorder %s171, 3
      %s173 = scalar_select %p172, %s171, 3
      %s174 = smul.addr %s173, 4
      %s175 = smul.addr %s174, 4
      %s176 = scalar_lea.vmem %s0, %s175
      %s177 = smul.u32 2, %s15
      %s178 = smul.u32 2, %s15
      %p179 = scmp.lt.s32.totalorder %s178, 3
      %s180 = scalar_select %p179, %s178, 3
      %s181 = smul.addr %s180, 4
      %s182 = scalar_lea.vmem %s2, %s181
      %s183 = smul.u32 2, %s15
      %p184 = scmp.lt.s32.totalorder %s15, 1
      %s185 = scalar_select %p184, %s15, 1
      %s186 = smul.addr %s185, 2
      %s187 = scalar_lea.vmem %s3, %s186
      %v189 = vld [vmem:[%s176] sm:$0xff]
      %v190 = vld [vmem:[%s176 + $0x8] sm:$0xff]
      %v191 = vld [vmem:[%s176 + $0x10] sm:$0xff]
      %v192 = vld [vmem:[%s176 + $0x18] sm:$0xff]
      %v193 = vld [vmem:[%s1] sm:$0xf]
      %v194 = vld [vmem:[%s1 + $0x4] sm:$0xf]
      %v195 = vld [vmem:[%s1 + $0x8] sm:$0xf]
      %v196 = vld [vmem:[%s1 + $0xc] sm:$0xf]
      %v197 = vld [vmem:[%s1 + $0x10] sm:$0xf]
      %v198 = vld [vmem:[%s1 + $0x14] sm:$0xf]
      %v199 = vld [vmem:[%s1 + $0x18] sm:$0xf]
      %v200 = vld [vmem:[%s1 + $0x1c] sm:$0xf]
      %v201 = vld [vmem:[%s1 + $0x20] sm:$0xf]
      %v202 = vld [vmem:[%s1 + $0x24] sm:$0xf]
      %v203 = vld [vmem:[%s1 + $0x28] sm:$0xf]
      %v204 = vld [vmem:[%s1 + $0x2c] sm:$0xf]
      %v205 = vld [vmem:[%s1 + $0x30] sm:$0xf]
      %v206 = vld [vmem:[%s1 + $0x34] sm:$0xf]
      %v207 = vld [vmem:[%s1 + $0x38] sm:$0xf]
      %v208 = vld [vmem:[%s1 + $0x3c] sm:$0xf]
      %v209 = vld [vmem:[%s1 + $0x40] sm:$0xf]
      %v210 = vld [vmem:[%s1 + $0x44] sm:$0xf]
      %v211 = vld [vmem:[%s1 + $0x48] sm:$0xf]
      %v212 = vld [vmem:[%s1 + $0x4c] sm:$0xf]
      %v213 = vld [vmem:[%s1 + $0x50] sm:$0xf]
      %v214 = vld [vmem:[%s1 + $0x54] sm:$0xf]
      %v215 = vld [vmem:[%s1 + $0x58] sm:$0xf]
      %v216 = vld [vmem:[%s1 + $0x5c] sm:$0xf]
      %v217 = vld [vmem:[%s1 + $0x60] sm:$0xf]
      %v218 = vld [vmem:[%s1 + $0x64] sm:$0xf]
      %v219 = vld [vmem:[%s1 + $0x68] sm:$0xf]
      %v220 = vld [vmem:[%s1 + $0x6c] sm:$0xf]
      %v221 = vld [vmem:[%s1 + $0x70] sm:$0xf]
      %v222 = vld [vmem:[%s1 + $0x74] sm:$0xf]
      %v223 = vld [vmem:[%s1 + $0x78] sm:$0xf]
      %v224 = vld [vmem:[%s1 + $0x7c] sm:$0xf]
      %v225 = vld [vmem:[%s1 + $0x80] sm:$0xf]
      %v226 = vld [vmem:[%s1 + $0x84] sm:$0xf]
      %v227 = vld [vmem:[%s1 + $0x88] sm:$0xf]
      %v228 = vld [vmem:[%s1 + $0x8c] sm:$0xf]
      %v229 = vld [vmem:[%s1 + $0x90] sm:$0xf]
      %v230 = vld [vmem:[%s1 + $0x94] sm:$0xf]
      %v231 = vld [vmem:[%s1 + $0x98] sm:$0xf]
      %v232 = vld [vmem:[%s1 + $0x9c] sm:$0xf]
      %v233 = vld [vmem:[%s1 + $0xa0] sm:$0xf]
      %v234 = vld [vmem:[%s1 + $0xa4] sm:$0xf]
      %v235 = vld [vmem:[%s1 + $0xa8] sm:$0xf]
      %v236 = vld [vmem:[%s1 + $0xac] sm:$0xf]
      %v237 = vld [vmem:[%s1 + $0xb0] sm:$0xf]
      %v238 = vld [vmem:[%s1 + $0xb4] sm:$0xf]
      %v239 = vld [vmem:[%s1 + $0xb8] sm:$0xf]
      %v240 = vld [vmem:[%s1 + $0xbc] sm:$0xf]
      %v241 = vld [vmem:[%s1 + $0xc0] sm:$0xf]
      %v242 = vld [vmem:[%s1 + $0xc4] sm:$0xf]
      %v243 = vld [vmem:[%s1 + $0xc8] sm:$0xf]
      %v244 = vld [vmem:[%s1 + $0xcc] sm:$0xf]
      %v245 = vld [vmem:[%s1 + $0xd0] sm:$0xf]
      %v246 = vld [vmem:[%s1 + $0xd4] sm:$0xf]
      %v247 = vld [vmem:[%s1 + $0xd8] sm:$0xf]
      %v248 = vld [vmem:[%s1 + $0xdc] sm:$0xf]
      %v249 = vld [vmem:[%s1 + $0xe0] sm:$0xf]
      %v250 = vld [vmem:[%s1 + $0xe4] sm:$0xf]
      %v251 = vld [vmem:[%s1 + $0xe8] sm:$0xf]
      %v252 = vld [vmem:[%s1 + $0xec] sm:$0xf]
      %v253 = vld [vmem:[%s1 + $0xf0] sm:$0xf]
      %v254 = vld [vmem:[%s1 + $0xf4] sm:$0xf]
      %v255 = vld [vmem:[%s1 + $0xf8] sm:$0xf]
      %v256 = vld [vmem:[%s1 + $0xfc] sm:$0xf]
      %v261 = vunpack.c.l.b16 %v189
      %v262 = vunpack.c.h.b16 %v189
      %v263 = vunpack.c.l.b16 %v190
      %v264 = vunpack.c.h.b16 %v190
      %v265 = vunpack.c.l.b16 %v191
      %v266 = vunpack.c.h.b16 %v191
      %v267 = vunpack.c.l.b16 %v192
      %v268 = vunpack.c.h.b16 %v192
      %v269 = vpack.c.b16 %v265, %v261
      %v270 = vpack.c.b16 %v266, %v262
      %v271 = vpack.c.b16 %v267, %v263
      %v272 = vpack.c.b16 %v268, %v264
      %v341 = vunpack.c.l.b16 %v193
      %v342 = vunpack.c.l.b16 %v194
      %v343 = vunpack.c.l.b16 %v195
      %v344 = vunpack.c.l.b16 %v196
      %v345 = vunpack.c.l.b16 %v197
      %v346 = vunpack.c.l.b16 %v198
      %v347 = vunpack.c.l.b16 %v199
      %v348 = vunpack.c.l.b16 %v200
      %v349 = vunpack.c.l.b16 %v201
      %v350 = vunpack.c.l.b16 %v202
      %v351 = vunpack.c.l.b16 %v203
      %v352 = vunpack.c.l.b16 %v204
      %v353 = vunpack.c.l.b16 %v205
      %v354 = vunpack.c.l.b16 %v206
      %v355 = vunpack.c.l.b16 %v207
      %v356 = vunpack.c.l.b16 %v208
      %v357 = vunpack.c.l.b16 %v209
      %v358 = vunpack.c.l.b16 %v210
      %v359 = vunpack.c.l.b16 %v211
      %v360 = vunpack.c.l.b16 %v212
      %v361 = vunpack.c.l.b16 %v213
      %v362 = vunpack.c.l.b16 %v214
      %v363 = vunpack.c.l.b16 %v215
      %v364 = vunpack.c.l.b16 %v216
      %v365 = vunpack.c.l.b16 %v217
      %v366 = vunpack.c.l.b16 %v218
      %v367 = vunpack.c.l.b16 %v219
      %v368 = vunpack.c.l.b16 %v220
      %v369 = vunpack.c.l.b16 %v221
      %v370 = vunpack.c.l.b16 %v222
      %v371 = vunpack.c.l.b16 %v223
      %v372 = vunpack.c.l.b16 %v224
      %v373 = vunpack.c.l.b16 %v225
      %v374 = vunpack.c.l.b16 %v226
      %v375 = vunpack.c.l.b16 %v227
      %v376 = vunpack.c.l.b16 %v228
      %v377 = vunpack.c.l.b16 %v229
      %v378 = vunpack.c.l.b16 %v230
      %v379 = vunpack.c.l.b16 %v231
      %v380 = vunpack.c.l.b16 %v232
      %v381 = vunpack.c.l.b16 %v233
      %v382 = vunpack.c.l.b16 %v234
      %v383 = vunpack.c.l.b16 %v235
      %v384 = vunpack.c.l.b16 %v236
      %v385 = vunpack.c.l.b16 %v237
      %v386 = vunpack.c.l.b16 %v238
      %v387 = vunpack.c.l.b16 %v239
      %v388 = vunpack.c.l.b16 %v240
      %v389 = vunpack.c.l.b16 %v241
      %v390 = vunpack.c.l.b16 %v242
      %v391 = vunpack.c.l.b16 %v243
      %v392 = vunpack.c.l.b16 %v244
      %v393 = vunpack.c.l.b16 %v245
      %v394 = vunpack.c.l.b16 %v246
      %v395 = vunpack.c.l.b16 %v247
      %v396 = vunpack.c.l.b16 %v248
      %v397 = vunpack.c.l.b16 %v249
      %v398 = vunpack.c.l.b16 %v250
      %v399 = vunpack.c.l.b16 %v251
      %v400 = vunpack.c.l.b16 %v252
      %v401 = vunpack.c.l.b16 %v253
      %v402 = vunpack.c.l.b16 %v254
      %v403 = vunpack.c.l.b16 %v255
      %v404 = vunpack.c.l.b16 %v256
      %v405 = vpack.c.b16 %v342, %v341
      %v406 = vpack.c.b16 %v344, %v343
      %v407 = vpack.c.b16 %v346, %v345
      %v408 = vpack.c.b16 %v348, %v347
      %v409 = vpack.c.b16 %v350, %v349
      %v410 = vpack.c.b16 %v352, %v351
      %v411 = vpack.c.b16 %v354, %v353
      %v412 = vpack.c.b16 %v356, %v355
      %v413 = vpack.c.b16 %v358, %v357
      %v414 = vpack.c.b16 %v360, %v359
      %v415 = vpack.c.b16 %v362, %v361
      %v416 = vpack.c.b16 %v364, %v363
      %v417 = vpack.c.b16 %v366, %v365
      %v418 = vpack.c.b16 %v368, %v367
      %v419 = vpack.c.b16 %v370, %v369
      %v420 = vpack.c.b16 %v372, %v371
      %v421 = vpack.c.b16 %v374, %v373
      %v422 = vpack.c.b16 %v376, %v375
      %v423 = vpack.c.b16 %v378, %v377
      %v424 = vpack.c.b16 %v380, %v379
      %v425 = vpack.c.b16 %v382, %v381
      %v426 = vpack.c.b16 %v384, %v383
      %v427 = vpack.c.b16 %v386, %v385
      %v428 = vpack.c.b16 %v388, %v387
      %v429 = vpack.c.b16 %v390, %v389
      %v430 = vpack.c.b16 %v392, %v391
      %v431 = vpack.c.b16 %v394, %v393
      %v432 = vpack.c.b16 %v396, %v395
      %v433 = vpack.c.b16 %v398, %v397
      %v434 = vpack.c.b16 %v400, %v399
      %v435 = vpack.c.b16 %v402, %v401
      %v436 = vpack.c.b16 %v404, %v403
      %469 = vmatprep.subr.bf16.mxu0 0
      %470 = vmatpush1.bf16.msra.mxu0 %v405
      %471 = vmatprep.subr.bf16.mxu0 0
      %472 = vmatpush1.bf16.msra.mxu0 %v406
      %473 = vmatprep.subr.bf16.mxu0 0
      %474 = vmatpush1.bf16.msra.mxu0 %v407
      %475 = vmatprep.subr.bf16.mxu0 0
      %476 = vmatpush1.bf16.msra.mxu0 %v408
      %477 = vmatprep.subr.bf16.mxu0 0
      %478 = vmatpush1.bf16.msra.mxu0 %v409
      %479 = vmatprep.subr.bf16.mxu0 0
      %480 = vmatpush1.bf16.msra.mxu0 %v410
      %481 = vmatprep.subr.bf16.mxu0 0
      %482 = vmatpush1.bf16.msra.mxu0 %v411
      %483 = vmatprep.subr.bf16.mxu0 0
      %484 = vmatpush1.bf16.msra.mxu0 %v412
      %485 = vmatprep.subr.bf16.mxu0 0
      %486 = vmatpush1.bf16.msra.mxu0 %v413
      %487 = vmatprep.subr.bf16.mxu0 0
      %488 = vmatpush1.bf16.msra.mxu0 %v414
      %489 = vmatprep.subr.bf16.mxu0 0
      %490 = vmatpush1.bf16.msra.mxu0 %v415
      %491 = vmatprep.subr.bf16.mxu0 0
      %492 = vmatpush1.bf16.msra.mxu0 %v416
      %493 = vmatprep.subr.bf16.mxu0 0
      %494 = vmatpush1.bf16.msra.mxu0 %v417
      %495 = vmatprep.subr.bf16.mxu0 0
      %496 = vmatpush1.bf16.msra.mxu0 %v418
      %497 = vmatprep.subr.bf16.mxu0 0
      %498 = vmatpush1.bf16.msra.mxu0 %v419
      %499 = vmatprep.subr.bf16.mxu0 0
      %500 = vmatpush1.bf16.msra.mxu0 %v420
      %501 = vmatprep.mubr.bf16.mxu0 %v270
      %502 = vmatmul.mubr.bf16.gmra.mrb[0].mxu0 %v269
      %v503 = vpop.f32.mrb[0].mxu0
      %v504 = vadd.f32 0.0, %v503
      %v505 = vpop.f32.mrb[0].mxu0
      %v506 = vpop.f32.mrb[0].mxu0
      %v507 = vadd.f32 0.0, %v506
      %v508 = vpop.f32.mrb[0].mxu0
      %509 = vdwg.mxu0
      %510 = vmatprep.subr.bf16.mxu0 0
      %511 = vmatpush1.bf16.msra.mxu0 %v421
      %512 = vmatprep.subr.bf16.mxu0 0
      %513 = vmatpush1.bf16.msra.mxu0 %v422
      %514 = vmatprep.subr.bf16.mxu0 0
      %515 = vmatpush1.bf16.msra.mxu0 %v423
      %516 = vmatprep.subr.bf16.mxu0 0
      %517 = vmatpush1.bf16.msra.mxu0 %v424
      %518 = vmatprep.subr.bf16.mxu0 0
      %519 = vmatpush1.bf16.msra.mxu0 %v425
      %520 = vmatprep.subr.bf16.mxu0 0
      %521 = vmatpush1.bf16.msra.mxu0 %v426
      %522 = vmatprep.subr.bf16.mxu0 0
      %523 = vmatpush1.bf16.msra.mxu0 %v427
      %524 = vmatprep.subr.bf16.mxu0 0
      %525 = vmatpush1.bf16.msra.mxu0 %v428
      %526 = vmatprep.subr.bf16.mxu0 0
      %527 = vmatpush1.bf16.msra.mxu0 %v429
      %528 = vmatprep.subr.bf16.mxu0 0
      %529 = vmatpush1.bf16.msra.mxu0 %v430
      %530 = vmatprep.subr.bf16.mxu0 0
      %531 = vmatpush1.bf16.msra.mxu0 %v431
      %532 = vmatprep.subr.bf16.mxu0 0
      %533 = vmatpush1.bf16.msra.mxu0 %v432
      %534 = vmatprep.subr.bf16.mxu0 0
      %535 = vmatpush1.bf16.msra.mxu0 %v433
      %536 = vmatprep.subr.bf16.mxu0 0
      %537 = vmatpush1.bf16.msra.mxu0 %v434
      %538 = vmatprep.subr.bf16.mxu0 0
      %539 = vmatpush1.bf16.msra.mxu0 %v435
      %540 = vmatprep.subr.bf16.mxu0 0
      %541 = vmatpush1.bf16.msra.mxu0 %v436
      %542 = vmatprep.mubr.bf16.mxu0 %v272
      %543 = vmatmul.mubr.bf16.gmra.mrb[0].mxu0 %v271
      %v544 = vpop.f32.mrb[0].mxu0
      %v545 = vadd.f32 %v504, %v544
      %v546 = vpop.f32.mrb[0].mxu0
      %v547 = vpop.f32.mrb[0].mxu0
      %v548 = vadd.f32 %v507, %v547
      %v549 = vpop.f32.mrb[0].mxu0
      %550 = vdwg.mxu0
      %v551 = vpack.c.bf16 %v548, %v545
      %v553 = vunpack.c.l.b16 %v551
      %v554 = vunpack.c.h.b16 %v551
      %v555 = vpack.c.b16 %v553, %v553
      %v556 = vpack.c.b16 %v554, %v554
      %vm559 = vcmask 519168
      %560 = vst.msk [vmem:[%s182] sm:$0xf] %vm559, %v555
      %561 = vst.msk [vmem:[%s182 + $0x4] sm:$0xf] %vm559, %v556
      %vm562 = vcmask 523264
      %v563 = vsel %vm562, %v545, 0.0
      %v564 = vsel %vm562, %v548, 0.0
      %v565 = vadd.f32 %v563, %v564
      %v566 = vrot.slane %v565, 4
      %v567 = vadd.f32 %v565, %v566
      %v568 = vrot.slane %v567, 2
      %v569 = vadd.f32 %v567, %v568
      %v570 = vrot.slane %v569, 1
      %v571 = vadd.f32 %v569, %v570
      %vm572 = vcmask 516096
      %573 = vst.msk [vmem:[%s187] sm:$0x1] %vm572, %v571
      %v574 = vmul.f32 %v545, %v545
      %v575 = vmul.f32 %v548, %v548
      %v576 = vsel %vm562, %v574, 0.0
      %v577 = vsel %vm562, %v575, 0.0
      %v578 = vadd.f32 %v576, %v577
      %v579 = vrot.slane %v578, 4
      %v580 = vadd.f32 %v578, %v579
      %v581 = vrot.slane %v580, 2
      %v582 = vadd.f32 %v580, %v581
      %v583 = vrot.slane %v582, 1
      %v584 = vadd.f32 %v582, %v583
      %585 = vst.msk [vmem:[%s187 + $0x1] sm:$0x1] %vm572, %v584
      %s586 = smul.u32 2, %s15
      %p587 = scmp.lt.s32.totalorder %s586, 3
      %s588 = scalar_select %p587, %s586, 3
      %s589 = smul.addr %s588, 4
      %s590 = scalar_lea.vmem %s2, %s589
      %p591 = scmp.lt.s32.totalorder %s15, 1
      %s592 = scalar_select %p591, %s15, 1
      %s593 = smul.addr %s592, 2
      %s594 = scalar_lea.vmem %s3, %s593
      // Predicated region
      $region29: #{encoder_forward.8} parent=27 // pred_check
        %p595 = pneg %p80
      $region30: #{encoder_forward.8} parent=27 // pred_check_branch
        %597 = sbr.rel (%p595) target = $region32
      $region31: #{encoder_forward.8} parent=27 // pred_region
        %s598 = smul.u32 2, %s15
      $region32: #{encoder_forward.8} parent=27 // pred_fallthru
        _
      // Predicated region
      $region33: #{encoder_forward.8} parent=27 // pred_check
        %p599 = pneg %p106
      $region34: #{encoder_forward.8} parent=27 // pred_check_branch
        %601 = sbr.rel (%p599) target = $region36
      $region35: #{encoder_forward.8} parent=27 // pred_region
        _
      $region36: #{encoder_forward.8} parent=27 // pred_fallthru
        _
    $region28: #{encoder_forward.8} parent=5 // pred_fallthru
      _
    %p602 = scmp.le.s32.totalorder 2, %s10
    // Predicated region
    $region37: #{encoder_forward.8} parent=5 // pred_check
      %p603 = pneg %p602
    $region38: #{encoder_forward.8} parent=5 // pred_check_branch
      %605 = sbr.rel (%p603) target = $region40
    $region39: #{encoder_forward.8} parent=5 // pred_region
      %s606 = ssub.s32 %s10, 2
      // Predicated region
      $region41: #{encoder_forward.8} parent=39 // pred_check
        %p607 = pneg %p86
      $region42: #{encoder_forward.8} parent=39 // pred_check_branch
        %609 = sbr.rel (%p607) target = $region44
      $region43: #{encoder_forward.8} parent=39 // pred_region
        %s610 = smul.u32 2, %s16
        %p611 = scmp.lt.s32.totalorder %s610, 3
        %s612 = scalar_select %p611, %s610, 3
        %s613 = smul.addr %s612, 4
        %s614 = scalar_lea.vmem %s2, %s613
      $region44: #{encoder_forward.8} parent=39 // pred_fallthru
        _
      // Predicated region
      $region45: #{encoder_forward.8} parent=39 // pred_check
        %p615 = pneg %p112
      $region46: #{encoder_forward.8} parent=39 // pred_check_branch
        %617 = sbr.rel (%p615) target = $region48
      $region47: #{encoder_forward.8} parent=39 // pred_region
        %p618 = scmp.lt.s32.totalorder %s16, 1
        %s619 = scalar_select %p618, %s16, 1
        %s620 = smul.addr %s619, 2
        %s621 = scalar_lea.vmem %s3, %s620
      $region48: #{encoder_forward.8} parent=39 // pred_fallthru
        _
    $region40: #{encoder_forward.8} parent=5 // pred_fallthru
      _
  $region6: #{encoder_forward.8} parent=0 // loop_footer
    %s14 = sadd.s32 1, %s10
  $region7: #{encoder_forward.8} parent=0 // loop_footer_branch
    %9 = sbr.rel target = $region3
  $region8: #{encoder_forward.8} parent=0 // loop_exit
    _

// kernel: encoder_forward.9
$region0: #{encoder_forward.9}
  #allocation0 [shape = 'u32[]', space=smem, size = 0x4, offset = 0x4, fixed_abs, tag = 'smem constant byte address 0x4 - core index']
  #allocation1 [shape = 'u32[144,128]{1,0:T(1,128)}', space=vmem, size = 0x12000, scoped, tag = 'internal scratch']
  %s0 = inlined_call_operand.vmem [shape: bf16[16,1024], index: 0, kind: input, shape index: {}]
  %s1 = inlined_call_operand.vmem [shape: f32[1,1024], index: 1, kind: input, shape index: {}]
  %s2 = inlined_call_operand.vmem [shape: f32[1,1024], index: 2, kind: input, shape index: {}]
  %s3 = inlined_call_operand.vmem [shape: bf16[1024,16], index: 3, kind: input, shape index: {}]
  %s4 = inlined_call_operand.vmem [shape: f32[1,16], index: 4, kind: input, shape index: {}]
  %s5 = inlined_call_operand.vmem [shape: f32[16,16], index: 5, kind: output, shape index: {}]
  %s6 = sld [smem:[#allocation0]]
  $region30: #{encoder_forward.9} parent=0
    _
  %s8 = ssub.s32 1, %s6
  %s9 = scalar_select 0, %s8, %s6
  // Predicated region
  $region2: #{encoder_forward.9} parent=0 // pred_check
    _
  $region3: #{encoder_forward.9} parent=0 // pred_check_branch
    %11 = sbr.rel (0) target = $region5
  $region4: #{encoder_forward.9} parent=0 // pred_region
    _
  $region5: #{encoder_forward.9} parent=0 // pred_fallthru
    _
  // Predicated region
  $region6: #{encoder_forward.9} parent=0 // pred_check
    _
  $region7: #{encoder_forward.9} parent=0 // pred_check_branch
    %13 = sbr.rel (0) target = $region9
  $region8: #{encoder_forward.9} parent=0 // pred_region
    _
  $region9: #{encoder_forward.9} parent=0 // pred_fallthru
    _
  // Predicated region
  $region10: #{encoder_forward.9} parent=0 // pred_check
    _
  $region11: #{encoder_forward.9} parent=0 // pred_check_branch
    %15 = sbr.rel (0) target = $region13
  $region12: #{encoder_forward.9} parent=0 // pred_region
    _
  $region13: #{encoder_forward.9} parent=0 // pred_fallthru
    _
  // Predicated region
  $region14: #{encoder_forward.9} parent=0 // pred_check
    _
  $region15: #{encoder_forward.9} parent=0 // pred_check_branch
    %17 = sbr.rel (0) target = $region17
  $region16: #{encoder_forward.9} parent=0 // pred_region
    _
  $region17: #{encoder_forward.9} parent=0 // pred_fallthru
    _
  // Predicated region
  $region18: #{encoder_forward.9} parent=0 // pred_check
    _
  $region19: #{encoder_forward.9} parent=0 // pred_check_branch
    %19 = sbr.rel (0) target = $region21
  $region20: #{encoder_forward.9} parent=0 // pred_region
    _
  $region21: #{encoder_forward.9} parent=0 // pred_fallthru
    _
  %v21 = vld [vmem:[%s0] sm:$0xff]
  %v22 = vld [vmem:[%s0 + $0x8] sm:$0xff]
  %v23 = vld [vmem:[%s0 + $0x10] sm:$0xff]
  %v24 = vld [vmem:[%s0 + $0x18] sm:$0xff]
  %v25 = vld [vmem:[%s0 + $0x20] sm:$0xff]
  %v26 = vld [vmem:[%s0 + $0x28] sm:$0xff]
  %v27 = vld [vmem:[%s0 + $0x30] sm:$0xff]
  %v28 = vld [vmem:[%s0 + $0x38] sm:$0xff]
  %v29 = vunpack.c.l.bf16 %v21
  %v30 = vunpack.c.h.bf16 %v21
  %v31 = vunpack.c.l.bf16 %v22
  %v32 = vunpack.c.h.bf16 %v22
  %v33 = vunpack.c.l.bf16 %v23
  %v34 = vunpack.c.h.bf16 %v23
  %v35 = vunpack.c.l.bf16 %v24
  %v36 = vunpack.c.h.bf16 %v24
  %v37 = vunpack.c.l.bf16 %v25
  %v38 = vunpack.c.h.bf16 %v25
  %v39 = vunpack.c.l.bf16 %v26
  %v40 = vunpack.c.h.bf16 %v26
  %v41 = vunpack.c.l.bf16 %v27
  %v42 = vunpack.c.h.bf16 %v27
  %v43 = vunpack.c.l.bf16 %v28
  %v44 = vunpack.c.h.bf16 %v28
  %v45 = vld [vmem:[%s1] sm:$0xff]
  %v47 = vlaneseq
  %v48 = vshrl.u32 %v47, 7
  %v49 = vsub.s32 0, %v48
  %v50 = vrot.slane %v45, %v49
  %v51 = vlaneseq
  %v52 = vshrl.u32 %v51, 7
  %v53 = vsub.s32 1, %v52
  %v54 = vrot.slane %v45, %v53
  %v55 = vlaneseq
  %v56 = vshrl.u32 %v55, 7
  %v57 = vsub.s32 2, %v56
  %v58 = vrot.slane %v45, %v57
  %v59 = vlaneseq
  %v60 = vshrl.u32 %v59, 7
  %v61 = vsub.s32 3, %v60
  %v62 = vrot.slane %v45, %v61
  %v63 = vlaneseq
  %v64 = vshrl.u32 %v63, 7
  %v65 = vsub.s32 4, %v64
  %v66 = vrot.slane %v45, %v65
  %v67 = vlaneseq
  %v68 = vshrl.u32 %v67, 7
  %v69 = vsub.s32 5, %v68
  %v70 = vrot.slane %v45, %v69
  %v71 = vlaneseq
  %v72 = vshrl.u32 %v71, 7
  %v73 = vsub.s32 6, %v72
  %v74 = vrot.slane %v45, %v73
  %v75 = vlaneseq
  %v76 = vshrl.u32 %v75, 7
  %v77 = vsub.s32 7, %v76
  %v78 = vrot.slane %v45, %v77
  %v87 = vmul.f32 %v29, %v50
  %v88 = vmul.f32 %v30, %v54
  %v89 = vmul.f32 %v31, %v58
  %v90 = vmul.f32 %v32, %v62
  %v91 = vmul.f32 %v33, %v66
  %v92 = vmul.f32 %v34, %v70
  %v93 = vmul.f32 %v35, %v74
  %v94 = vmul.f32 %v36, %v78
  %v95 = vmul.f32 %v37, %v50
  %v96 = vmul.f32 %v38, %v54
  %v97 = vmul.f32 %v39, %v58
  %v98 = vmul.f32 %v40, %v62
  %v99 = vmul.f32 %v41, %v66
  %v100 = vmul.f32 %v42, %v70
  %v101 = vmul.f32 %v43, %v74
  %v102 = vmul.f32 %v44, %v78
  %v103 = vld [vmem:[%s2] sm:$0xff]
  %v105 = vlaneseq
  %v106 = vshrl.u32 %v105, 7
  %v107 = vsub.s32 0, %v106
  %v108 = vrot.slane %v103, %v107
  %v109 = vlaneseq
  %v110 = vshrl.u32 %v109, 7
  %v111 = vsub.s32 1, %v110
  %v112 = vrot.slane %v103, %v111
  %v113 = vlaneseq
  %v114 = vshrl.u32 %v113, 7
  %v115 = vsub.s32 2, %v114
  %v116 = vrot.slane %v103, %v115
  %v117 = vlaneseq
  %v118 = vshrl.u32 %v117, 7
  %v119 = vsub.s32 3, %v118
  %v120 = vrot.slane %v103, %v119
  %v121 = vlaneseq
  %v122 = vshrl.u32 %v121, 7
  %v123 = vsub.s32 4, %v122
  %v124 = vrot.slane %v103, %v123
  %v125 = vlaneseq
  %v126 = vshrl.u32 %v125, 7
  %v127 = vsub.s32 5, %v126
  %v128 = vrot.slane %v103, %v127
  %v129 = vlaneseq
  %v130 = vshrl.u32 %v129, 7
  %v131 = vsub.s32 6, %v130
  %v132 = vrot.slane %v103, %v131
  %v133 = vlaneseq
  %v134 = vshrl.u32 %v133, 7
  %v135 = vsub.s32 7, %v134
  %v136 = vrot.slane %v103, %v135
  %v145 = vadd.f32 %v87, %v108
  %v146 = vadd.f32 %v88, %v112
  %v147 = vadd.f32 %v89, %v116
  %v148 = vadd.f32 %v90, %v120
  %v149 = vadd.f32 %v91, %v124
  %v150 = vadd.f32 %v92, %v128
  %v151 = vadd.f32 %v93, %v132
  %v152 = vadd.f32 %v94, %v136
  %v153 = vadd.f32 %v95, %v108
  %v154 = vadd.f32 %v96, %v112
  %v155 = vadd.f32 %v97, %v116
  %v156 = vadd.f32 %v98, %v120
  %v157 = vadd.f32 %v99, %v124
  %v158 = vadd.f32 %v100, %v128
  %v159 = vadd.f32 %v101, %v132
  %v160 = vadd.f32 %v102, %v136
  %v161 = vmul.f32 %v145, 0.2
  %v162 = vmul.f32 %v146, 0.2
  %v163 = vmul.f32 %v147, 0.2
  %v164 = vmul.f32 %v148, 0.2
  %v165 = vmul.f32 %v149, 0.2
  %v166 = vmul.f32 %v150, 0.2
  %v167 = vmul.f32 %v151, 0.2
  %v168 = vmul.f32 %v152, 0.2
  %v169 = vmul.f32 %v153, 0.2
  %v170 = vmul.f32 %v154, 0.2
  %v171 = vmul.f32 %v155, 0.2
  %v172 = vmul.f32 %v156, 0.2
  %v173 = vmul.f32 %v157, 0.2
  %v174 = vmul.f32 %v158, 0.2
  %v175 = vmul.f32 %v159, 0.2
  %v176 = vmul.f32 %v160, 0.2
  %v177 = vmax.f32 %v145, %v161
  %v178 = vmax.f32 %v146, %v162
  %v179 = vmax.f32 %v147, %v163
  %v180 = vmax.f32 %v148, %v164
  %v181 = vmax.f32 %v149, %v165
  %v182 = vmax.f32 %v150, %v166
  %v183 = vmax.f32 %v151, %v167
  %v184 = vmax.f32 %v152, %v168
  %v185 = vmax.f32 %v153, %v169
  %v186 = vmax.f32 %v154, %v170
  %v187 = vmax.f32 %v155, %v171
  %v188 = vmax.f32 %v156, %v172
  %v189 = vmax.f32 %v157, %v173
  %v190 = vmax.f32 %v158, %v174
  %v191 = vmax.f32 %v159, %v175
  %v192 = vmax.f32 %v160, %v176
  %v193 = vpack.c.bf16 %v185, %v177
  %v194 = vpack.c.bf16 %v186, %v178
  %v195 = vpack.c.bf16 %v187, %v179
  %v196 = vpack.c.bf16 %v188, %v180
  %v197 = vpack.c.bf16 %v189, %v181
  %v198 = vpack.c.bf16 %v190, %v182
  %v199 = vpack.c.bf16 %v191, %v183
  %v200 = vpack.c.bf16 %v192, %v184
  %v201 = vld [vmem:[%s3] sm:$0xf]
  %v202 = vld [vmem:[%s3 + $0x4] sm:$0xf]
  %v203 = vld [vmem:[%s3 + $0x8] sm:$0xf]
  %v204 = vld [vmem:[%s3 + $0xc] sm:$0xf]
  %v205 = vld [vmem:[%s3 + $0x10] sm:$0xf]
  %v206 = vld [vmem:[%s3 + $0x14] sm:$0xf]
  %v207 = vld [vmem:[%s3 + $0x18] sm:$0xf]
  %v208 = vld [vmem:[%s3 + $0x1c] sm:$0xf]
  %v209 = vld [vmem:[%s3 + $0x20] sm:$0xf]
  %v210 = vld [vmem:[%s3 + $0x24] sm:$0xf]
  %v211 = vld [vmem:[%s3 + $0x28] sm:$0xf]
  %v212 = vld [vmem:[%s3 + $0x2c] sm:$0xf]
  %v213 = vld [vmem:[%s3 + $0x30] sm:$0xf]
  %v214 = vld [vmem:[%s3 + $0x34] sm:$0xf]
  %v215 = vld [vmem:[%s3 + $0x38] sm:$0xf]
  %v216 = vld [vmem:[%s3 + $0x3c] sm:$0xf]
  %v217 = vld [vmem:[%s3 + $0x40] sm:$0xf]
  %v218 = vld [vmem:[%s3 + $0x44] sm:$0xf]
  %v219 = vld [vmem:[%s3 + $0x48] sm:$0xf]
  %v220 = vld [vmem:[%s3 + $0x4c] sm:$0xf]
  %v221 = vld [vmem:[%s3 + $0x50] sm:$0xf]
  %v222 = vld [vmem:[%s3 + $0x54] sm:$0xf]
  %v223 = vld [vmem:[%s3 + $0x58] sm:$0xf]
  %v224 = vld [vmem:[%s3 + $0x5c] sm:$0xf]
  %v225 = vld [vmem:[%s3 + $0x60] sm:$0xf]
  %v226 = vld [vmem:[%s3 + $0x64] sm:$0xf]
  %v227 = vld [vmem:[%s3 + $0x68] sm:$0xf]
  %v228 = vld [vmem:[%s3 + $0x6c] sm:$0xf]
  %v229 = vld [vmem:[%s3 + $0x70] sm:$0xf]
  %v230 = vld [vmem:[%s3 + $0x74] sm:$0xf]
  %v231 = vld [vmem:[%s3 + $0x78] sm:$0xf]
  %v232 = vld [vmem:[%s3 + $0x7c] sm:$0xf]
  %v233 = vld [vmem:[%s3 + $0x80] sm:$0xf]
  %v234 = vld [vmem:[%s3 + $0x84] sm:$0xf]
  %v235 = vld [vmem:[%s3 + $0x88] sm:$0xf]
  %v236 = vld [vmem:[%s3 + $0x8c] sm:$0xf]
  %v237 = vld [vmem:[%s3 + $0x90] sm:$0xf]
  %v238 = vld [vmem:[%s3 + $0x94] sm:$0xf]
  %v239 = vld [vmem:[%s3 + $0x98] sm:$0xf]
  %v240 = vld [vmem:[%s3 + $0x9c] sm:$0xf]
  %v241 = vld [vmem:[%s3 + $0xa0] sm:$0xf]
  %v242 = vld [vmem:[%s3 + $0xa4] sm:$0xf]
  %v243 = vld [vmem:[%s3 + $0xa8] sm:$0xf]
  %v244 = vld [vmem:[%s3 + $0xac] sm:$0xf]
  %v245 = vld [vmem:[%s3 + $0xb0] sm:$0xf]
  %v246 = vld [vmem:[%s3 + $0xb4] sm:$0xf]
  %v247 = vld [vmem:[%s3 + $0xb8] sm:$0xf]
  %v248 = vld [vmem:[%s3 + $0xbc] sm:$0xf]
  %v249 = vld [vmem:[%s3 + $0xc0] sm:$0xf]
  %v250 = vld [vmem:[%s3 + $0xc4] sm:$0xf]
  %v251 = vld [vmem:[%s3 + $0xc8] sm:$0xf]
  %v252 = vld [vmem:[%s3 + $0xcc] sm:$0xf]
  %v253 = vld [vmem:[%s3 + $0xd0] sm:$0xf]
  %v254 = vld [vmem:[%s3 + $0xd4] sm:$0xf]
  %v255 = vld [vmem:[%s3 + $0xd8] sm:$0xf]
  %v256 = vld [vmem:[%s3 + $0xdc] sm:$0xf]
  %v257 = vld [vmem:[%s3 + $0xe0] sm:$0xf]
  %v258 = vld [vmem:[%s3 + $0xe4] sm:$0xf]
  %v259 = vld [vmem:[%s3 + $0xe8] sm:$0xf]
  %v260 = vld [vmem:[%s3 + $0xec] sm:$0xf]
  %v261 = vld [vmem:[%s3 + $0xf0] sm:$0xf]
  %v262 = vld [vmem:[%s3 + $0xf4] sm:$0xf]
  %v263 = vld [vmem:[%s3 + $0xf8] sm:$0xf]
  %v264 = vld [vmem:[%s3 + $0xfc] sm:$0xf]
  %v265 = vld [vmem:[%s3 + $0x100] sm:$0xf]
  %v266 = vld [vmem:[%s3 + $0x104] sm:$0xf]
  %v267 = vld [vmem:[%s3 + $0x108] sm:$0xf]
  %v268 = vld [vmem:[%s3 + $0x10c] sm:$0xf]
  %v269 = vld [vmem:[%s3 + $0x110] sm:$0xf]
  %v270 = vld [vmem:[%s3 + $0x114] sm:$0xf]
  %v271 = vld [vmem:[%s3 + $0x118] sm:$0xf]
  %v272 = vld [vmem:[%s3 + $0x11c] sm:$0xf]
  %v273 = vld [vmem:[%s3 + $0x120] sm:$0xf]
  %v274 = vld [vmem:[%s3 + $0x124] sm:$0xf]
  %v275 = vld [vmem:[%s3 + $0x128] sm:$0xf]
  %v276 = vld [vmem:[%s3 + $0x12c] sm:$0xf]
  %v277 = vld [vmem:[%s3 + $0x130] sm:$0xf]
  %v278 = vld [vmem:[%s3 + $0x134] sm:$0xf]
  %v279 = vld [vmem:[%s3 + $0x138] sm:$0xf]
  %v280 = vld [vmem:[%s3 + $0x13c] sm:$0xf]
  %v281 = vld [vmem:[%s3 + $0x140] sm:$0xf]
  %v282 = vld [vmem:[%s3 + $0x144] sm:$0xf]
  %v283 = vld [vmem:[%s3 + $0x148] sm:$0xf]
  %v284 = vld [vmem:[%s3 + $0x14c] sm:$0xf]
  %v285 = vld [vmem:[%s3 + $0x150] sm:$0xf]
  %v286 = vld [vmem:[%s3 + $0x154] sm:$0xf]
  %v287 = vld [vmem:[%s3 + $0x158] sm:$0xf]
  %v288 = vld [vmem:[%s3 + $0x15c] sm:$0xf]
  %v289 = vld [vmem:[%s3 + $0x160] sm:$0xf]
  %v290 = vld [vmem:[%s3 + $0x164] sm:$0xf]
  %v291 = vld [vmem:[%s3 + $0x168] sm:$0xf]
  %v292 = vld [vmem:[%s3 + $0x16c] sm:$0xf]
  %v293 = vld [vmem:[%s3 + $0x170] sm:$0xf]
  %v294 = vld [vmem:[%s3 + $0x174] sm:$0xf]
  %v295 = vld [vmem:[%s3 + $0x178] sm:$0xf]
  %v296 = vld [vmem:[%s3 + $0x17c] sm:$0xf]
  %v297 = vld [vmem:[%s3 + $0x180] sm:$0xf]
  %v298 = vld [vmem:[%s3 + $0x184] sm:$0xf]
  %v299 = vld [vmem:[%s3 + $0x188] sm:$0xf]
  %v300 = vld [vmem:[%s3 + $0x18c] sm:$0xf]
  %v301 = vld [vmem:[%s3 + $0x190] sm:$0xf]
  %v302 = vld [vmem:[%s3 + $0x194] sm:$0xf]
  %v303 = vld [vmem:[%s3 + $0x198] sm:$0xf]
  %v304 = vld [vmem:[%s3 + $0x19c] sm:$0xf]
  %v305 = vld [vmem:[%s3 + $0x1a0] sm:$0xf]
  %v306 = vld [vmem:[%s3 + $0x1a4] sm:$0xf]
  %v307 = vld [vmem:[%s3 + $0x1a8] sm:$0xf]
  %v308 = vld [vmem:[%s3 + $0x1ac] sm:$0xf]
  %v309 = vld [vmem:[%s3 + $0x1b0] sm:$0xf]
  %v310 = vld [vmem:[%s3 + $0x1b4] sm:$0xf]
  %v311 = vld [vmem:[%s3 + $0x1b8] sm:$0xf]
  %v312 = vld [vmem:[%s3 + $0x1bc] sm:$0xf]
  %v313 = vld [vmem:[%s3 + $0x1c0] sm:$0xf]
  %v314 = vld [vmem:[%s3 + $0x1c4] sm:$0xf]
  %v315 = vld [vmem:[%s3 + $0x1c8] sm:$0xf]
  %v316 = vld [vmem:[%s3 + $0x1cc] sm:$0xf]
  %v317 = vld [vmem:[%s3 + $0x1d0] sm:$0xf]
  %v318 = vld [vmem:[%s3 + $0x1d4] sm:$0xf]
  %v319 = vld [vmem:[%s3 + $0x1d8] sm:$0xf]
  %v320 = vld [vmem:[%s3 + $0x1dc] sm:$0xf]
  %v321 = vld [vmem:[%s3 + $0x1e0] sm:$0xf]
  %v322 = vld [vmem:[%s3 + $0x1e4] sm:$0xf]
  %v323 = vld [vmem:[%s3 + $0x1e8] sm:$0xf]
  %v324 = vld [vmem:[%s3 + $0x1ec] sm:$0xf]
  %v325 = vld [vmem:[%s3 + $0x1f0] sm:$0xf]
  %v326 = vld [vmem:[%s3 + $0x1f4] sm:$0xf]
  %v327 = vld [vmem:[%s3 + $0x1f8] sm:$0xf]
  %v328 = vld [vmem:[%s3 + $0x1fc] sm:$0xf]
  %v329 = vld [vmem:[%s4] sm:$0x1]
  %v331 = vlaneseq
  %v332 = vshrl.u32 %v331, 7
  %v333 = vsub.s32 0, %v332
  %v334 = vrot.slane %v329, %v333
  %v464 = vunpack.c.l.b16 %v201
  %v465 = vunpack.c.l.b16 %v202
  %v466 = vunpack.c.l.b16 %v203
  %v467 = vunpack.c.l.b16 %v204
  %v468 = vunpack.c.l.b16 %v205
  %v469 = vunpack.c.l.b16 %v206
  %v470 = vunpack.c.l.b16 %v207
  %v471 = vunpack.c.l.b16 %v208
  %v472 = vunpack.c.l.b16 %v209
  %v473 = vunpack.c.l.b16 %v210
  %v474 = vunpack.c.l.b16 %v211
  %v475 = vunpack.c.l.b16 %v212
  %v476 = vunpack.c.l.b16 %v213
  %v477 = vunpack.c.l.b16 %v214
  %v478 = vunpack.c.l.b16 %v215
  %v479 = vunpack.c.l.b16 %v216
  %v480 = vunpack.c.l.b16 %v217
  %v481 = vunpack.c.l.b16 %v218
  %v482 = vunpack.c.l.b16 %v219
  %v483 = vunpack.c.l.b16 %v220
  %v484 = vunpack.c.l.b16 %v221
  %v485 = vunpack.c.l.b16 %v222
  %v486 = vunpack.c.l.b16 %v223
  %v487 = vunpack.c.l.b16 %v224
  %v488 = vunpack.c.l.b16 %v225
  %v489 = vunpack.c.l.b16 %v226
  %v490 = vunpack.c.l.b16 %v227
  %v491 = vunpack.c.l.b16 %v228
  %v492 = vunpack.c.l.b16 %v229
  %v493 = vunpack.c.l.b16 %v230
  %v494 = vunpack.c.l.b16 %v231
  %v495 = vunpack.c.l.b16 %v232
  %v496 = vunpack.c.l.b16 %v233
  %v497 = vunpack.c.l.b16 %v234
  %v498 = vunpack.c.l.b16 %v235
  %v499 = vunpack.c.l.b16 %v236
  %v500 = vunpack.c.l.b16 %v237
  %v501 = vunpack.c.l.b16 %v238
  %v502 = vunpack.c.l.b16 %v239
  %v503 = vunpack.c.l.b16 %v240
  %v504 = vunpack.c.l.b16 %v241
  %v505 = vunpack.c.l.b16 %v242
  %v506 = vunpack.c.l.b16 %v243
  %v507 = vunpack.c.l.b16 %v244
  %v508 = vunpack.c.l.b16 %v245
  %v509 = vunpack.c.l.b16 %v246
  %v510 = vunpack.c.l.b16 %v247
  %v511 = vunpack.c.l.b16 %v248
  %v512 = vunpack.c.l.b16 %v249
  %v513 = vunpack.c.l.b16 %v250
  %v514 = vunpack.c.l.b16 %v251
  %v515 = vunpack.c.l.b16 %v252
  %v516 = vunpack.c.l.b16 %v253
  %v517 = vunpack.c.l.b16 %v254
  %v518 = vunpack.c.l.b16 %v255
  %v519 = vunpack.c.l.b16 %v256
  %v520 = vunpack.c.l.b16 %v257
  %v521 = vunpack.c.l.b16 %v258
  %v522 = vunpack.c.l.b16 %v259
  %v523 = vunpack.c.l.b16 %v260
  %v524 = vunpack.c.l.b16 %v261
  %v525 = vunpack.c.l.b16 %v262
  %v526 = vunpack.c.l.b16 %v263
  %v527 = vunpack.c.l.b16 %v264
  %v528 = vunpack.c.l.b16 %v265
  %v529 = vunpack.c.l.b16 %v266
  %v530 = vunpack.c.l.b16 %v267
  %v531 = vunpack.c.l.b16 %v268
  %v532 = vunpack.c.l.b16 %v269
  %v533 = vunpack.c.l.b16 %v270
  %v534 = vunpack.c.l.b16 %v271
  %v535 = vunpack.c.l.b16 %v272
  %v536 = vunpack.c.l.b16 %v273
  %v537 = vunpack.c.l.b16 %v274
  %v538 = vunpack.c.l.b16 %v275
  %v539 = vunpack.c.l.b16 %v276
  %v540 = vunpack.c.l.b16 %v277
  %v541 = vunpack.c.l.b16 %v278
  %v542 = vunpack.c.l.b16 %v279
  %v543 = vunpack.c.l.b16 %v280
  %v544 = vunpack.c.l.b16 %v281
  %v545 = vunpack.c.l.b16 %v282
  %v546 = vunpack.c.l.b16 %v283
  %v547 = vunpack.c.l.b16 %v284
  %v548 = vunpack.c.l.b16 %v285
  %v549 = vunpack.c.l.b16 %v286
  %v550 = vunpack.c.l.b16 %v287
  %v551 = vunpack.c.l.b16 %v288
  %v552 = vunpack.c.l.b16 %v289
  %v553 = vunpack.c.l.b16 %v290
  %v554 = vunpack.c.l.b16 %v291
  %v555 = vunpack.c.l.b16 %v292
  %v556 = vunpack.c.l.b16 %v293
  %v557 = vunpack.c.l.b16 %v294
  %v558 = vunpack.c.l.b16 %v295
  %v559 = vunpack.c.l.b16 %v296
  %v560 = vunpack.c.l.b16 %v297
  %v561 = vunpack.c.l.b16 %v298
  %v562 = vunpack.c.l.b16 %v299
  %v563 = vunpack.c.l.b16 %v300
  %v564 = vunpack.c.l.b16 %v301
  %v565 = vunpack.c.l.b16 %v302
  %v566 = vunpack.c.l.b16 %v303
  %v567 = vunpack.c.l.b16 %v304
  %v568 = vunpack.c.l.b16 %v305
  %v569 = vunpack.c.l.b16 %v306
  %v570 = vunpack.c.l.b16 %v307
  %v571 = vunpack.c.l.b16 %v308
  %v572 = vunpack.c.l.b16 %v309
  %v573 = vunpack.c.l.b16 %v310
  %v574 = vunpack.c.l.b16 %v311
  %v575 = vunpack.c.l.b16 %v312
  %v576 = vunpack.c.l.b16 %v313
  %v577 = vunpack.c.l.b16 %v314
  %v578 = vunpack.c.l.b16 %v315
  %v579 = vunpack.c.l.b16 %v316
  %v580 = vunpack.c.l.b16 %v317
  %v581 = vunpack.c.l.b16 %v318
  %v582 = vunpack.c.l.b16 %v319
  %v583 = vunpack.c.l.b16 %v320
  %v584 = vunpack.c.l.b16 %v321
  %v585 = vunpack.c.l.b16 %v322
  %v586 = vunpack.c.l.b16 %v323
  %v587 = vunpack.c.l.b16 %v324
  %v588 = vunpack.c.l.b16 %v325
  %v589 = vunpack.c.l.b16 %v326
  %v590 = vunpack.c.l.b16 %v327
  %v591 = vunpack.c.l.b16 %v328
  %v592 = vpack.c.b16 %v465, %v464
  %v593 = vpack.c.b16 %v467, %v466
  %v594 = vpack.c.b16 %v469, %v468
  %v595 = vpack.c.b16 %v471, %v470
  %v596 = vpack.c.b16 %v473, %v472
  %v597 = vpack.c.b16 %v475, %v474
  %v598 = vpack.c.b16 %v477, %v476
  %v599 = vpack.c.b16 %v479, %v478
  %v600 = vpack.c.b16 %v481, %v480
  %v601 = vpack.c.b16 %v483, %v482
  %v602 = vpack.c.b16 %v485, %v484
  %v603 = vpack.c.b16 %v487, %v486
  %v604 = vpack.c.b16 %v489, %v488
  %v605 = vpack.c.b16 %v491, %v490
  %v606 = vpack.c.b16 %v493, %v492
  %v607 = vpack.c.b16 %v495, %v494
  %v608 = vpack.c.b16 %v497, %v496
  %v609 = vpack.c.b16 %v499, %v498
  %v610 = vpack.c.b16 %v501, %v500
  %v611 = vpack.c.b16 %v503, %v502
  %v612 = vpack.c.b16 %v505, %v504
  %v613 = vpack.c.b16 %v507, %v506
  %v614 = vpack.c.b16 %v509, %v508
  %v615 = vpack.c.b16 %v511, %v510
  %v616 = vpack.c.b16 %v513, %v512
  %v617 = vpack.c.b16 %v515, %v514
  %v618 = vpack.c.b16 %v517, %v516
  %v619 = vpack.c.b16 %v519, %v518
  %v620 = vpack.c.b16 %v521, %v520
  %v621 = vpack.c.b16 %v523, %v522
  %v622 = vpack.c.b16 %v525, %v524
  %v623 = vpack.c.b16 %v527, %v526
  %v624 = vpack.c.b16 %v529, %v528
  %v625 = vpack.c.b16 %v531, %v530
  %v626 = vpack.c.b16 %v533, %v532
  %v627 = vpack.c.b16 %v535, %v534
  %v628 = vpack.c.b16 %v537, %v536
  %v629 = vpack.c.b16 %v539, %v538
  %v630 = vpack.c.b16 %v541, %v540
  %v631 = vpack.c.b16 %v543, %v542
  %v632 = vpack.c.b16 %v545, %v544
  %v633 = vpack.c.b16 %v547, %v546
  %v634 = vpack.c.b16 %v549, %v548
  %v635 = vpack.c.b16 %v551, %v550
  %v636 = vpack.c.b16 %v553, %v552
  %v637 = vpack.c.b16 %v555, %v554
  %v638 = vpack.c.b16 %v557, %v556
  %v639 = vpack.c.b16 %v559, %v558
  %v640 = vpack.c.b16 %v561, %v560
  %v641 = vpack.c.b16 %v563, %v562
  %v642 = vpack.c.b16 %v565, %v564
  %v643 = vpack.c.b16 %v567, %v566
  %v644 = vpack.c.b16 %v569, %v568
  %v645 = vpack.c.b16 %v571, %v570
  %v646 = vpack.c.b16 %v573, %v572
  %v647 = vpack.c.b16 %v575, %v574
  %v648 = vpack.c.b16 %v577, %v576
  %v649 = vpack.c.b16 %v579, %v578
  %v650 = vpack.c.b16 %v581, %v580
  %v651 = vpack.c.b16 %v583, %v582
  %v652 = vpack.c.b16 %v585, %v584
  %v653 = vpack.c.b16 %v587, %v586
  %v654 = vpack.c.b16 %v589, %v588
  %v655 = vpack.c.b16 %v591, %v590
  %720 = vmatprep.subr.bf16.mxu0 0
  %721 = vmatpush1.bf16.msra.mxu0 %v592
  %722 = vmatprep.subr.bf16.mxu0 0
  %723 = vmatpush1.bf16.msra.mxu0 %v593
  %724 = vmatprep.subr.bf16.mxu0 0
  %725 = vmatpush1.bf16.msra.mxu0 %v594
  %726 = vmatprep.subr.bf16.mxu0 0
  %727 = vmatpush1.bf16.msra.mxu0 %v595
  %728 = vmatprep.subr.bf16.mxu0 0
  %729 = vmatpush1.bf16.msra.mxu0 %v596
  %730 = vmatprep.subr.bf16.mxu0 0
  %731 = vmatpush1.bf16.msra.mxu0 %v597
  %732 = vmatprep.subr.bf16.mxu0 0
  %733 = vmatpush1.bf16.msra.mxu0 %v598
  %734 = vmatprep.subr.bf16.mxu0 0
  %735 = vmatpush1.bf16.msra.mxu0 %v599
  %736 = vmatprep.subr.bf16.mxu0 0
  %737 = vmatpush1.bf16.msra.mxu0 %v600
  %738 = vmatprep.subr.bf16.mxu0 0
  %739 = vmatpush1.bf16.msra.mxu0 %v601
  %740 = vmatprep.subr.bf16.mxu0 0
  %741 = vmatpush1.bf16.msra.mxu0 %v602
  %742 = vmatprep.subr.bf16.mxu0 0
  %743 = vmatpush1.bf16.msra.mxu0 %v603
  %744 = vmatprep.subr.bf16.mxu0 0
  %745 = vmatpush1.bf16.msra.mxu0 %v604
  %746 = vmatprep.subr.bf16.mxu0 0
  %747 = vmatpush1.bf16.msra.mxu0 %v605
  %748 = vmatprep.subr.bf16.mxu0 0
  %749 = vmatpush1.bf16.msra.mxu0 %v606
  %750 = vmatprep.subr.bf16.mxu0 0
  %751 = vmatpush1.bf16.msra.mxu0 %v607
  %752 = vmatprep.mubr.bf16.mxu0 %v194
  %753 = vmatmul.mubr.bf16.gmra.mrb[0].mxu0 %v193
  %v754 = vpop.f32.mrb[0].mxu0
  %v755 = vadd.f32 %v334, %v754
  %v756 = vpop.f32.mrb[0].mxu0
  %v757 = vpop.f32.mrb[0].mxu0
  %v758 = vadd.f32 %v334, %v757
  %v759 = vpop.f32.mrb[0].mxu0
  %760 = vdwg.mxu0
  %761 = vmatprep.subr.bf16.mxu0 0
  %762 = vmatpush1.bf16.msra.mxu0 %v608
  %763 = vmatprep.subr.bf16.mxu0 0
  %764 = vmatpush1.bf16.msra.mxu0 %v609
  %765 = vmatprep.subr.bf16.mxu0 0
  %766 = vmatpush1.bf16.msra.mxu0 %v610
  %767 = vmatprep.subr.bf16.mxu0 0
  %768 = vmatpush1.bf16.msra.mxu0 %v611
  %769 = vmatprep.subr.bf16.mxu0 0
  %770 = vmatpush1.bf16.msra.mxu0 %v612
  %771 = vmatprep.subr.bf16.mxu0 0
  %772 = vmatpush1.bf16.msra.mxu0 %v613
  %773 = vmatprep.subr.bf16.mxu0 0
  %774 = vmatpush1.bf16.msra.mxu0 %v614
  %775 = vmatprep.subr.bf16.mxu0 0
  %776 = vmatpush1.bf16.msra.mxu0 %v615
  %777 = vmatprep.subr.bf16.mxu0 0
  %778 = vmatpush1.bf16.msra.mxu0 %v616
  %779 = vmatprep.subr.bf16.mxu0 0
  %780 = vmatpush1.bf16.msra.mxu0 %v617
  %781 = vmatprep.subr.bf16.mxu0 0
  %782 = vmatpush1.bf16.msra.mxu0 %v618
  %783 = vmatprep.subr.bf16.mxu0 0
  %784 = vmatpush1.bf16.msra.mxu0 %v619
  %785 = vmatprep.subr.bf16.mxu0 0
  %786 = vmatpush1.bf16.msra.mxu0 %v620
  %787 = vmatprep.subr.bf16.mxu0 0
  %788 = vmatpush1.bf16.msra.mxu0 %v621
  %789 = vmatprep.subr.bf16.mxu0 0
  %790 = vmatpush1.bf16.msra.mxu0 %v622
  %791 = vmatprep.subr.bf16.mxu0 0
  %792 = vmatpush1.bf16.msra.mxu0 %v623
  %793 = vmatprep.mubr.bf16.mxu0 %v196
  %794 = vmatmul.mubr.bf16.gmra.mrb[0].mxu0 %v195
  %v795 = vpop.f32.mrb[0].mxu0
  %v796 = vadd.f32 %v755, %v795
  %v797 = vpop.f32.mrb[0].mxu0
  %v798 = vpop.f32.mrb[0].mxu0
  %v799 = vadd.f32 %v758, %v798
  %v800 = vpop.f32.mrb[0].mxu0
  %801 = vdwg.mxu0
  %802 = vmatprep.subr.bf16.mxu0 0
  %803 = vmatpush1.bf16.msra.mxu0 %v624
  %804 = vmatprep.subr.bf16.mxu0 0
  %805 = vmatpush1.bf16.msra.mxu0 %v625
  %806 = vmatprep.subr.bf16.mxu0 0
  %807 = vmatpush1.bf16.msra.mxu0 %v626
  %808 = vmatprep.subr.bf16.mxu0 0
  %809 = vmatpush1.bf16.msra.mxu0 %v627
  %810 = vmatprep.subr.bf16.mxu0 0
  %811 = vmatpush1.bf16.msra.mxu0 %v628
  %812 = vmatprep.subr.bf16.mxu0 0
  %813 = vmatpush1.bf16.msra.mxu0 %v629
  %814 = vmatprep.subr.bf16.mxu0 0
  %815 = vmatpush1.bf16.msra.mxu0 %v630
  %816 = vmatprep.subr.bf16.mxu0 0
  %817 = vmatpush1.bf16.msra.mxu0 %v631
  %818 = vmatprep.subr.bf16.mxu0 0
  %819 = vmatpush1.bf16.msra.mxu0 %v632
  %820 = vmatprep.subr.bf16.mxu0 0
  %821 = vmatpush1.bf16.msra.mxu0 %v633
  %822 = vmatprep.subr.bf16.mxu0 0
  %823 = vmatpush1.bf16.msra.mxu0 %v634
  %824 = vmatprep.subr.bf16.mxu0 0
  %825 = vmatpush1.bf16.msra.mxu0 %v635
  %826 = vmatprep.subr.bf16.mxu0 0
  %827 = vmatpush1.bf16.msra.mxu0 %v636
  %828 = vmatprep.subr.bf16.mxu0 0
  %829 = vmatpush1.bf16.msra.mxu0 %v637
  %830 = vmatprep.subr.bf16.mxu0 0
  %831 = vmatpush1.bf16.msra.mxu0 %v638
  %832 = vmatprep.subr.bf16.mxu0 0
  %833 = vmatpush1.bf16.msra.mxu0 %v639
  %834 = vmatprep.mubr.bf16.mxu0 %v198
  %835 = vmatmul.mubr.bf16.gmra.mrb[0].mxu0 %v197
  %v836 = vpop.f32.mrb[0].mxu0
  %v837 = vadd.f32 %v796, %v836
  %v838 = vpop.f32.mrb[0].mxu0
  %v839 = vpop.f32.mrb[0].mxu0
  %v840 = vadd.f32 %v799, %v839
  %v841 = vpop.f32.mrb[0].mxu0
  %842 = vdwg.mxu0
  %843 = vmatprep.subr.bf16.mxu0 0
  %844 = vmatpush1.bf16.msra.mxu0 %v640
  %845 = vmatprep.subr.bf16.mxu0 0
  %846 = vmatpush1.bf16.msra.mxu0 %v641
  %847 = vmatprep.subr.bf16.mxu0 0
  %848 = vmatpush1.bf16.msra.mxu0 %v642
  %849 = vmatprep.subr.bf16.mxu0 0
  %850 = vmatpush1.bf16.msra.mxu0 %v643
  %851 = vmatprep.subr.bf16.mxu0 0
  %852 = vmatpush1.bf16.msra.mxu0 %v644
  %853 = vmatprep.subr.bf16.mxu0 0
  %854 = vmatpush1.bf16.msra.mxu0 %v645
  %855 = vmatprep.subr.bf16.mxu0 0
  %856 = vmatpush1.bf16.msra.mxu0 %v646
  %857 = vmatprep.subr.bf16.mxu0 0
  %858 = vmatpush1.bf16.msra.mxu0 %v647
  %859 = vmatprep.subr.bf16.mxu0 0
  %860 = vmatpush1.bf16.msra.mxu0 %v648
  %861 = vmatprep.subr.bf16.mxu0 0
  %862 = vmatpush1.bf16.msra.mxu0 %v649
  %863 = vmatprep.subr.bf16.mxu0 0
  %864 = vmatpush1.bf16.msra.mxu0 %v650
  %865 = vmatprep.subr.bf16.mxu0 0
  %866 = vmatpush1.bf16.msra.mxu0 %v651
  %867 = vmatprep.subr.bf16.mxu0 0
  %868 = vmatpush1.bf16.msra.mxu0 %v652
  %869 = vmatprep.subr.bf16.mxu0 0
  %870 = vmatpush1.bf16.msra.mxu0 %v653
  %871 = vmatprep.subr.bf16.mxu0 0
  %872 = vmatpush1.bf16.msra.mxu0 %v654
  %873 = vmatprep.subr.bf16.mxu0 0
  %874 = vmatpush1.bf16.msra.mxu0 %v655
  %875 = vmatprep.mubr.bf16.mxu0 %v200
  %876 = vmatmul.mubr.bf16.gmra.mrb[0].mxu0 %v199
  %v877 = vpop.f32.mrb[0].mxu0
  %v878 = vadd.f32 %v837, %v877
  %v879 = vpop.f32.mrb[0].mxu0
  %v880 = vpop.f32.mrb[0].mxu0
  %v881 = vadd.f32 %v840, %v880
  %v882 = vpop.f32.mrb[0].mxu0
  %883 = vdwg.mxu0
  %vm884 = vcmask 130048
  %885 = vst.msk [vmem:[%s5] sm:$0xff] %vm884, %v878
  %886 = vst.msk [vmem:[%s5 + $0x8] sm:$0xff] %vm884, %v881
  // Predicated region
  $region22: #{encoder_forward.9} parent=0 // pred_check
    _
  $region23: #{encoder_forward.9} parent=0 // pred_check_branch
    %888 = sbr.rel (0) target = $region25
  $region24: #{encoder_forward.9} parent=0 // pred_region
    _
  $region25: #{encoder_forward.9} parent=0 // pred_fallthru
    _
  // Predicated region
  $region26: #{encoder_forward.9} parent=0 // pred_check
    _
  $region27: #{encoder_forward.9} parent=0 // pred_check_branch
    %890 = sbr.rel (0) target = $region29
  $region28: #{encoder_forward.9} parent=0 // pred_region
    _
  $region29: #{encoder_forward.9} parent=0 // pred_fallthru
    _

</llo_original>
